<compile_context>
chip_gen: v6e
topology: v6e:2x2x1
jax: 0.10.0
libtpu: 0.0.40
codegen_flags: <defaults>
</compile_context>

<pallas_src>
import functools

import jax
import jax.numpy as jnp
import numpy as np
from jax.experimental import pallas as pl
from jax.experimental.pallas import tpu as pltpu


def _round_up(v, m):
    return (v + m - 1) // m * m


def _choose_tiling(n, tile_cap, align=256):
    """Pick a points-tile size: multiple of `align`, <= cap, minimal padding."""
    cap = max(align, min(_round_up(tile_cap, align), _round_up(n, align)))
    nt = -(-n // cap)                        # ceil(n / cap) tiles
    tn = _round_up(-(-n // nt), align)       # smallest aligned tile covering n
    return tn, nt


# ----------------------------------------------------------------------------
# Stage 1: conv1/conv2/conv3 (1x1 convs == per-point matmuls) + ONLINE max-pool
# over the raw conv3 output.  grid = (B, channel_split, num_point_tiles); the
# pooled block is resident across the (last, reduction) point-tile axis.
# ----------------------------------------------------------------------------
def conv_pool_kernel(x_ref, w1_ref, b1_ref, w2_ref, b2_ref, w3_ref, g_ref,
                     *, n_valid_last, tile_n):
    k = pl.program_id(2)
    nt = pl.num_programs(2)

    @pl.when(k == 0)
    def _init():
        # Running max over the RAW conv3 output (bias/ReLU hoisted to stage 2),
        # so the identity element is -inf, not 0.
        g_ref[...] = jnp.full(g_ref.shape, -jnp.inf, dtype=g_ref.dtype)

    x = x_ref[0]                                                     # (TN, 8) bf16

    h = jnp.dot(x, w1_ref[...], preferred_element_type=jnp.float32) + b1_ref[...]
    h = jnp.maximum(h, 0.0)                                          # (TN, 64)  f32
    h = jnp.dot(h.astype(jnp.bfloat16), w2_ref[...],
                preferred_element_type=jnp.float32) + b2_ref[...]
    h = jnp.maximum(h, 0.0)                                          # (TN, 128) f32
    # Raw conv3 matmul -- NO bias / ReLU here (hoisted past the max-pool).
    h = jnp.dot(h.astype(jnp.bfloat16), w3_ref[...],
                preferred_element_type=jnp.float32)                  # (TN, CO)  f32

    if n_valid_last < tile_n:
        # Padded point rows exist, but only ever in the LAST tile: mask them
        # with -inf there; interior tiles skip the mask work entirely.
        @pl.when(k == nt - 1)
        def _last_tile():
            row = jax.lax.broadcasted_iota(jnp.int32, (tile_n, 1), 0)
            hm = jnp.where(row < n_valid_last, h, -jnp.inf)
            g_ref[0] = jnp.maximum(g_ref[0], jnp.max(hm, axis=0, keepdims=True))

        @pl.when(k < nt - 1)
        def _interior_tile():
            g_ref[0] = jnp.maximum(g_ref[0], jnp.max(h, axis=0, keepdims=True))
    else:
        g_ref[0] = jnp.maximum(g_ref[0], jnp.max(h, axis=0, keepdims=True))


# ----------------------------------------------------------------------------
# Stage 2: hoisted conv3 bias+ReLU, then the FC head (1024->512->256->9 + I)
# as ONE batched matmul chain over B.
# ----------------------------------------------------------------------------
def fc_head_kernel(g_ref, b3_ref, w4_ref, b4_ref, w5_ref, b5_ref, w6_ref,
                   b6_ref, out_ref):
    # Hoisted conv3 bias + ReLU (valid: max_n relu(z_n + b3) == relu(max_n z_n + b3)).
    g = jnp.maximum(g_ref[...] + b3_ref[...], 0.0)                   # (B, 1024) f32

    f = jnp.dot(g.astype(jnp.bfloat16), w4_ref[...],
                preferred_element_type=jnp.float32) + b4_ref[...]
    f = jnp.maximum(f, 0.0)                                          # (B, 512)
    f = jnp.dot(f.astype(jnp.bfloat16), w5_ref[...],
                preferred_element_type=jnp.float32) + b5_ref[...]
    f = jnp.maximum(f, 0.0)                                          # (B, 256)
    f = jnp.dot(f.astype(jnp.bfloat16), w6_ref[...],
                preferred_element_type=jnp.float32) + b6_ref[...]    # (B, 9)

    # Flattened 3x3 identity built from an iota (columns 0, 4, 8 -> 1).
    col = jax.lax.broadcasted_iota(jnp.int32, f.shape, 1)
    out_ref[...] = f + (col % 4 == 0).astype(jnp.float32)


# ----------------------------------------------------------------------------
# Wrapper
# ----------------------------------------------------------------------------
def stn3d_forward(x_ncw, params, *, tile_n=1536, channel_split=1):
    """x_ncw: (B, 3, N) float32 (PyTorch NCW layout).  Returns (B, 3, 3) f32.

    channel_split: split conv3 output channels over a second parallel grid
    axis (set 2 on v7x for small-batch inference; keep 1 on v5e/v6e).
    """
    B, C, N = x_ncw.shape
    assert C == 3
    assert 1024 % channel_split == 0
    (w1, b1, w2, b2, w3, b3, w4, b4, w5, b5, w6, b6) = params

    tn, nt = _choose_tiling(N, tile_n)
    n_pad = nt * tn
    n_valid_last = N - (nt - 1) * tn
    cs = channel_split
    co = 1024 // cs

    # NCW -> (B, N, C); pad channels 3 -> 8 and points N -> n_pad; bf16 operands.
    x = jnp.transpose(x_ncw, (0, 2, 1))                              # (B, N, 3)
    x = jnp.pad(x, ((0, 0), (0, n_pad - N), (0, 8 - C)))             # (B, n_pad, 8)
    x = x.astype(jnp.bfloat16)

    w1p = jnp.pad(w1, ((0, 8 - C), (0, 0))).astype(jnp.bfloat16)     # (8, 64)
    resident_args = (w1p, b1, w2.astype(jnp.bfloat16), b2)
    w3b = w3.astype(jnp.bfloat16)                                    # (128, 1024)

    def resident(a):  # whole array in VMEM, same block every grid step
        return pl.BlockSpec(a.shape, lambda b, c, k: (0,) * a.ndim)

    pooled = pl.pallas_call(
        functools.partial(conv_pool_kernel, n_valid_last=n_valid_last, tile_n=tn),
        out_shape=jax.ShapeDtypeStruct((B, 1, 1024), jnp.float32),
        grid_spec=pltpu.PrefetchScalarGridSpec(
            num_scalar_prefetch=0,
            grid=(B, cs, nt),  # batch / channel-half parallel, N-tile reduction last
            in_specs=[pl.BlockSpec((1, tn, 8), lambda b, c, k: (b, k, 0))]
                     + [resident(a) for a in resident_args]
                     + [pl.BlockSpec((128, co), lambda b, c, k: (0, c))],
            out_specs=pl.BlockSpec((1, 1, co), lambda b, c, k: (b, 0, c)),
        ),
        compiler_params=pltpu.CompilerParams(
            dimension_semantics=("parallel", "parallel", "arbitrary"),
            vmem_limit_bytes=32 * 1024 * 1024,  # actual footprint << 32 MiB
        ),
    )(x, *resident_args, w3b)

    g = pooled.reshape(B, 1024)  # raw (pre-bias, pre-ReLU) pooled conv3 features

    head_args = (b3,
                 w4.astype(jnp.bfloat16), b4,
                 w5.astype(jnp.bfloat16), b5,
                 w6.astype(jnp.bfloat16), b6)

    def full(a):
        return pl.BlockSpec(a.shape, lambda i: (0,) * a.ndim)

    out = pl.pallas_call(
        fc_head_kernel,
        out_shape=jax.ShapeDtypeStruct((B, 9), jnp.float32),
        grid=(1,),
        in_specs=[full(g)] + [full(a) for a in head_args],
        out_specs=pl.BlockSpec((B, 9), lambda i: (0, 0)),
        compiler_params=pltpu.CompilerParams(
            dimension_semantics=("arbitrary",),
        ),
    )(g, *head_args)

    return out.reshape(B, 3, 3)


# ----------------------------------------------------------------------------
# Deterministic parameter init (shapes from STN3d.__init__; synthetic weights).
# Weights stored as (in, out); biases as (1, out).  Kept f32; cast in wrapper.
# ----------------------------------------------------------------------------
def init_params(key):
    dims = [(3, 64), (64, 128), (128, 1024), (1024, 512), (512, 256), (256, 9)]
    params = []
    for din, dout in dims:
        kw, kb, key = jax.random.split(key, 3)
        bound = 1.0 / np.sqrt(din)
        w = jax.random.uniform(kw, (din, dout), jnp.float32, -bound, bound)
        b = jax.random.uniform(kb, (1, dout), jnp.float32, -bound, bound)
        params += [w, b]
    return tuple(params)


# ----------------------------------------------------------------------------
# Pure-JAX f32 reference (mirrors the PyTorch forward) for verification.
# ----------------------------------------------------------------------------
def stn3d_reference(x_ncw, params):
    (w1, b1, w2, b2, w3, b3, w4, b4, w5, b5, w6, b6) = params
    x = jnp.transpose(x_ncw, (0, 2, 1))                              # (B, N, 3)
    h = jax.nn.relu(x @ w1 + b1)
    h = jax.nn.relu(h @ w2 + b2)
    h = jax.nn.relu(h @ w3 + b3)
    g = jnp.max(h, axis=1)                                           # (B, 1024)
    f = jax.nn.relu(g @ w4 + b4)
    f = jax.nn.relu(f @ w5 + b5)
    f = f @ w6 + b6
    iden = jnp.array([1., 0., 0., 0., 1., 0., 0., 0., 1.], dtype=jnp.float32)
    return (f + iden).reshape(-1, 3, 3)


if __name__ == "__main__":
    key = jax.random.PRNGKey(0)
    kx, kp = jax.random.split(key)

    # Small demo shapes (module default num_points=2500).  N=300 exercises the
    # padded-last-tile -inf masking; the second call (tile_n=256,
    # channel_split=2) additionally exercises the multi-tile online max and the
    # v7x-style channel-parallel grid axis.
    B, N = 2, 300
    x = jax.random.normal(kx, (B, 3, N), jnp.float32)   # PyTorch NCW layout
    params = init_params(kp)
    ref = stn3d_reference(x, params)

    out = jax.block_until_ready(stn3d_forward(x, params))
    assert out.shape == (B, 3, 3)
    # bf16 matmul operands (f32 accumulation) vs. f32 reference -> loosened tol.
    np.testing.assert_allclose(np.asarray(out), np.asarray(ref),
                               rtol=3e-2, atol=3e-2)

    out2 = jax.block_until_ready(
        stn3d_forward(x, params, tile_n=256, channel_split=2))
    np.testing.assert_allclose(np.asarray(out2), np.asarray(ref),
                               rtol=3e-2, atol=3e-2)

    print("KERNEL_OK")
</pallas_src>

<mosaic_0001>
module attributes {stable_mosaic.version = 11 : i64} {
  func.func @conv_pool_kernel(%arg0: i32, %arg1: i32, %arg2: i32, %arg3: memref<1x512x8xbf16, #tpu.memory_space<vmem>>, %arg4: memref<8x64xbf16, #tpu.memory_space<vmem>>, %arg5: memref<1x64xf32, #tpu.memory_space<vmem>>, %arg6: memref<64x128xbf16, #tpu.memory_space<vmem>>, %arg7: memref<1x128xf32, #tpu.memory_space<vmem>>, %arg8: memref<128x1024xbf16, #tpu.memory_space<vmem>>, %arg9: memref<1x1x1024xf32, #tpu.memory_space<vmem>>) attributes {dimension_semantics = [#tpu.dimension_semantics<parallel>, #tpu.dimension_semantics<parallel>, #tpu.dimension_semantics<arbitrary>], iteration_bounds = array<i64: 2, 1, 1>, scalar_prefetch = 0 : i64, scratch_operands = 0 : i64, tpu.core_type = #tpu.core_type<tc>, window_params = [{transform_indices = @transform_0, window_bounds = array<i64: 1, 512, 8>}, {pipeline_mode = #tpu.pipeline_mode<synchronous>, transform_indices = @transform_1, window_bounds = array<i64: 8, 64>}, {pipeline_mode = #tpu.pipeline_mode<synchronous>, transform_indices = @transform_2, window_bounds = array<i64: 1, 64>}, {pipeline_mode = #tpu.pipeline_mode<synchronous>, transform_indices = @transform_3, window_bounds = array<i64: 64, 128>}, {pipeline_mode = #tpu.pipeline_mode<synchronous>, transform_indices = @transform_4, window_bounds = array<i64: 1, 128>}, {transform_indices = @transform_5, window_bounds = array<i64: 128, 1024>}, {transform_indices = @transform_6, window_bounds = array<i64: 1, 1, 1024>}]} {
    %c0_i32 = arith.constant 0 : i32
    %0 = arith.cmpi eq, %arg2, %c0_i32 : i32
    %1 = arith.extui %0 : i1 to i32
    %c0_i32_0 = arith.constant 0 : i32
    %2 = arith.cmpi ne, %1, %c0_i32_0 : i32
    scf.if %2 {
      %cst_21 = arith.constant 0xFF800000 : f32
      %29 = vector.broadcast %cst_21 : f32 to vector<1x1x1024xf32>
      %c0_22 = arith.constant 0 : index
      %c0_23 = arith.constant 0 : index
      %c0_24 = arith.constant 0 : index
      %30 = vector.load %arg9[%c0_22, %c0_23, %c0_24] : memref<1x1x1024xf32, #tpu.memory_space<vmem>>, vector<1x1x1024xf32>
      tpu.vector_store %arg9[%c0_22, %c0_23, %c0_24], %29 {strides = array<i32>} : memref<1x1x1024xf32, #tpu.memory_space<vmem>>, vector<1x1x1024xf32>,
    } else {
    }
    %c0 = arith.constant 0 : index
    %c0_1 = arith.constant 0 : index
    %c0_2 = arith.constant 0 : index
    %3 = vector.load %arg3[%c0, %c0_1, %c0_2] : memref<1x512x8xbf16, #tpu.memory_space<vmem>>, vector<1x512x8xbf16>
    %4 = vector.shape_cast %3 : vector<1x512x8xbf16> to vector<512x8xbf16>
    %c0_3 = arith.constant 0 : index
    %c0_4 = arith.constant 0 : index
    %5 = vector.load %arg4[%c0_3, %c0_4] : memref<8x64xbf16, #tpu.memory_space<vmem>>, vector<8x64xbf16>
    %cst = arith.constant dense<0.000000e+00> : vector<512x64xf32>
    %6 = tpu.matmul %4, %5, %cst {dimension_numbers = #tpu.dot_dimension_numbers<[1], [0], [0], [1], [0, 0, 1, 1], [], []>} : vector<512x8xbf16>, vector<8x64xbf16>, vector<512x64xf32> -> vector<512x64xf32>
    %c0_5 = arith.constant 0 : index
    %c0_6 = arith.constant 0 : index
    %7 = vector.load %arg5[%c0_5, %c0_6] : memref<1x64xf32, #tpu.memory_space<vmem>>, vector<1x64xf32>
    %8 = vector.broadcast %7 : vector<1x64xf32> to vector<512x64xf32>
    %9 = arith.addf %6, %8 : vector<512x64xf32>
    %cst_7 = arith.constant 0.000000e+00 : f32
    %10 = vector.broadcast %cst_7 : f32 to vector<512x64xf32>
    %11 = arith.maximumf %9, %10 : vector<512x64xf32>
    %12 = arith.truncf %11 : vector<512x64xf32> to vector<512x64xbf16>
    %c0_8 = arith.constant 0 : index
    %c0_9 = arith.constant 0 : index
    %13 = vector.load %arg6[%c0_8, %c0_9] : memref<64x128xbf16, #tpu.memory_space<vmem>>, vector<64x128xbf16>
    %cst_10 = arith.constant dense<0.000000e+00> : vector<512x128xf32>
    %14 = tpu.matmul %12, %13, %cst_10 {dimension_numbers = #tpu.dot_dimension_numbers<[1], [0], [0], [1], [0, 0, 1, 1], [], []>} : vector<512x64xbf16>, vector<64x128xbf16>, vector<512x128xf32> -> vector<512x128xf32>
    %c0_11 = arith.constant 0 : index
    %c0_12 = arith.constant 0 : index
    %15 = vector.load %arg7[%c0_11, %c0_12] : memref<1x128xf32, #tpu.memory_space<vmem>>, vector<1x128xf32>
    %16 = vector.broadcast %15 : vector<1x128xf32> to vector<512x128xf32>
    %17 = arith.addf %14, %16 : vector<512x128xf32>
    %cst_13 = arith.constant 0.000000e+00 : f32
    %18 = vector.broadcast %cst_13 : f32 to vector<512x128xf32>
    %19 = arith.maximumf %17, %18 : vector<512x128xf32>
    %20 = arith.truncf %19 : vector<512x128xf32> to vector<512x128xbf16>
    %c0_14 = arith.constant 0 : index
    %c0_15 = arith.constant 0 : index
    %21 = vector.load %arg8[%c0_14, %c0_15] : memref<128x1024xbf16, #tpu.memory_space<vmem>>, vector<128x1024xbf16>
    %cst_16 = arith.constant dense<0.000000e+00> : vector<512x1024xf32>
    %22 = tpu.matmul %20, %21, %cst_16 {dimension_numbers = #tpu.dot_dimension_numbers<[1], [0], [0], [1], [0, 0, 1, 1], [], []>} : vector<512x128xbf16>, vector<128x1024xbf16>, vector<512x1024xf32> -> vector<512x1024xf32>
    %c0_i32_17 = arith.constant 0 : i32
    %23 = arith.cmpi eq, %arg2, %c0_i32_17 : i32
    %24 = arith.extui %23 : i1 to i32
    %c0_i32_18 = arith.constant 0 : i32
    %25 = arith.cmpi ne, %24, %c0_i32_18 : i32
    scf.if %25 {
      %29 = tpu.iota {dimensions = array<i32: 0>} : vector<512x1xi32>
      %c300_i32 = arith.constant 300 : i32
      %30 = vector.broadcast %c300_i32 : i32 to vector<512x1xi32>
      %31 = arith.cmpi slt, %29, %30 : vector<512x1xi32>
      %cst_21 = arith.constant 0xFF800000 : f32
      %32 = vector.shape_cast %31 : vector<512x1xi1> to vector<512x1xi1>
      %33 = vector.broadcast %32 : vector<512x1xi1> to vector<512x1024xi1>
      %34 = vector.broadcast %cst_21 : f32 to vector<512x1024xf32>
      %35 = arith.select %33, %22, %34 : vector<512x1024xi1>, vector<512x1024xf32>
      %c0_22 = arith.constant 0 : index
      %c0_23 = arith.constant 0 : index
      %c0_24 = arith.constant 0 : index
      %36 = vector.load %arg9[%c0_22, %c0_23, %c0_24] : memref<1x1x1024xf32, #tpu.memory_space<vmem>>, vector<1x1x1024xf32>
      %37 = vector.shape_cast %36 : vector<1x1x1024xf32> to vector<1x1024xf32>
      %cst_25 = arith.constant dense<0xFF800000> : vector<1024xf32>
      %38 = vector.multi_reduction <maximumf>, %35, %cst_25 [0] : vector<512x1024xf32> to vector<1024xf32>
      %39 = vector.shape_cast %38 : vector<1024xf32> to vector<1x1024xf32>
      %40 = arith.maximumf %37, %39 : vector<1x1024xf32>
      %c0_26 = arith.constant 0 : index
      %c0_27 = arith.constant 0 : index
      %c0_28 = arith.constant 0 : index
      %41 = vector.load %arg9[%c0_26, %c0_27, %c0_28] : memref<1x1x1024xf32, #tpu.memory_space<vmem>>, vector<1x1x1024xf32>
      %42 = vector.shape_cast %41 : vector<1x1x1024xf32> to vector<1x1024xf32>
      %43 = vector.shape_cast %40 : vector<1x1024xf32> to vector<1x1x1024xf32>
      tpu.vector_store %arg9[%c0_26, %c0_27, %c0_28], %43 {strides = array<i32>} : memref<1x1x1024xf32, #tpu.memory_space<vmem>>, vector<1x1x1024xf32>,
    } else {
    }
    %c0_i32_19 = arith.constant 0 : i32
    %26 = arith.cmpi slt, %arg2, %c0_i32_19 : i32
    %27 = arith.extui %26 : i1 to i32
    %c0_i32_20 = arith.constant 0 : i32
    %28 = arith.cmpi ne, %27, %c0_i32_20 : i32
    scf.if %28 {
      %c0_21 = arith.constant 0 : index
      %c0_22 = arith.constant 0 : index
      %c0_23 = arith.constant 0 : index
      %29 = vector.load %arg9[%c0_21, %c0_22, %c0_23] : memref<1x1x1024xf32, #tpu.memory_space<vmem>>, vector<1x1x1024xf32>
      %30 = vector.shape_cast %29 : vector<1x1x1024xf32> to vector<1x1024xf32>
      %cst_24 = arith.constant dense<0xFF800000> : vector<1024xf32>
      %31 = vector.multi_reduction <maximumf>, %22, %cst_24 [0] : vector<512x1024xf32> to vector<1024xf32>
      %32 = vector.shape_cast %31 : vector<1024xf32> to vector<1x1024xf32>
      %33 = arith.maximumf %30, %32 : vector<1x1024xf32>
      %c0_25 = arith.constant 0 : index
      %c0_26 = arith.constant 0 : index
      %c0_27 = arith.constant 0 : index
      %34 = vector.load %arg9[%c0_25, %c0_26, %c0_27] : memref<1x1x1024xf32, #tpu.memory_space<vmem>>, vector<1x1x1024xf32>
      %35 = vector.shape_cast %34 : vector<1x1x1024xf32> to vector<1x1024xf32>
      %36 = vector.shape_cast %33 : vector<1x1024xf32> to vector<1x1x1024xf32>
      tpu.vector_store %arg9[%c0_25, %c0_26, %c0_27], %36 {strides = array<i32>} : memref<1x1x1024xf32, #tpu.memory_space<vmem>>, vector<1x1x1024xf32>,
    } else {
    }
    return
  }
  func.func @transform_0(%arg0: i32, %arg1: i32, %arg2: i32) -> (i32, i32, i32) {
    %c0_i32 = arith.constant 0 : i32
    %c0_i32_0 = arith.constant 0 : i32
    return %arg0, %arg2, %c0_i32 : i32, i32, i32
  }
  func.func @transform_1(%arg0: i32, %arg1: i32, %arg2: i32) -> (i32, i32) {
    %c0_i32 = arith.constant 0 : i32
    %c0_i32_0 = arith.constant 0 : i32
    %c0_i32_1 = arith.constant 0 : i32
    return %c0_i32, %c0_i32_0 : i32, i32
  }
  func.func @transform_2(%arg0: i32, %arg1: i32, %arg2: i32) -> (i32, i32) {
    %c0_i32 = arith.constant 0 : i32
    %c0_i32_0 = arith.constant 0 : i32
    %c0_i32_1 = arith.constant 0 : i32
    return %c0_i32, %c0_i32_0 : i32, i32
  }
  func.func @transform_3(%arg0: i32, %arg1: i32, %arg2: i32) -> (i32, i32) {
    %c0_i32 = arith.constant 0 : i32
    %c0_i32_0 = arith.constant 0 : i32
    %c0_i32_1 = arith.constant 0 : i32
    return %c0_i32, %c0_i32_0 : i32, i32
  }
  func.func @transform_4(%arg0: i32, %arg1: i32, %arg2: i32) -> (i32, i32) {
    %c0_i32 = arith.constant 0 : i32
    %c0_i32_0 = arith.constant 0 : i32
    %c0_i32_1 = arith.constant 0 : i32
    return %c0_i32, %c0_i32_0 : i32, i32
  }
  func.func @transform_5(%arg0: i32, %arg1: i32, %arg2: i32) -> (i32, i32) {
    %c0_i32 = arith.constant 0 : i32
    %c0_i32_0 = arith.constant 0 : i32
    return %c0_i32, %arg1 : i32, i32
  }
  func.func @transform_6(%arg0: i32, %arg1: i32, %arg2: i32) -> (i32, i32, i32) {
    %c0_i32 = arith.constant 0 : i32
    %c0_i32_0 = arith.constant 0 : i32
    return %arg0, %c0_i32, %arg1 : i32, i32, i32
  }
}

</mosaic_0001>

<llo_original>
// kernel: tpu_custom_call.1
$region0: #{tpu_custom_call.1}
  #allocation0 [shape = 'u32[]', space=smem, size = 0x4, offset = 0x4, fixed_abs, tag = 'smem constant byte address 0x4 - core index']
  #allocation1 [shape = 'u32[144,128]{1,0:T(1,128)}', space=vmem, size = 0x12000, scoped, tag = 'internal scratch']
  %s0 = inlined_call_operand.vmem [shape: bf16[2,512,8], index: 0, kind: input, shape index: {}]
  %s1 = inlined_call_operand.vmem [shape: bf16[8,64], index: 1, kind: input, shape index: {}]
  %s2 = inlined_call_operand.vmem [shape: f32[1,64], index: 2, kind: input, shape index: {}]
  %s3 = inlined_call_operand.vmem [shape: bf16[64,128], index: 3, kind: input, shape index: {}]
  %s4 = inlined_call_operand.vmem [shape: f32[1,128], index: 4, kind: input, shape index: {}]
  %s5 = inlined_call_operand.vmem [shape: bf16[128,1024], index: 5, kind: input, shape index: {}]
  %s6 = inlined_call_operand.hbm [shape: f32[2,1,1024], index: 6, kind: output, shape index: {}]
  %s7 = sld [smem:[#allocation0]]
  $region69: #{tpu_custom_call.1} parent=0
    _
  %s9 = ssub.s32 1, %s7
  %s10 = scalar_select 0, %s9, %s7
  $region1: #{tpu_custom_call.1} parent=0
    #allocation2 [shape = 'u8[8192]{0}', space=vmem, size = 0x2000, scoped, tag = 'output window, operand 0']
    #allocation3 [shape = 's32[2]{0}', space=sflag, size = 0x8, scoped, tag = 'scoped memory for tpu_custom_call.1']
    %11 = vsyncpa [#allocation3], 0
    %s12 = scalar_lea.sflag [#allocation3], 1
    %13 = vsyncpa %s12, 0
    loop: start=0, step=1, limit=4
    $region2: #{tpu_custom_call.1} parent=1 // loop_pre_header
      _
    $region3: #{tpu_custom_call.1} parent=1 // loop_header
      %s15 = sphi 0, %s19
      %p16 = scmp.ge.s32.totalorder %s15, 4
      %s22 = sphi 0, %s41
      %s23 = sphi 0, %s37
      %s24 = sphi 0, %s33
      %s25 = sphi 0, %s22
      %s26 = sphi 0, %s23
      %s27 = sphi 0, %s24
      %s28 = sphi 0, %s25
      %s29 = sphi 0, %s26
      %s30 = sphi 0, %s27
      %s46 = sphi 0, %s48
      %s49 = sphi 0, %s46
      %s50 = sphi 0, %s49
      %s66 = sphi 0, %s50
      %s70 = sphi 0, %s70
      %s72 = sphi 0, %s70
      %s73 = sphi 0, %s72
      %s87 = sphi 0, %s73
      %s91 = sphi 0, %s91
      %s93 = sphi 0, %s91
      %s94 = sphi 0, %s93
      %s108 = sphi 0, %s94
      %s112 = sphi 0, %s112
      %s114 = sphi 0, %s112
      %s115 = sphi 0, %s114
      %s129 = sphi 0, %s115
      %s133 = sphi 0, %s133
      %s135 = sphi 0, %s133
      %s136 = sphi 0, %s135
      %s150 = sphi 0, %s136
      %s156 = sphi 0, %s158
      %s159 = sphi 0, %s156
      %s160 = sphi 0, %s159
      %s176 = sphi 0, %s160
      %s184 = sphi 0, %s186
      %s187 = sphi 0, %s184
      %s188 = sphi 0, %s187
      %s204 = sphi 0, %s188
    $region4: #{tpu_custom_call.1} parent=1 // loop_header_branch
      %18 = sbr.rel (%p16) target = $region8
    $region5: #{tpu_custom_call.1} parent=1 // loop_body
      %s20 = ssub.s32 %s15, 1
      %s21 = ssub.s32 %s15, 2
      %s31 = sadd.s32 1, %s24
      %p32 = scmp.ge.s32.totalorder %s31, 1
      %s33 = scalar_select %p32, 0, %s31
      %s34 = sadd.s32 1, %s23
      %s35 = scalar_select %p32, %s34, %s23
      %p36 = scmp.ge.s32.totalorder %s35, 1
      %s37 = scalar_select %p36, 0, %s35
      %s38 = sadd.s32 1, %s22
      %s39 = scalar_select %p36, %s38, %s22
      %p40 = scmp.ge.s32.totalorder %s39, 2
      %s41 = scalar_select %p40, 0, %s39
      %s42 = ssub.s32 %s22, %s41
      %s43 = ssub.s32 %s24, %s33
      %s44 = sor.u32 %s42, %s43
      %p45 = scmp.eq.s32.totalorder %s44, 0
      %s47 = sadd.s32 %s46, 1
      %s48 = scalar_select %p45, %s46, %s47
      %p51 = pneg %p45
      %p52 = scmp.eq.s32.totalorder %s15, 1
      %p53 = por %p51, %p52
      %p54 = scmp.ne.s32.totalorder %s46, %s49
      %p55 = scmp.eq.s32.totalorder %s15, 0
      %p56 = por %p54, %p55
      %p57 = scmp.ne.s32.totalorder %s46, %s49
      %p58 = scmp.eq.s32.totalorder %s20, 1
      %p59 = por %p57, %p58
      %p60 = scmp.ne.s32.totalorder %s49, %s50
      %p61 = scmp.eq.s32.totalorder %s20, 0
      %p62 = por %p60, %p61
      %p63 = scmp.ne.s32.totalorder %s49, %s50
      %p64 = scmp.eq.s32.totalorder %s21, 1
      %p65 = por %p63, %p64
      %p67 = scmp.ne.s32.totalorder %s50, %s66
      %p68 = scmp.eq.s32.totalorder %s21, 0
      %p69 = por %p67, %p68
      %s71 = sadd.s32 %s70, 1
      %p74 = scmp.eq.s32.totalorder %s15, 1
      %p75 = scmp.ne.s32.totalorder %s70, %s72
      %p76 = scmp.eq.s32.totalorder %s15, 0
      %p77 = por %p75, %p76
      %p78 = scmp.ne.s32.totalorder %s70, %s72
      %p79 = scmp.eq.s32.totalorder %s20, 1
      %p80 = por %p78, %p79
      %p81 = scmp.ne.s32.totalorder %s72, %s73
      %p82 = scmp.eq.s32.totalorder %s20, 0
      %p83 = por %p81, %p82
      %p84 = scmp.ne.s32.totalorder %s72, %s73
      %p85 = scmp.eq.s32.totalorder %s21, 1
      %p86 = por %p84, %p85
      %p88 = scmp.ne.s32.totalorder %s73, %s87
      %p89 = scmp.eq.s32.totalorder %s21, 0
      %p90 = por %p88, %p89
      %s92 = sadd.s32 %s91, 1
      %p95 = scmp.eq.s32.totalorder %s15, 1
      %p96 = scmp.ne.s32.totalorder %s91, %s93
      %p97 = scmp.eq.s32.totalorder %s15, 0
      %p98 = por %p96, %p97
      %p99 = scmp.ne.s32.totalorder %s91, %s93
      %p100 = scmp.eq.s32.totalorder %s20, 1
      %p101 = por %p99, %p100
      %p102 = scmp.ne.s32.totalorder %s93, %s94
      %p103 = scmp.eq.s32.totalorder %s20, 0
      %p104 = por %p102, %p103
      %p105 = scmp.ne.s32.totalorder %s93, %s94
      %p106 = scmp.eq.s32.totalorder %s21, 1
      %p107 = por %p105, %p106
      %p109 = scmp.ne.s32.totalorder %s94, %s108
      %p110 = scmp.eq.s32.totalorder %s21, 0
      %p111 = por %p109, %p110
      %s113 = sadd.s32 %s112, 1
      %p116 = scmp.eq.s32.totalorder %s15, 1
      %p117 = scmp.ne.s32.totalorder %s112, %s114
      %p118 = scmp.eq.s32.totalorder %s15, 0
      %p119 = por %p117, %p118
      %p120 = scmp.ne.s32.totalorder %s112, %s114
      %p121 = scmp.eq.s32.totalorder %s20, 1
      %p122 = por %p120, %p121
      %p123 = scmp.ne.s32.totalorder %s114, %s115
      %p124 = scmp.eq.s32.totalorder %s20, 0
      %p125 = por %p123, %p124
      %p126 = scmp.ne.s32.totalorder %s114, %s115
      %p127 = scmp.eq.s32.totalorder %s21, 1
      %p128 = por %p126, %p127
      %p130 = scmp.ne.s32.totalorder %s115, %s129
      %p131 = scmp.eq.s32.totalorder %s21, 0
      %p132 = por %p130, %p131
      %s134 = sadd.s32 %s133, 1
      %p137 = scmp.eq.s32.totalorder %s15, 1
      %p138 = scmp.ne.s32.totalorder %s133, %s135
      %p139 = scmp.eq.s32.totalorder %s15, 0
      %p140 = por %p138, %p139
      %p141 = scmp.ne.s32.totalorder %s133, %s135
      %p142 = scmp.eq.s32.totalorder %s20, 1
      %p143 = por %p141, %p142
      %p144 = scmp.ne.s32.totalorder %s135, %s136
      %p145 = scmp.eq.s32.totalorder %s20, 0
      %p146 = por %p144, %p145
      %p147 = scmp.ne.s32.totalorder %s135, %s136
      %p148 = scmp.eq.s32.totalorder %s21, 1
      %p149 = por %p147, %p148
      %p151 = scmp.ne.s32.totalorder %s136, %s150
      %p152 = scmp.eq.s32.totalorder %s21, 0
      %p153 = por %p151, %p152
      %s154 = ssub.s32 %s23, %s37
      %p155 = scmp.eq.s32.totalorder %s154, 0
      %s157 = sadd.s32 %s156, 1
      %s158 = scalar_select %p155, %s156, %s157
      %p161 = pneg %p155
      %p162 = scmp.eq.s32.totalorder %s15, 1
      %p163 = por %p161, %p162
      %p164 = scmp.ne.s32.totalorder %s156, %s159
      %p165 = scmp.eq.s32.totalorder %s15, 0
      %p166 = por %p164, %p165
      %p167 = scmp.ne.s32.totalorder %s156, %s159
      %p168 = scmp.eq.s32.totalorder %s20, 1
      %p169 = por %p167, %p168
      %p170 = scmp.ne.s32.totalorder %s159, %s160
      %p171 = scmp.eq.s32.totalorder %s20, 0
      %p172 = por %p170, %p171
      %p173 = scmp.ne.s32.totalorder %s159, %s160
      %p174 = scmp.eq.s32.totalorder %s21, 1
      %p175 = por %p173, %p174
      %p177 = scmp.ne.s32.totalorder %s160, %s176
      %p178 = scmp.eq.s32.totalorder %s21, 0
      %p179 = por %p177, %p178
      %s180 = ssub.s32 %s22, %s41
      %s181 = ssub.s32 %s23, %s37
      %s182 = sor.u32 %s180, %s181
      %p183 = scmp.eq.s32.totalorder %s182, 0
      %s185 = sadd.s32 %s184, 1
      %s186 = scalar_select %p183, %s184, %s185
      %p189 = pneg %p183
      %p190 = scmp.eq.s32.totalorder %s15, 1
      %p191 = por %p189, %p190
      %p192 = scmp.ne.s32.totalorder %s184, %s187
      %p193 = scmp.eq.s32.totalorder %s15, 0
      %p194 = por %p192, %p193
      %p195 = scmp.ne.s32.totalorder %s184, %s187
      %p196 = scmp.eq.s32.totalorder %s20, 1
      %p197 = por %p195, %p196
      %p198 = scmp.ne.s32.totalorder %s187, %s188
      %p199 = scmp.eq.s32.totalorder %s20, 0
      %p200 = por %p198, %p199
      %p201 = scmp.ne.s32.totalorder %s187, %s188
      %p202 = scmp.eq.s32.totalorder %s21, 1
      %p203 = por %p201, %p202
      %p205 = scmp.ne.s32.totalorder %s188, %s204
      %p206 = scmp.eq.s32.totalorder %s21, 0
      %p207 = por %p205, %p206
      %p208 = scmp.le.s32.totalorder 1, %s15
      %p209 = scmp.lt.s32.totalorder %s15, 3
      %p210 = pnand %p208, %p209
      %p211 = pneg %p210
      // Predicated region
      $region9: #{tpu_custom_call.1} parent=5 // pred_check
        _
      $region10: #{tpu_custom_call.1} parent=5 // pred_check_branch
        %213 = sbr.rel (%p210) target = $region12
      $region11: #{tpu_custom_call.1} parent=5 // pred_region
        %s214 = ssub.s32 %s15, 1
        // Predicated region
        $region13: #{tpu_custom_call.1} parent=11 // pred_check
          %p215 = pneg %p83
        $region14: #{tpu_custom_call.1} parent=11 // pred_check_branch
          %217 = sbr.rel (%p215) target = $region16
        $region15: #{tpu_custom_call.1} parent=11 // pred_region
          _
        $region16: #{tpu_custom_call.1} parent=11 // pred_fallthru
          _
        // Predicated region
        $region17: #{tpu_custom_call.1} parent=11 // pred_check
          %p218 = pneg %p104
        $region18: #{tpu_custom_call.1} parent=11 // pred_check_branch
          %220 = sbr.rel (%p218) target = $region20
        $region19: #{tpu_custom_call.1} parent=11 // pred_region
          _
        $region20: #{tpu_custom_call.1} parent=11 // pred_fallthru
          _
        // Predicated region
        $region21: #{tpu_custom_call.1} parent=11 // pred_check
          %p221 = pneg %p125
        $region22: #{tpu_custom_call.1} parent=11 // pred_check_branch
          %223 = sbr.rel (%p221) target = $region24
        $region23: #{tpu_custom_call.1} parent=11 // pred_region
          _
        $region24: #{tpu_custom_call.1} parent=11 // pred_fallthru
          _
        // Predicated region
        $region25: #{tpu_custom_call.1} parent=11 // pred_check
          %p224 = pneg %p146
        $region26: #{tpu_custom_call.1} parent=11 // pred_check_branch
          %226 = sbr.rel (%p224) target = $region28
        $region27: #{tpu_custom_call.1} parent=11 // pred_region
          _
        $region28: #{tpu_custom_call.1} parent=11 // pred_fallthru
          _
        // Predicated region
        $region29: #{tpu_custom_call.1} parent=11 // pred_check
          %p227 = pneg %p172
        $region30: #{tpu_custom_call.1} parent=11 // pred_check_branch
          %229 = sbr.rel (%p227) target = $region32
        $region31: #{tpu_custom_call.1} parent=11 // pred_region
          %s230 = smul.u32 8, %s26
          %p231 = scmp.lt.s32.totalorder %s230, 7
          %s232 = scalar_select %p231, %s230, 7
          %s233 = smul.addr %s232, 4
          %s234 = scalar_lea.vmem %s5, %s233
          %s235 = smul.u32 8, %s26
        $region32: #{tpu_custom_call.1} parent=11 // pred_fallthru
          _
      $region12: #{tpu_custom_call.1} parent=5 // pred_fallthru
        _
      %p236 = scmp.lt.s32.totalorder %s15, 2
      // Predicated region
      $region33: #{tpu_custom_call.1} parent=5 // pred_check
        %p237 = pneg %p236
      $region34: #{tpu_custom_call.1} parent=5 // pred_check_branch
        %239 = sbr.rel (%p237) target = $region36
      $region35: #{tpu_custom_call.1} parent=5 // pred_region
        // Predicated region
        $region37: #{tpu_custom_call.1} parent=35 // pred_check
          %p240 = pneg %p56
        $region38: #{tpu_custom_call.1} parent=35 // pred_check_branch
          %242 = sbr.rel (%p240) target = $region40
        $region39: #{tpu_custom_call.1} parent=35 // pred_region
          %s243 = smul.u32 64, %s24
          %p244 = scmp.lt.s32.totalorder %s22, 1
          %s245 = scalar_select %p244, %s22, 1
          %p246 = scmp.lt.s32.totalorder %s243, 63
          %s247 = scalar_select %p246, %s243, 63
          %s248 = smul.addr %s245, 64
          %s249 = sadd.s32 %s247, %s248
          %s250 = smul.addr %s249, 4
          %s251 = scalar_lea.vmem %s0, %s250
          %s252 = smul.u32 64, %s24
        $region40: #{tpu_custom_call.1} parent=35 // pred_fallthru
          _
      $region36: #{tpu_custom_call.1} parent=5 // pred_fallthru
        _
      %p253 = scmp.le.s32.totalorder 1, %s15
      %p254 = scmp.lt.s32.totalorder %s15, 3
      %p255 = pnand %p253, %p254
      %p256 = pneg %p255
      // Predicated region
      $region41: #{tpu_custom_call.1} parent=5 // pred_check
        _
      $region42: #{tpu_custom_call.1} parent=5 // pred_check_branch
        %258 = sbr.rel (%p255) target = $region44
      $region43: #{tpu_custom_call.1} parent=5 // pred_region
        %s259 = ssub.s32 %s15, 1
        %s260 = smul.u32 64, %s27
        %p261 = scmp.lt.s32.totalorder %s25, 1
        %s262 = scalar_select %p261, %s25, 1
        %p263 = scmp.lt.s32.totalorder %s260, 63
        %s264 = scalar_select %p263, %s260, 63
        %s265 = smul.addr %s262, 64
        %s266 = sadd.s32 %s264, %s265
        %s267 = smul.addr %s266, 4
        %s268 = scalar_lea.vmem %s0, %s267
        %p269 = pneg %p62
        %p270 = pneg %p59
        %p271 = pneg %p83
        %p272 = pneg %p80
        %p273 = pneg %p104
        %p274 = pneg %p101
        %p275 = pneg %p125
        %p276 = pneg %p122
        %p277 = pneg %p146
        %p278 = pneg %p143
        %s279 = smul.u32 8, %s26
        %p280 = scmp.lt.s32.totalorder %s279, 7
        %s281 = scalar_select %p280, %s279, 7
        %s282 = smul.addr %s281, 4
        %s283 = scalar_lea.vmem %s5, %s282
        %p284 = pneg %p172
        %p285 = pneg %p169
        %p286 = pneg %p200
        %p287 = pneg %p197
        %s288 = sand.u32 %s187, 1
        %s289 = scalar_lea.sflag [#allocation3], %s288
        %s290 = sand.u32 %s187, 1
        %s291 = smul.addr %s290, 8
        %s292 = scalar_lea.vmem [#allocation2], %s291
        %s293 = smul.u32 64, %s27
        %p294 = scmp.lt.s32.totalorder %s25, 1
        %s295 = scalar_select %p294, %s25, 1
        %p296 = scmp.lt.s32.totalorder %s293, 63
        %s297 = scalar_select %p296, %s293, 63
        %s298 = smul.addr %s295, 64
        %s299 = sadd.s32 %s297, %s298
        %s300 = smul.addr %s299, 4
        %s301 = scalar_lea.vmem %s0, %s300
        %s302 = smul.u32 64, %s27
        %s303 = smul.u32 8, %s26
        %p304 = scmp.lt.s32.totalorder %s303, 7
        %s305 = scalar_select %p304, %s303, 7
        %s306 = smul.addr %s305, 4
        %s307 = scalar_lea.vmem %s5, %s306
        %s308 = smul.u32 8, %s26
        %s309 = smul.u32 8, %s26
        %p311 = scmp.eq.s32.totalorder %s27, 0
        // Predicated region
        $region45: #{tpu_custom_call.1} parent=43 // pred_check
          %p312 = pneg %p311
        $region46: #{tpu_custom_call.1} parent=43 // pred_check_branch
          %314 = sbr.rel (%p312) target = $region48
        $region47: #{tpu_custom_call.1} parent=43 // pred_region
          %315 = vst [vmem:[%s292] sm:$0xff] -inf
        $region48: #{tpu_custom_call.1} parent=43 // pred_fallthru
          _
        %v316 = vld [vmem:[%s301] sm:$0xf]
        %v317 = vld [vmem:[%s301 + $0x4] sm:$0xf]
        %v318 = vld [vmem:[%s301 + $0x8] sm:$0xf]
        %v319 = vld [vmem:[%s301 + $0xc] sm:$0xf]
        %v320 = vld [vmem:[%s301 + $0x10] sm:$0xf]
        %v321 = vld [vmem:[%s301 + $0x14] sm:$0xf]
        %v322 = vld [vmem:[%s301 + $0x18] sm:$0xf]
        %v323 = vld [vmem:[%s301 + $0x1c] sm:$0xf]
        %v324 = vld [vmem:[%s301 + $0x20] sm:$0xf]
        %v325 = vld [vmem:[%s301 + $0x24] sm:$0xf]
        %v326 = vld [vmem:[%s301 + $0x28] sm:$0xf]
        %v327 = vld [vmem:[%s301 + $0x2c] sm:$0xf]
        %v328 = vld [vmem:[%s301 + $0x30] sm:$0xf]
        %v329 = vld [vmem:[%s301 + $0x34] sm:$0xf]
        %v330 = vld [vmem:[%s301 + $0x38] sm:$0xf]
        %v331 = vld [vmem:[%s301 + $0x3c] sm:$0xf]
        %v332 = vld [vmem:[%s301 + $0x40] sm:$0xf]
        %v333 = vld [vmem:[%s301 + $0x44] sm:$0xf]
        %v334 = vld [vmem:[%s301 + $0x48] sm:$0xf]
        %v335 = vld [vmem:[%s301 + $0x4c] sm:$0xf]
        %v336 = vld [vmem:[%s301 + $0x50] sm:$0xf]
        %v337 = vld [vmem:[%s301 + $0x54] sm:$0xf]
        %v338 = vld [vmem:[%s301 + $0x58] sm:$0xf]
        %v339 = vld [vmem:[%s301 + $0x5c] sm:$0xf]
        %v340 = vld [vmem:[%s301 + $0x60] sm:$0xf]
        %v341 = vld [vmem:[%s301 + $0x64] sm:$0xf]
        %v342 = vld [vmem:[%s301 + $0x68] sm:$0xf]
        %v343 = vld [vmem:[%s301 + $0x6c] sm:$0xf]
        %v344 = vld [vmem:[%s301 + $0x70] sm:$0xf]
        %v345 = vld [vmem:[%s301 + $0x74] sm:$0xf]
        %v346 = vld [vmem:[%s301 + $0x78] sm:$0xf]
        %v347 = vld [vmem:[%s301 + $0x7c] sm:$0xf]
        %v348 = vld [vmem:[%s301 + $0x80] sm:$0xf]
        %v349 = vld [vmem:[%s301 + $0x84] sm:$0xf]
        %v350 = vld [vmem:[%s301 + $0x88] sm:$0xf]
        %v351 = vld [vmem:[%s301 + $0x8c] sm:$0xf]
        %v352 = vld [vmem:[%s301 + $0x90] sm:$0xf]
        %v353 = vld [vmem:[%s301 + $0x94] sm:$0xf]
        %v354 = vld [vmem:[%s301 + $0x98] sm:$0xf]
        %v355 = vld [vmem:[%s301 + $0x9c] sm:$0xf]
        %v356 = vld [vmem:[%s301 + $0xa0] sm:$0xf]
        %v357 = vld [vmem:[%s301 + $0xa4] sm:$0xf]
        %v358 = vld [vmem:[%s301 + $0xa8] sm:$0xf]
        %v359 = vld [vmem:[%s301 + $0xac] sm:$0xf]
        %v360 = vld [vmem:[%s301 + $0xb0] sm:$0xf]
        %v361 = vld [vmem:[%s301 + $0xb4] sm:$0xf]
        %v362 = vld [vmem:[%s301 + $0xb8] sm:$0xf]
        %v363 = vld [vmem:[%s301 + $0xbc] sm:$0xf]
        %v364 = vld [vmem:[%s301 + $0xc0] sm:$0xf]
        %v365 = vld [vmem:[%s301 + $0xc4] sm:$0xf]
        %v366 = vld [vmem:[%s301 + $0xc8] sm:$0xf]
        %v367 = vld [vmem:[%s301 + $0xcc] sm:$0xf]
        %v368 = vld [vmem:[%s301 + $0xd0] sm:$0xf]
        %v369 = vld [vmem:[%s301 + $0xd4] sm:$0xf]
        %v370 = vld [vmem:[%s301 + $0xd8] sm:$0xf]
        %v371 = vld [vmem:[%s301 + $0xdc] sm:$0xf]
        %v372 = vld [vmem:[%s301 + $0xe0] sm:$0xf]
        %v373 = vld [vmem:[%s301 + $0xe4] sm:$0xf]
        %v374 = vld [vmem:[%s301 + $0xe8] sm:$0xf]
        %v375 = vld [vmem:[%s301 + $0xec] sm:$0xf]
        %v376 = vld [vmem:[%s301 + $0xf0] sm:$0xf]
        %v377 = vld [vmem:[%s301 + $0xf4] sm:$0xf]
        %v378 = vld [vmem:[%s301 + $0xf8] sm:$0xf]
        %v379 = vld [vmem:[%s301 + $0xfc] sm:$0xf]
        %v380 = vld [vmem:[%s1] sm:$0xf]
        %v381 = vld [vmem:[%s2] sm:$0x1]
        %v383 = vlaneseq
        %v384 = vshrl.u32 %v383, 7
        %v385 = vsub.s32 0, %v384
        %v386 = vrot.slane %v381, %v385
        %v452 = vunpack.c.l.b16 %v316
        %v453 = vunpack.c.l.b16 %v317
        %v454 = vunpack.c.l.b16 %v318
        %v455 = vunpack.c.l.b16 %v319
        %v456 = vunpack.c.l.b16 %v320
        %v457 = vunpack.c.l.b16 %v321
        %v458 = vunpack.c.l.b16 %v322
        %v459 = vunpack.c.l.b16 %v323
        %v460 = vunpack.c.l.b16 %v324
        %v461 = vunpack.c.l.b16 %v325
        %v462 = vunpack.c.l.b16 %v326
        %v463 = vunpack.c.l.b16 %v327
        %v464 = vunpack.c.l.b16 %v328
        %v465 = vunpack.c.l.b16 %v329
        %v466 = vunpack.c.l.b16 %v330
        %v467 = vunpack.c.l.b16 %v331
        %v468 = vunpack.c.l.b16 %v332
        %v469 = vunpack.c.l.b16 %v333
        %v470 = vunpack.c.l.b16 %v334
        %v471 = vunpack.c.l.b16 %v335
        %v472 = vunpack.c.l.b16 %v336
        %v473 = vunpack.c.l.b16 %v337
        %v474 = vunpack.c.l.b16 %v338
        %v475 = vunpack.c.l.b16 %v339
        %v476 = vunpack.c.l.b16 %v340
        %v477 = vunpack.c.l.b16 %v341
        %v478 = vunpack.c.l.b16 %v342
        %v479 = vunpack.c.l.b16 %v343
        %v480 = vunpack.c.l.b16 %v344
        %v481 = vunpack.c.l.b16 %v345
        %v482 = vunpack.c.l.b16 %v346
        %v483 = vunpack.c.l.b16 %v347
        %v484 = vunpack.c.l.b16 %v348
        %v485 = vunpack.c.l.b16 %v349
        %v486 = vunpack.c.l.b16 %v350
        %v487 = vunpack.c.l.b16 %v351
        %v488 = vunpack.c.l.b16 %v352
        %v489 = vunpack.c.l.b16 %v353
        %v490 = vunpack.c.l.b16 %v354
        %v491 = vunpack.c.l.b16 %v355
        %v492 = vunpack.c.l.b16 %v356
        %v493 = vunpack.c.l.b16 %v357
        %v494 = vunpack.c.l.b16 %v358
        %v495 = vunpack.c.l.b16 %v359
        %v496 = vunpack.c.l.b16 %v360
        %v497 = vunpack.c.l.b16 %v361
        %v498 = vunpack.c.l.b16 %v362
        %v499 = vunpack.c.l.b16 %v363
        %v500 = vunpack.c.l.b16 %v364
        %v501 = vunpack.c.l.b16 %v365
        %v502 = vunpack.c.l.b16 %v366
        %v503 = vunpack.c.l.b16 %v367
        %v504 = vunpack.c.l.b16 %v368
        %v505 = vunpack.c.l.b16 %v369
        %v506 = vunpack.c.l.b16 %v370
        %v507 = vunpack.c.l.b16 %v371
        %v508 = vunpack.c.l.b16 %v372
        %v509 = vunpack.c.l.b16 %v373
        %v510 = vunpack.c.l.b16 %v374
        %v511 = vunpack.c.l.b16 %v375
        %v512 = vunpack.c.l.b16 %v376
        %v513 = vunpack.c.l.b16 %v377
        %v514 = vunpack.c.l.b16 %v378
        %v515 = vunpack.c.l.b16 %v379
        %v516 = vpack.c.b16 %v453, %v452
        %v517 = vpack.c.b16 %v455, %v454
        %v518 = vpack.c.b16 %v457, %v456
        %v519 = vpack.c.b16 %v459, %v458
        %v520 = vpack.c.b16 %v461, %v460
        %v521 = vpack.c.b16 %v463, %v462
        %v522 = vpack.c.b16 %v465, %v464
        %v523 = vpack.c.b16 %v467, %v466
        %v524 = vpack.c.b16 %v469, %v468
        %v525 = vpack.c.b16 %v471, %v470
        %v526 = vpack.c.b16 %v473, %v472
        %v527 = vpack.c.b16 %v475, %v474
        %v528 = vpack.c.b16 %v477, %v476
        %v529 = vpack.c.b16 %v479, %v478
        %v530 = vpack.c.b16 %v481, %v480
        %v531 = vpack.c.b16 %v483, %v482
        %v532 = vpack.c.b16 %v485, %v484
        %v533 = vpack.c.b16 %v487, %v486
        %v534 = vpack.c.b16 %v489, %v488
        %v535 = vpack.c.b16 %v491, %v490
        %v536 = vpack.c.b16 %v493, %v492
        %v537 = vpack.c.b16 %v495, %v494
        %v538 = vpack.c.b16 %v497, %v496
        %v539 = vpack.c.b16 %v499, %v498
        %v540 = vpack.c.b16 %v501, %v500
        %v541 = vpack.c.b16 %v503, %v502
        %v542 = vpack.c.b16 %v505, %v504
        %v543 = vpack.c.b16 %v507, %v506
        %v544 = vpack.c.b16 %v509, %v508
        %v545 = vpack.c.b16 %v511, %v510
        %v546 = vpack.c.b16 %v513, %v512
        %v547 = vpack.c.b16 %v515, %v514
        %vm548 = vcmask 64512
        %v550 = vsel %vm548, %v516, 0
        %v553 = vsel %vm548, %v517, 0
        %v556 = vsel %vm548, %v518, 0
        %v559 = vsel %vm548, %v519, 0
        %v562 = vsel %vm548, %v520, 0
        %v565 = vsel %vm548, %v521, 0
        %v568 = vsel %vm548, %v522, 0
        %v571 = vsel %vm548, %v523, 0
        %v574 = vsel %vm548, %v524, 0
        %v577 = vsel %vm548, %v525, 0
        %v580 = vsel %vm548, %v526, 0
        %v583 = vsel %vm548, %v527, 0
        %v586 = vsel %vm548, %v528, 0
        %v589 = vsel %vm548, %v529, 0
        %v592 = vsel %vm548, %v530, 0
        %v595 = vsel %vm548, %v531, 0
        %v598 = vsel %vm548, %v532, 0
        %v601 = vsel %vm548, %v533, 0
        %v604 = vsel %vm548, %v534, 0
        %v607 = vsel %vm548, %v535, 0
        %v610 = vsel %vm548, %v536, 0
        %v613 = vsel %vm548, %v537, 0
        %v616 = vsel %vm548, %v538, 0
        %v619 = vsel %vm548, %v539, 0
        %v622 = vsel %vm548, %v540, 0
        %v625 = vsel %vm548, %v541, 0
        %v628 = vsel %vm548, %v542, 0
        %v631 = vsel %vm548, %v543, 0
        %v634 = vsel %vm548, %v544, 0
        %v637 = vsel %vm548, %v545, 0
        %v640 = vsel %vm548, %v546, 0
        %v643 = vsel %vm548, %v547, 0
        %vm645 = vcmask 1043456
        %v647 = vsel %vm645, %v380, 0
        %649 = vmatprep.subr.bf16.mxu0 0
        %650 = vmatpush1.bf16.msra.mxu0 0
        %651 = vmatprep.subr.bf16.mxu0 0
        %652 = vmatpush1.bf16.msra.mxu0 0
        %653 = vmatprep.subr.bf16.mxu0 0
        %654 = vmatpush1.bf16.msra.mxu0 0
        %655 = vmatprep.subr.bf16.mxu0 0
        %656 = vmatpush1.bf16.msra.mxu0 0
        %657 = vmatprep.subr.bf16.mxu0 0
        %658 = vmatpush1.bf16.msra.mxu0 0
        %659 = vmatprep.subr.bf16.mxu0 0
        %660 = vmatpush1.bf16.msra.mxu0 0
        %661 = vmatprep.subr.bf16.mxu0 0
        %662 = vmatpush1.bf16.msra.mxu0 0
        %663 = vmatprep.subr.bf16.mxu0 0
        %664 = vmatpush1.bf16.msra.mxu0 %v647
        %665 = vmatprep.subr.bf16.mxu0 0
        %666 = vmatpush2.bf16.msra.mxu0 0
        %667 = vmatprep.subr.bf16.mxu0 0
        %668 = vmatpush2.bf16.msra.mxu0 0
        %669 = vmatprep.subr.bf16.mxu0 0
        %670 = vmatpush2.bf16.msra.mxu0 0
        %671 = vmatprep.subr.bf16.mxu0 0
        %672 = vmatpush2.bf16.msra.mxu0 0
        %673 = vmatprep.subr.bf16.mxu0 0
        %674 = vmatpush2.bf16.msra.mxu0 0
        %675 = vmatprep.subr.bf16.mxu0 0
        %676 = vmatpush2.bf16.msra.mxu0 0
        %677 = vmatprep.subr.bf16.mxu0 0
        %678 = vmatpush2.bf16.msra.mxu0 0
        %679 = vmatprep.subr.bf16.mxu0 0
        %680 = vmatpush2.bf16.msra.mxu0 0
        %681 = vmatprep.mubr.bf16.mxu0 0
        %682 = vmatmul.mubr.bf16.gmra.mxu0 %v550
        %v683 = vpop.f32.mrf.mxu0
        %v684 = vadd.f32 %v386, %v683
        %v685 = vpop.f32.mrf.mxu0
        %v686 = vpop.f32.mrf.mxu0
        %v687 = vadd.f32 %v386, %v686
        %v688 = vpop.f32.mrf.mxu0
        %689 = vmatprep.mubr.bf16.mxu0 0
        %690 = vmatmul.mubr.bf16.gmra.mxu0 %v553
        %v691 = vpop.f32.mrf.mxu0
        %v692 = vadd.f32 %v386, %v691
        %v693 = vpop.f32.mrf.mxu0
        %v694 = vpop.f32.mrf.mxu0
        %v695 = vadd.f32 %v386, %v694
        %v696 = vpop.f32.mrf.mxu0
        %697 = vmatprep.mubr.bf16.mxu0 0
        %698 = vmatmul.mubr.bf16.gmra.mxu0 %v556
        %v699 = vpop.f32.mrf.mxu0
        %v700 = vadd.f32 %v386, %v699
        %v701 = vpop.f32.mrf.mxu0
        %v702 = vpop.f32.mrf.mxu0
        %v703 = vadd.f32 %v386, %v702
        %v704 = vpop.f32.mrf.mxu0
        %705 = vmatprep.mubr.bf16.mxu0 0
        %706 = vmatmul.mubr.bf16.gmra.mxu0 %v559
        %v707 = vpop.f32.mrf.mxu0
        %v708 = vadd.f32 %v386, %v707
        %v709 = vpop.f32.mrf.mxu0
        %v710 = vpop.f32.mrf.mxu0
        %v711 = vadd.f32 %v386, %v710
        %v712 = vpop.f32.mrf.mxu0
        %713 = vmatprep.mubr.bf16.mxu0 0
        %714 = vmatmul.mubr.bf16.gmra.mxu0 %v562
        %v715 = vpop.f32.mrf.mxu0
        %v716 = vadd.f32 %v386, %v715
        %v717 = vpop.f32.mrf.mxu0
        %v718 = vpop.f32.mrf.mxu0
        %v719 = vadd.f32 %v386, %v718
        %v720 = vpop.f32.mrf.mxu0
        %721 = vmatprep.mubr.bf16.mxu0 0
        %722 = vmatmul.mubr.bf16.gmra.mxu0 %v565
        %v723 = vpop.f32.mrf.mxu0
        %v724 = vadd.f32 %v386, %v723
        %v725 = vpop.f32.mrf.mxu0
        %v726 = vpop.f32.mrf.mxu0
        %v727 = vadd.f32 %v386, %v726
        %v728 = vpop.f32.mrf.mxu0
        %729 = vmatprep.mubr.bf16.mxu0 0
        %730 = vmatmul.mubr.bf16.gmra.mxu0 %v568
        %v731 = vpop.f32.mrf.mxu0
        %v732 = vadd.f32 %v386, %v731
        %v733 = vpop.f32.mrf.mxu0
        %v734 = vpop.f32.mrf.mxu0
        %v735 = vadd.f32 %v386, %v734
        %v736 = vpop.f32.mrf.mxu0
        %737 = vmatprep.mubr.bf16.mxu0 0
        %738 = vmatmul.mubr.bf16.gmra.mxu0 %v571
        %v739 = vpop.f32.mrf.mxu0
        %v740 = vadd.f32 %v386, %v739
        %v741 = vpop.f32.mrf.mxu0
        %v742 = vpop.f32.mrf.mxu0
        %v743 = vadd.f32 %v386, %v742
        %v744 = vpop.f32.mrf.mxu0
        %745 = vmatprep.mubr.bf16.mxu0 0
        %746 = vmatmul.mubr.bf16.gmra.mxu0 %v574
        %v747 = vpop.f32.mrf.mxu0
        %v748 = vadd.f32 %v386, %v747
        %v749 = vpop.f32.mrf.mxu0
        %v750 = vpop.f32.mrf.mxu0
        %v751 = vadd.f32 %v386, %v750
        %v752 = vpop.f32.mrf.mxu0
        %753 = vmatprep.mubr.bf16.mxu0 0
        %754 = vmatmul.mubr.bf16.gmra.mxu0 %v577
        %v755 = vpop.f32.mrf.mxu0
        %v756 = vadd.f32 %v386, %v755
        %v757 = vpop.f32.mrf.mxu0
        %v758 = vpop.f32.mrf.mxu0
        %v759 = vadd.f32 %v386, %v758
        %v760 = vpop.f32.mrf.mxu0
        %761 = vmatprep.mubr.bf16.mxu0 0
        %762 = vmatmul.mubr.bf16.gmra.mxu0 %v580
        %v763 = vpop.f32.mrf.mxu0
        %v764 = vadd.f32 %v386, %v763
        %v765 = vpop.f32.mrf.mxu0
        %v766 = vpop.f32.mrf.mxu0
        %v767 = vadd.f32 %v386, %v766
        %v768 = vpop.f32.mrf.mxu0
        %769 = vmatprep.mubr.bf16.mxu0 0
        %770 = vmatmul.mubr.bf16.gmra.mxu0 %v583
        %v771 = vpop.f32.mrf.mxu0
        %v772 = vadd.f32 %v386, %v771
        %v773 = vpop.f32.mrf.mxu0
        %v774 = vpop.f32.mrf.mxu0
        %v775 = vadd.f32 %v386, %v774
        %v776 = vpop.f32.mrf.mxu0
        %777 = vmatprep.mubr.bf16.mxu0 0
        %778 = vmatmul.mubr.bf16.gmra.mxu0 %v586
        %v779 = vpop.f32.mrf.mxu0
        %v780 = vadd.f32 %v386, %v779
        %v781 = vpop.f32.mrf.mxu0
        %v782 = vpop.f32.mrf.mxu0
        %v783 = vadd.f32 %v386, %v782
        %v784 = vpop.f32.mrf.mxu0
        %785 = vmatprep.mubr.bf16.mxu0 0
        %786 = vmatmul.mubr.bf16.gmra.mxu0 %v589
        %v787 = vpop.f32.mrf.mxu0
        %v788 = vadd.f32 %v386, %v787
        %v789 = vpop.f32.mrf.mxu0
        %v790 = vpop.f32.mrf.mxu0
        %v791 = vadd.f32 %v386, %v790
        %v792 = vpop.f32.mrf.mxu0
        %793 = vmatprep.mubr.bf16.mxu0 0
        %794 = vmatmul.mubr.bf16.gmra.mxu0 %v592
        %v795 = vpop.f32.mrf.mxu0
        %v796 = vadd.f32 %v386, %v795
        %v797 = vpop.f32.mrf.mxu0
        %v798 = vpop.f32.mrf.mxu0
        %v799 = vadd.f32 %v386, %v798
        %v800 = vpop.f32.mrf.mxu0
        %801 = vmatprep.mubr.bf16.mxu0 0
        %802 = vmatmul.mubr.bf16.gmra.mxu0 %v595
        %v803 = vpop.f32.mrf.mxu0
        %v804 = vadd.f32 %v386, %v803
        %v805 = vpop.f32.mrf.mxu0
        %v806 = vpop.f32.mrf.mxu0
        %v807 = vadd.f32 %v386, %v806
        %v808 = vpop.f32.mrf.mxu0
        %809 = vmatprep.mubr.bf16.mxu0 0
        %810 = vmatmul.mubr.bf16.gmra.mxu0 %v598
        %v811 = vpop.f32.mrf.mxu0
        %v812 = vadd.f32 %v386, %v811
        %v813 = vpop.f32.mrf.mxu0
        %v814 = vpop.f32.mrf.mxu0
        %v815 = vadd.f32 %v386, %v814
        %v816 = vpop.f32.mrf.mxu0
        %817 = vmatprep.mubr.bf16.mxu0 0
        %818 = vmatmul.mubr.bf16.gmra.mxu0 %v601
        %v819 = vpop.f32.mrf.mxu0
        %v820 = vadd.f32 %v386, %v819
        %v821 = vpop.f32.mrf.mxu0
        %v822 = vpop.f32.mrf.mxu0
        %v823 = vadd.f32 %v386, %v822
        %v824 = vpop.f32.mrf.mxu0
        %825 = vmatprep.mubr.bf16.mxu0 0
        %826 = vmatmul.mubr.bf16.gmra.mxu0 %v604
        %v827 = vpop.f32.mrf.mxu0
        %v828 = vadd.f32 %v386, %v827
        %v829 = vpop.f32.mrf.mxu0
        %v830 = vpop.f32.mrf.mxu0
        %v831 = vadd.f32 %v386, %v830
        %v832 = vpop.f32.mrf.mxu0
        %833 = vmatprep.mubr.bf16.mxu0 0
        %834 = vmatmul.mubr.bf16.gmra.mxu0 %v607
        %v835 = vpop.f32.mrf.mxu0
        %v836 = vadd.f32 %v386, %v835
        %v837 = vpop.f32.mrf.mxu0
        %v838 = vpop.f32.mrf.mxu0
        %v839 = vadd.f32 %v386, %v838
        %v840 = vpop.f32.mrf.mxu0
        %841 = vmatprep.mubr.bf16.mxu0 0
        %842 = vmatmul.mubr.bf16.gmra.mxu0 %v610
        %v843 = vpop.f32.mrf.mxu0
        %v844 = vadd.f32 %v386, %v843
        %v845 = vpop.f32.mrf.mxu0
        %v846 = vpop.f32.mrf.mxu0
        %v847 = vadd.f32 %v386, %v846
        %v848 = vpop.f32.mrf.mxu0
        %849 = vmatprep.mubr.bf16.mxu0 0
        %850 = vmatmul.mubr.bf16.gmra.mxu0 %v613
        %v851 = vpop.f32.mrf.mxu0
        %v852 = vadd.f32 %v386, %v851
        %v853 = vpop.f32.mrf.mxu0
        %v854 = vpop.f32.mrf.mxu0
        %v855 = vadd.f32 %v386, %v854
        %v856 = vpop.f32.mrf.mxu0
        %857 = vmatprep.mubr.bf16.mxu0 0
        %858 = vmatmul.mubr.bf16.gmra.mxu0 %v616
        %v859 = vpop.f32.mrf.mxu0
        %v860 = vadd.f32 %v386, %v859
        %v861 = vpop.f32.mrf.mxu0
        %v862 = vpop.f32.mrf.mxu0
        %v863 = vadd.f32 %v386, %v862
        %v864 = vpop.f32.mrf.mxu0
        %865 = vmatprep.mubr.bf16.mxu0 0
        %866 = vmatmul.mubr.bf16.gmra.mxu0 %v619
        %v867 = vpop.f32.mrf.mxu0
        %v868 = vadd.f32 %v386, %v867
        %v869 = vpop.f32.mrf.mxu0
        %v870 = vpop.f32.mrf.mxu0
        %v871 = vadd.f32 %v386, %v870
        %v872 = vpop.f32.mrf.mxu0
        %873 = vmatprep.mubr.bf16.mxu0 0
        %874 = vmatmul.mubr.bf16.gmra.mxu0 %v622
        %v875 = vpop.f32.mrf.mxu0
        %v876 = vadd.f32 %v386, %v875
        %v877 = vpop.f32.mrf.mxu0
        %v878 = vpop.f32.mrf.mxu0
        %v879 = vadd.f32 %v386, %v878
        %v880 = vpop.f32.mrf.mxu0
        %881 = vmatprep.mubr.bf16.mxu0 0
        %882 = vmatmul.mubr.bf16.gmra.mxu0 %v625
        %v883 = vpop.f32.mrf.mxu0
        %v884 = vadd.f32 %v386, %v883
        %v885 = vpop.f32.mrf.mxu0
        %v886 = vpop.f32.mrf.mxu0
        %v887 = vadd.f32 %v386, %v886
        %v888 = vpop.f32.mrf.mxu0
        %889 = vmatprep.mubr.bf16.mxu0 0
        %890 = vmatmul.mubr.bf16.gmra.mxu0 %v628
        %v891 = vpop.f32.mrf.mxu0
        %v892 = vadd.f32 %v386, %v891
        %v893 = vpop.f32.mrf.mxu0
        %v894 = vpop.f32.mrf.mxu0
        %v895 = vadd.f32 %v386, %v894
        %v896 = vpop.f32.mrf.mxu0
        %897 = vmatprep.mubr.bf16.mxu0 0
        %898 = vmatmul.mubr.bf16.gmra.mxu0 %v631
        %v899 = vpop.f32.mrf.mxu0
        %v900 = vadd.f32 %v386, %v899
        %v901 = vpop.f32.mrf.mxu0
        %v902 = vpop.f32.mrf.mxu0
        %v903 = vadd.f32 %v386, %v902
        %v904 = vpop.f32.mrf.mxu0
        %905 = vmatprep.mubr.bf16.mxu0 0
        %906 = vmatmul.mubr.bf16.gmra.mxu0 %v634
        %v907 = vpop.f32.mrf.mxu0
        %v908 = vadd.f32 %v386, %v907
        %v909 = vpop.f32.mrf.mxu0
        %v910 = vpop.f32.mrf.mxu0
        %v911 = vadd.f32 %v386, %v910
        %v912 = vpop.f32.mrf.mxu0
        %913 = vmatprep.mubr.bf16.mxu0 0
        %914 = vmatmul.mubr.bf16.gmra.mxu0 %v637
        %v915 = vpop.f32.mrf.mxu0
        %v916 = vadd.f32 %v386, %v915
        %v917 = vpop.f32.mrf.mxu0
        %v918 = vpop.f32.mrf.mxu0
        %v919 = vadd.f32 %v386, %v918
        %v920 = vpop.f32.mrf.mxu0
        %921 = vmatprep.mubr.bf16.mxu0 0
        %922 = vmatmul.mubr.bf16.gmra.mxu0 %v640
        %v923 = vpop.f32.mrf.mxu0
        %v924 = vadd.f32 %v386, %v923
        %v925 = vpop.f32.mrf.mxu0
        %v926 = vpop.f32.mrf.mxu0
        %v927 = vadd.f32 %v386, %v926
        %v928 = vpop.f32.mrf.mxu0
        %929 = vmatprep.mubr.bf16.mxu0 0
        %930 = vmatmul.mubr.bf16.gmra.mxu0 %v643
        %v931 = vpop.f32.mrf.mxu0
        %v932 = vadd.f32 %v386, %v931
        %v933 = vpop.f32.mrf.mxu0
        %v934 = vpop.f32.mrf.mxu0
        %v935 = vadd.f32 %v386, %v934
        %v936 = vpop.f32.mrf.mxu0
        %937 = vdwg.mxu0
        %v938 = vmax.f32 %v684, 0.0
        %v939 = vmax.f32 %v687, 0.0
        %v940 = vmax.f32 %v692, 0.0
        %v941 = vmax.f32 %v695, 0.0
        %v942 = vmax.f32 %v700, 0.0
        %v943 = vmax.f32 %v703, 0.0
        %v944 = vmax.f32 %v708, 0.0
        %v945 = vmax.f32 %v711, 0.0
        %v946 = vmax.f32 %v716, 0.0
        %v947 = vmax.f32 %v719, 0.0
        %v948 = vmax.f32 %v724, 0.0
        %v949 = vmax.f32 %v727, 0.0
        %v950 = vmax.f32 %v732, 0.0
        %v951 = vmax.f32 %v735, 0.0
        %v952 = vmax.f32 %v740, 0.0
        %v953 = vmax.f32 %v743, 0.0
        %v954 = vmax.f32 %v748, 0.0
        %v955 = vmax.f32 %v751, 0.0
        %v956 = vmax.f32 %v756, 0.0
        %v957 = vmax.f32 %v759, 0.0
        %v958 = vmax.f32 %v764, 0.0
        %v959 = vmax.f32 %v767, 0.0
        %v960 = vmax.f32 %v772, 0.0
        %v961 = vmax.f32 %v775, 0.0
        %v962 = vmax.f32 %v780, 0.0
        %v963 = vmax.f32 %v783, 0.0
        %v964 = vmax.f32 %v788, 0.0
        %v965 = vmax.f32 %v791, 0.0
        %v966 = vmax.f32 %v796, 0.0
        %v967 = vmax.f32 %v799, 0.0
        %v968 = vmax.f32 %v804, 0.0
        %v969 = vmax.f32 %v807, 0.0
        %v970 = vmax.f32 %v812, 0.0
        %v971 = vmax.f32 %v815, 0.0
        %v972 = vmax.f32 %v820, 0.0
        %v973 = vmax.f32 %v823, 0.0
        %v974 = vmax.f32 %v828, 0.0
        %v975 = vmax.f32 %v831, 0.0
        %v976 = vmax.f32 %v836, 0.0
        %v977 = vmax.f32 %v839, 0.0
        %v978 = vmax.f32 %v844, 0.0
        %v979 = vmax.f32 %v847, 0.0
        %v980 = vmax.f32 %v852, 0.0
        %v981 = vmax.f32 %v855, 0.0
        %v982 = vmax.f32 %v860, 0.0
        %v983 = vmax.f32 %v863, 0.0
        %v984 = vmax.f32 %v868, 0.0
        %v985 = vmax.f32 %v871, 0.0
        %v986 = vmax.f32 %v876, 0.0
        %v987 = vmax.f32 %v879, 0.0
        %v988 = vmax.f32 %v884, 0.0
        %v989 = vmax.f32 %v887, 0.0
        %v990 = vmax.f32 %v892, 0.0
        %v991 = vmax.f32 %v895, 0.0
        %v992 = vmax.f32 %v900, 0.0
        %v993 = vmax.f32 %v903, 0.0
        %v994 = vmax.f32 %v908, 0.0
        %v995 = vmax.f32 %v911, 0.0
        %v996 = vmax.f32 %v916, 0.0
        %v997 = vmax.f32 %v919, 0.0
        %v998 = vmax.f32 %v924, 0.0
        %v999 = vmax.f32 %v927, 0.0
        %v1000 = vmax.f32 %v932, 0.0
        %v1001 = vmax.f32 %v935, 0.0
        %v1002 = vpack.c.bf16 %v939, %v938
        %v1003 = vpack.c.bf16 %v941, %v940
        %v1004 = vpack.c.bf16 %v943, %v942
        %v1005 = vpack.c.bf16 %v945, %v944
        %v1006 = vpack.c.bf16 %v947, %v946
        %v1007 = vpack.c.bf16 %v949, %v948
        %v1008 = vpack.c.bf16 %v951, %v950
        %v1009 = vpack.c.bf16 %v953, %v952
        %v1010 = vpack.c.bf16 %v955, %v954
        %v1011 = vpack.c.bf16 %v957, %v956
        %v1012 = vpack.c.bf16 %v959, %v958
        %v1013 = vpack.c.bf16 %v961, %v960
        %v1014 = vpack.c.bf16 %v963, %v962
        %v1015 = vpack.c.bf16 %v965, %v964
        %v1016 = vpack.c.bf16 %v967, %v966
        %v1017 = vpack.c.bf16 %v969, %v968
        %v1018 = vpack.c.bf16 %v971, %v970
        %v1019 = vpack.c.bf16 %v973, %v972
        %v1020 = vpack.c.bf16 %v975, %v974
        %v1021 = vpack.c.bf16 %v977, %v976
        %v1022 = vpack.c.bf16 %v979, %v978
        %v1023 = vpack.c.bf16 %v981, %v980
        %v1024 = vpack.c.bf16 %v983, %v982
        %v1025 = vpack.c.bf16 %v985, %v984
        %v1026 = vpack.c.bf16 %v987, %v986
        %v1027 = vpack.c.bf16 %v989, %v988
        %v1028 = vpack.c.bf16 %v991, %v990
        %v1029 = vpack.c.bf16 %v993, %v992
        %v1030 = vpack.c.bf16 %v995, %v994
        %v1031 = vpack.c.bf16 %v997, %v996
        %v1032 = vpack.c.bf16 %v999, %v998
        %v1033 = vpack.c.bf16 %v1001, %v1000
        %v1034 = vld [vmem:[%s3] sm:$0xf]
        %v1035 = vld [vmem:[%s3 + $0x4] sm:$0xf]
        %v1036 = vld [vmem:[%s3 + $0x8] sm:$0xf]
        %v1037 = vld [vmem:[%s3 + $0xc] sm:$0xf]
        %v1038 = vld [vmem:[%s3 + $0x10] sm:$0xf]
        %v1039 = vld [vmem:[%s3 + $0x14] sm:$0xf]
        %v1040 = vld [vmem:[%s3 + $0x18] sm:$0xf]
        %v1041 = vld [vmem:[%s3 + $0x1c] sm:$0xf]
        %v1042 = vld [vmem:[%s4] sm:$0x1]
        %v1044 = vlaneseq
        %v1045 = vshrl.u32 %v1044, 7
        %v1046 = vsub.s32 0, %v1045
        %v1047 = vrot.slane %v1042, %v1046
        %v1057 = vunpack.c.l.b16 %v1034
        %v1058 = vunpack.c.l.b16 %v1035
        %v1059 = vunpack.c.l.b16 %v1036
        %v1060 = vunpack.c.l.b16 %v1037
        %v1061 = vunpack.c.l.b16 %v1038
        %v1062 = vunpack.c.l.b16 %v1039
        %v1063 = vunpack.c.l.b16 %v1040
        %v1064 = vunpack.c.l.b16 %v1041
        %v1065 = vpack.c.b16 %v1058, %v1057
        %v1066 = vpack.c.b16 %v1060, %v1059
        %v1067 = vpack.c.b16 %v1062, %v1061
        %v1068 = vpack.c.b16 %v1064, %v1063
        %vm1073 = vcmask 523264
        %v1075 = vsel %vm1073, %v1002, 0
        %v1078 = vsel %vm1073, %v1003, 0
        %v1081 = vsel %vm1073, %v1004, 0
        %v1084 = vsel %vm1073, %v1005, 0
        %v1087 = vsel %vm1073, %v1006, 0
        %v1090 = vsel %vm1073, %v1007, 0
        %v1093 = vsel %vm1073, %v1008, 0
        %v1096 = vsel %vm1073, %v1009, 0
        %v1099 = vsel %vm1073, %v1010, 0
        %v1102 = vsel %vm1073, %v1011, 0
        %v1105 = vsel %vm1073, %v1012, 0
        %v1108 = vsel %vm1073, %v1013, 0
        %v1111 = vsel %vm1073, %v1014, 0
        %v1114 = vsel %vm1073, %v1015, 0
        %v1117 = vsel %vm1073, %v1016, 0
        %v1120 = vsel %vm1073, %v1017, 0
        %v1123 = vsel %vm1073, %v1018, 0
        %v1126 = vsel %vm1073, %v1019, 0
        %v1129 = vsel %vm1073, %v1020, 0
        %v1132 = vsel %vm1073, %v1021, 0
        %v1135 = vsel %vm1073, %v1022, 0
        %v1138 = vsel %vm1073, %v1023, 0
        %v1141 = vsel %vm1073, %v1024, 0
        %v1144 = vsel %vm1073, %v1025, 0
        %v1147 = vsel %vm1073, %v1026, 0
        %v1150 = vsel %vm1073, %v1027, 0
        %v1153 = vsel %vm1073, %v1028, 0
        %v1156 = vsel %vm1073, %v1029, 0
        %v1159 = vsel %vm1073, %v1030, 0
        %v1162 = vsel %vm1073, %v1031, 0
        %v1165 = vsel %vm1073, %v1032, 0
        %v1168 = vsel %vm1073, %v1033, 0
        %1170 = vmatprep.subr.bf16.mxu0 0
        %1171 = vmatpush1.bf16.msra.mxu0 0
        %1172 = vmatprep.subr.bf16.mxu0 0
        %1173 = vmatpush1.bf16.msra.mxu0 0
        %1174 = vmatprep.subr.bf16.mxu0 0
        %1175 = vmatpush1.bf16.msra.mxu0 0
        %1176 = vmatprep.subr.bf16.mxu0 0
        %1177 = vmatpush1.bf16.msra.mxu0 0
        %1178 = vmatprep.subr.bf16.mxu0 0
        %1179 = vmatpush1.bf16.msra.mxu0 %v1068
        %1180 = vmatprep.subr.bf16.mxu0 0
        %1181 = vmatpush1.bf16.msra.mxu0 %v1067
        %1182 = vmatprep.subr.bf16.mxu0 0
        %1183 = vmatpush1.bf16.msra.mxu0 %v1066
        %1184 = vmatprep.subr.bf16.mxu0 0
        %1185 = vmatpush1.bf16.msra.mxu0 %v1065
        %1186 = vmatprep.subr.bf16.mxu0 0
        %1187 = vmatpush2.bf16.msra.mxu0 0
        %1188 = vmatprep.subr.bf16.mxu0 0
        %1189 = vmatpush2.bf16.msra.mxu0 0
        %1190 = vmatprep.subr.bf16.mxu0 0
        %1191 = vmatpush2.bf16.msra.mxu0 0
        %1192 = vmatprep.subr.bf16.mxu0 0
        %1193 = vmatpush2.bf16.msra.mxu0 0
        %1194 = vmatprep.subr.bf16.mxu0 0
        %1195 = vmatpush2.bf16.msra.mxu0 0
        %1196 = vmatprep.subr.bf16.mxu0 0
        %1197 = vmatpush2.bf16.msra.mxu0 0
        %1198 = vmatprep.subr.bf16.mxu0 0
        %1199 = vmatpush2.bf16.msra.mxu0 0
        %1200 = vmatprep.subr.bf16.mxu0 0
        %1201 = vmatpush2.bf16.msra.mxu0 0
        %1202 = vmatprep.mubr.bf16.mxu0 0
        %1203 = vmatmul.mubr.bf16.gmra.mxu0 %v1075
        %v1204 = vpop.f32.mrf.mxu0
        %v1205 = vadd.f32 %v1047, %v1204
        %v1206 = vpop.f32.mrf.mxu0
        %v1207 = vpop.f32.mrf.mxu0
        %v1208 = vadd.f32 %v1047, %v1207
        %v1209 = vpop.f32.mrf.mxu0
        %1210 = vmatprep.mubr.bf16.mxu0 0
        %1211 = vmatmul.mubr.bf16.gmra.mxu0 %v1078
        %v1212 = vpop.f32.mrf.mxu0
        %v1213 = vadd.f32 %v1047, %v1212
        %v1214 = vpop.f32.mrf.mxu0
        %v1215 = vpop.f32.mrf.mxu0
        %v1216 = vadd.f32 %v1047, %v1215
        %v1217 = vpop.f32.mrf.mxu0
        %1218 = vmatprep.mubr.bf16.mxu0 0
        %1219 = vmatmul.mubr.bf16.gmra.mxu0 %v1081
        %v1220 = vpop.f32.mrf.mxu0
        %v1221 = vadd.f32 %v1047, %v1220
        %v1222 = vpop.f32.mrf.mxu0
        %v1223 = vpop.f32.mrf.mxu0
        %v1224 = vadd.f32 %v1047, %v1223
        %v1225 = vpop.f32.mrf.mxu0
        %1226 = vmatprep.mubr.bf16.mxu0 0
        %1227 = vmatmul.mubr.bf16.gmra.mxu0 %v1084
        %v1228 = vpop.f32.mrf.mxu0
        %v1229 = vadd.f32 %v1047, %v1228
        %v1230 = vpop.f32.mrf.mxu0
        %v1231 = vpop.f32.mrf.mxu0
        %v1232 = vadd.f32 %v1047, %v1231
        %v1233 = vpop.f32.mrf.mxu0
        %1234 = vmatprep.mubr.bf16.mxu0 0
        %1235 = vmatmul.mubr.bf16.gmra.mxu0 %v1087
        %v1236 = vpop.f32.mrf.mxu0
        %v1237 = vadd.f32 %v1047, %v1236
        %v1238 = vpop.f32.mrf.mxu0
        %v1239 = vpop.f32.mrf.mxu0
        %v1240 = vadd.f32 %v1047, %v1239
        %v1241 = vpop.f32.mrf.mxu0
        %1242 = vmatprep.mubr.bf16.mxu0 0
        %1243 = vmatmul.mubr.bf16.gmra.mxu0 %v1090
        %v1244 = vpop.f32.mrf.mxu0
        %v1245 = vadd.f32 %v1047, %v1244
        %v1246 = vpop.f32.mrf.mxu0
        %v1247 = vpop.f32.mrf.mxu0
        %v1248 = vadd.f32 %v1047, %v1247
        %v1249 = vpop.f32.mrf.mxu0
        %1250 = vmatprep.mubr.bf16.mxu0 0
        %1251 = vmatmul.mubr.bf16.gmra.mxu0 %v1093
        %v1252 = vpop.f32.mrf.mxu0
        %v1253 = vadd.f32 %v1047, %v1252
        %v1254 = vpop.f32.mrf.mxu0
        %v1255 = vpop.f32.mrf.mxu0
        %v1256 = vadd.f32 %v1047, %v1255
        %v1257 = vpop.f32.mrf.mxu0
        %1258 = vmatprep.mubr.bf16.mxu0 0
        %1259 = vmatmul.mubr.bf16.gmra.mxu0 %v1096
        %v1260 = vpop.f32.mrf.mxu0
        %v1261 = vadd.f32 %v1047, %v1260
        %v1262 = vpop.f32.mrf.mxu0
        %v1263 = vpop.f32.mrf.mxu0
        %v1264 = vadd.f32 %v1047, %v1263
        %v1265 = vpop.f32.mrf.mxu0
        %1266 = vmatprep.mubr.bf16.mxu0 0
        %1267 = vmatmul.mubr.bf16.gmra.mxu0 %v1099
        %v1268 = vpop.f32.mrf.mxu0
        %v1269 = vadd.f32 %v1047, %v1268
        %v1270 = vpop.f32.mrf.mxu0
        %v1271 = vpop.f32.mrf.mxu0
        %v1272 = vadd.f32 %v1047, %v1271
        %v1273 = vpop.f32.mrf.mxu0
        %1274 = vmatprep.mubr.bf16.mxu0 0
        %1275 = vmatmul.mubr.bf16.gmra.mxu0 %v1102
        %v1276 = vpop.f32.mrf.mxu0
        %v1277 = vadd.f32 %v1047, %v1276
        %v1278 = vpop.f32.mrf.mxu0
        %v1279 = vpop.f32.mrf.mxu0
        %v1280 = vadd.f32 %v1047, %v1279
        %v1281 = vpop.f32.mrf.mxu0
        %1282 = vmatprep.mubr.bf16.mxu0 0
        %1283 = vmatmul.mubr.bf16.gmra.mxu0 %v1105
        %v1284 = vpop.f32.mrf.mxu0
        %v1285 = vadd.f32 %v1047, %v1284
        %v1286 = vpop.f32.mrf.mxu0
        %v1287 = vpop.f32.mrf.mxu0
        %v1288 = vadd.f32 %v1047, %v1287
        %v1289 = vpop.f32.mrf.mxu0
        %1290 = vmatprep.mubr.bf16.mxu0 0
        %1291 = vmatmul.mubr.bf16.gmra.mxu0 %v1108
        %v1292 = vpop.f32.mrf.mxu0
        %v1293 = vadd.f32 %v1047, %v1292
        %v1294 = vpop.f32.mrf.mxu0
        %v1295 = vpop.f32.mrf.mxu0
        %v1296 = vadd.f32 %v1047, %v1295
        %v1297 = vpop.f32.mrf.mxu0
        %1298 = vmatprep.mubr.bf16.mxu0 0
        %1299 = vmatmul.mubr.bf16.gmra.mxu0 %v1111
        %v1300 = vpop.f32.mrf.mxu0
        %v1301 = vadd.f32 %v1047, %v1300
        %v1302 = vpop.f32.mrf.mxu0
        %v1303 = vpop.f32.mrf.mxu0
        %v1304 = vadd.f32 %v1047, %v1303
        %v1305 = vpop.f32.mrf.mxu0
        %1306 = vmatprep.mubr.bf16.mxu0 0
        %1307 = vmatmul.mubr.bf16.gmra.mxu0 %v1114
        %v1308 = vpop.f32.mrf.mxu0
        %v1309 = vadd.f32 %v1047, %v1308
        %v1310 = vpop.f32.mrf.mxu0
        %v1311 = vpop.f32.mrf.mxu0
        %v1312 = vadd.f32 %v1047, %v1311
        %v1313 = vpop.f32.mrf.mxu0
        %1314 = vmatprep.mubr.bf16.mxu0 0
        %1315 = vmatmul.mubr.bf16.gmra.mxu0 %v1117
        %v1316 = vpop.f32.mrf.mxu0
        %v1317 = vadd.f32 %v1047, %v1316
        %v1318 = vpop.f32.mrf.mxu0
        %v1319 = vpop.f32.mrf.mxu0
        %v1320 = vadd.f32 %v1047, %v1319
        %v1321 = vpop.f32.mrf.mxu0
        %1322 = vmatprep.mubr.bf16.mxu0 0
        %1323 = vmatmul.mubr.bf16.gmra.mxu0 %v1120
        %v1324 = vpop.f32.mrf.mxu0
        %v1325 = vadd.f32 %v1047, %v1324
        %v1326 = vpop.f32.mrf.mxu0
        %v1327 = vpop.f32.mrf.mxu0
        %v1328 = vadd.f32 %v1047, %v1327
        %v1329 = vpop.f32.mrf.mxu0
        %1330 = vmatprep.mubr.bf16.mxu0 0
        %1331 = vmatmul.mubr.bf16.gmra.mxu0 %v1123
        %v1332 = vpop.f32.mrf.mxu0
        %v1333 = vadd.f32 %v1047, %v1332
        %v1334 = vpop.f32.mrf.mxu0
        %v1335 = vpop.f32.mrf.mxu0
        %v1336 = vadd.f32 %v1047, %v1335
        %v1337 = vpop.f32.mrf.mxu0
        %1338 = vmatprep.mubr.bf16.mxu0 0
        %1339 = vmatmul.mubr.bf16.gmra.mxu0 %v1126
        %v1340 = vpop.f32.mrf.mxu0
        %v1341 = vadd.f32 %v1047, %v1340
        %v1342 = vpop.f32.mrf.mxu0
        %v1343 = vpop.f32.mrf.mxu0
        %v1344 = vadd.f32 %v1047, %v1343
        %v1345 = vpop.f32.mrf.mxu0
        %1346 = vmatprep.mubr.bf16.mxu0 0
        %1347 = vmatmul.mubr.bf16.gmra.mxu0 %v1129
        %v1348 = vpop.f32.mrf.mxu0
        %v1349 = vadd.f32 %v1047, %v1348
        %v1350 = vpop.f32.mrf.mxu0
        %v1351 = vpop.f32.mrf.mxu0
        %v1352 = vadd.f32 %v1047, %v1351
        %v1353 = vpop.f32.mrf.mxu0
        %1354 = vmatprep.mubr.bf16.mxu0 0
        %1355 = vmatmul.mubr.bf16.gmra.mxu0 %v1132
        %v1356 = vpop.f32.mrf.mxu0
        %v1357 = vadd.f32 %v1047, %v1356
        %v1358 = vpop.f32.mrf.mxu0
        %v1359 = vpop.f32.mrf.mxu0
        %v1360 = vadd.f32 %v1047, %v1359
        %v1361 = vpop.f32.mrf.mxu0
        %1362 = vmatprep.mubr.bf16.mxu0 0
        %1363 = vmatmul.mubr.bf16.gmra.mxu0 %v1135
        %v1364 = vpop.f32.mrf.mxu0
        %v1365 = vadd.f32 %v1047, %v1364
        %v1366 = vpop.f32.mrf.mxu0
        %v1367 = vpop.f32.mrf.mxu0
        %v1368 = vadd.f32 %v1047, %v1367
        %v1369 = vpop.f32.mrf.mxu0
        %1370 = vmatprep.mubr.bf16.mxu0 0
        %1371 = vmatmul.mubr.bf16.gmra.mxu0 %v1138
        %v1372 = vpop.f32.mrf.mxu0
        %v1373 = vadd.f32 %v1047, %v1372
        %v1374 = vpop.f32.mrf.mxu0
        %v1375 = vpop.f32.mrf.mxu0
        %v1376 = vadd.f32 %v1047, %v1375
        %v1377 = vpop.f32.mrf.mxu0
        %1378 = vmatprep.mubr.bf16.mxu0 0
        %1379 = vmatmul.mubr.bf16.gmra.mxu0 %v1141
        %v1380 = vpop.f32.mrf.mxu0
        %v1381 = vadd.f32 %v1047, %v1380
        %v1382 = vpop.f32.mrf.mxu0
        %v1383 = vpop.f32.mrf.mxu0
        %v1384 = vadd.f32 %v1047, %v1383
        %v1385 = vpop.f32.mrf.mxu0
        %1386 = vmatprep.mubr.bf16.mxu0 0
        %1387 = vmatmul.mubr.bf16.gmra.mxu0 %v1144
        %v1388 = vpop.f32.mrf.mxu0
        %v1389 = vadd.f32 %v1047, %v1388
        %v1390 = vpop.f32.mrf.mxu0
        %v1391 = vpop.f32.mrf.mxu0
        %v1392 = vadd.f32 %v1047, %v1391
        %v1393 = vpop.f32.mrf.mxu0
        %1394 = vmatprep.mubr.bf16.mxu0 0
        %1395 = vmatmul.mubr.bf16.gmra.mxu0 %v1147
        %v1396 = vpop.f32.mrf.mxu0
        %v1397 = vadd.f32 %v1047, %v1396
        %v1398 = vpop.f32.mrf.mxu0
        %v1399 = vpop.f32.mrf.mxu0
        %v1400 = vadd.f32 %v1047, %v1399
        %v1401 = vpop.f32.mrf.mxu0
        %1402 = vmatprep.mubr.bf16.mxu0 0
        %1403 = vmatmul.mubr.bf16.gmra.mxu0 %v1150
        %v1404 = vpop.f32.mrf.mxu0
        %v1405 = vadd.f32 %v1047, %v1404
        %v1406 = vpop.f32.mrf.mxu0
        %v1407 = vpop.f32.mrf.mxu0
        %v1408 = vadd.f32 %v1047, %v1407
        %v1409 = vpop.f32.mrf.mxu0
        %1410 = vmatprep.mubr.bf16.mxu0 0
        %1411 = vmatmul.mubr.bf16.gmra.mxu0 %v1153
        %v1412 = vpop.f32.mrf.mxu0
        %v1413 = vadd.f32 %v1047, %v1412
        %v1414 = vpop.f32.mrf.mxu0
        %v1415 = vpop.f32.mrf.mxu0
        %v1416 = vadd.f32 %v1047, %v1415
        %v1417 = vpop.f32.mrf.mxu0
        %1418 = vmatprep.mubr.bf16.mxu0 0
        %1419 = vmatmul.mubr.bf16.gmra.mxu0 %v1156
        %v1420 = vpop.f32.mrf.mxu0
        %v1421 = vadd.f32 %v1047, %v1420
        %v1422 = vpop.f32.mrf.mxu0
        %v1423 = vpop.f32.mrf.mxu0
        %v1424 = vadd.f32 %v1047, %v1423
        %v1425 = vpop.f32.mrf.mxu0
        %1426 = vmatprep.mubr.bf16.mxu0 0
        %1427 = vmatmul.mubr.bf16.gmra.mxu0 %v1159
        %v1428 = vpop.f32.mrf.mxu0
        %v1429 = vadd.f32 %v1047, %v1428
        %v1430 = vpop.f32.mrf.mxu0
        %v1431 = vpop.f32.mrf.mxu0
        %v1432 = vadd.f32 %v1047, %v1431
        %v1433 = vpop.f32.mrf.mxu0
        %1434 = vmatprep.mubr.bf16.mxu0 0
        %1435 = vmatmul.mubr.bf16.gmra.mxu0 %v1162
        %v1436 = vpop.f32.mrf.mxu0
        %v1437 = vadd.f32 %v1047, %v1436
        %v1438 = vpop.f32.mrf.mxu0
        %v1439 = vpop.f32.mrf.mxu0
        %v1440 = vadd.f32 %v1047, %v1439
        %v1441 = vpop.f32.mrf.mxu0
        %1442 = vmatprep.mubr.bf16.mxu0 0
        %1443 = vmatmul.mubr.bf16.gmra.mxu0 %v1165
        %v1444 = vpop.f32.mrf.mxu0
        %v1445 = vadd.f32 %v1047, %v1444
        %v1446 = vpop.f32.mrf.mxu0
        %v1447 = vpop.f32.mrf.mxu0
        %v1448 = vadd.f32 %v1047, %v1447
        %v1449 = vpop.f32.mrf.mxu0
        %1450 = vmatprep.mubr.bf16.mxu0 0
        %1451 = vmatmul.mubr.bf16.gmra.mxu0 %v1168
        %v1452 = vpop.f32.mrf.mxu0
        %v1453 = vadd.f32 %v1047, %v1452
        %v1454 = vpop.f32.mrf.mxu0
        %v1455 = vpop.f32.mrf.mxu0
        %v1456 = vadd.f32 %v1047, %v1455
        %v1457 = vpop.f32.mrf.mxu0
        %1458 = vdwg.mxu0
        %v1459 = vmax.f32 %v1205, 0.0
        %v1460 = vmax.f32 %v1208, 0.0
        %v1461 = vmax.f32 %v1213, 0.0
        %v1462 = vmax.f32 %v1216, 0.0
        %v1463 = vmax.f32 %v1221, 0.0
        %v1464 = vmax.f32 %v1224, 0.0
        %v1465 = vmax.f32 %v1229, 0.0
        %v1466 = vmax.f32 %v1232, 0.0
        %v1467 = vmax.f32 %v1237, 0.0
        %v1468 = vmax.f32 %v1240, 0.0
        %v1469 = vmax.f32 %v1245, 0.0
        %v1470 = vmax.f32 %v1248, 0.0
        %v1471 = vmax.f32 %v1253, 0.0
        %v1472 = vmax.f32 %v1256, 0.0
        %v1473 = vmax.f32 %v1261, 0.0
        %v1474 = vmax.f32 %v1264, 0.0
        %v1475 = vmax.f32 %v1269, 0.0
        %v1476 = vmax.f32 %v1272, 0.0
        %v1477 = vmax.f32 %v1277, 0.0
        %v1478 = vmax.f32 %v1280, 0.0
        %v1479 = vmax.f32 %v1285, 0.0
        %v1480 = vmax.f32 %v1288, 0.0
        %v1481 = vmax.f32 %v1293, 0.0
        %v1482 = vmax.f32 %v1296, 0.0
        %v1483 = vmax.f32 %v1301, 0.0
        %v1484 = vmax.f32 %v1304, 0.0
        %v1485 = vmax.f32 %v1309, 0.0
        %v1486 = vmax.f32 %v1312, 0.0
        %v1487 = vmax.f32 %v1317, 0.0
        %v1488 = vmax.f32 %v1320, 0.0
        %v1489 = vmax.f32 %v1325, 0.0
        %v1490 = vmax.f32 %v1328, 0.0
        %v1491 = vmax.f32 %v1333, 0.0
        %v1492 = vmax.f32 %v1336, 0.0
        %v1493 = vmax.f32 %v1341, 0.0
        %v1494 = vmax.f32 %v1344, 0.0
        %v1495 = vmax.f32 %v1349, 0.0
        %v1496 = vmax.f32 %v1352, 0.0
        %v1497 = vmax.f32 %v1357, 0.0
        %v1498 = vmax.f32 %v1360, 0.0
        %v1499 = vmax.f32 %v1365, 0.0
        %v1500 = vmax.f32 %v1368, 0.0
        %v1501 = vmax.f32 %v1373, 0.0
        %v1502 = vmax.f32 %v1376, 0.0
        %v1503 = vmax.f32 %v1381, 0.0
        %v1504 = vmax.f32 %v1384, 0.0
        %v1505 = vmax.f32 %v1389, 0.0
        %v1506 = vmax.f32 %v1392, 0.0
        %v1507 = vmax.f32 %v1397, 0.0
        %v1508 = vmax.f32 %v1400, 0.0
        %v1509 = vmax.f32 %v1405, 0.0
        %v1510 = vmax.f32 %v1408, 0.0
        %v1511 = vmax.f32 %v1413, 0.0
        %v1512 = vmax.f32 %v1416, 0.0
        %v1513 = vmax.f32 %v1421, 0.0
        %v1514 = vmax.f32 %v1424, 0.0
        %v1515 = vmax.f32 %v1429, 0.0
        %v1516 = vmax.f32 %v1432, 0.0
        %v1517 = vmax.f32 %v1437, 0.0
        %v1518 = vmax.f32 %v1440, 0.0
        %v1519 = vmax.f32 %v1445, 0.0
        %v1520 = vmax.f32 %v1448, 0.0
        %v1521 = vmax.f32 %v1453, 0.0
        %v1522 = vmax.f32 %v1456, 0.0
        %v1523 = vpack.c.bf16 %v1460, %v1459
        %v1524 = vpack.c.bf16 %v1462, %v1461
        %v1525 = vpack.c.bf16 %v1464, %v1463
        %v1526 = vpack.c.bf16 %v1466, %v1465
        %v1527 = vpack.c.bf16 %v1468, %v1467
        %v1528 = vpack.c.bf16 %v1470, %v1469
        %v1529 = vpack.c.bf16 %v1472, %v1471
        %v1530 = vpack.c.bf16 %v1474, %v1473
        %v1531 = vpack.c.bf16 %v1476, %v1475
        %v1532 = vpack.c.bf16 %v1478, %v1477
        %v1533 = vpack.c.bf16 %v1480, %v1479
        %v1534 = vpack.c.bf16 %v1482, %v1481
        %v1535 = vpack.c.bf16 %v1484, %v1483
        %v1536 = vpack.c.bf16 %v1486, %v1485
        %v1537 = vpack.c.bf16 %v1488, %v1487
        %v1538 = vpack.c.bf16 %v1490, %v1489
        %v1539 = vpack.c.bf16 %v1492, %v1491
        %v1540 = vpack.c.bf16 %v1494, %v1493
        %v1541 = vpack.c.bf16 %v1496, %v1495
        %v1542 = vpack.c.bf16 %v1498, %v1497
        %v1543 = vpack.c.bf16 %v1500, %v1499
        %v1544 = vpack.c.bf16 %v1502, %v1501
        %v1545 = vpack.c.bf16 %v1504, %v1503
        %v1546 = vpack.c.bf16 %v1506, %v1505
        %v1547 = vpack.c.bf16 %v1508, %v1507
        %v1548 = vpack.c.bf16 %v1510, %v1509
        %v1549 = vpack.c.bf16 %v1512, %v1511
        %v1550 = vpack.c.bf16 %v1514, %v1513
        %v1551 = vpack.c.bf16 %v1516, %v1515
        %v1552 = vpack.c.bf16 %v1518, %v1517
        %v1553 = vpack.c.bf16 %v1520, %v1519
        %v1554 = vpack.c.bf16 %v1522, %v1521
        %v1555 = vld [vmem:[%s307] sm:$0xff]
        %v1556 = vld [vmem:[%s307 + $0x8] sm:$0xff]
        %v1557 = vld [vmem:[%s307 + $0x10] sm:$0xff]
        %v1558 = vld [vmem:[%s307 + $0x18] sm:$0xff]
        %v1559 = vld [vmem:[%s307 + $0x20] sm:$0xff]
        %v1560 = vld [vmem:[%s307 + $0x28] sm:$0xff]
        %v1561 = vld [vmem:[%s307 + $0x30] sm:$0xff]
        %v1562 = vld [vmem:[%s307 + $0x38] sm:$0xff]
        %v1563 = vld [vmem:[%s307 + $0x40] sm:$0xff]
        %v1564 = vld [vmem:[%s307 + $0x48] sm:$0xff]
        %v1565 = vld [vmem:[%s307 + $0x50] sm:$0xff]
        %v1566 = vld [vmem:[%s307 + $0x58] sm:$0xff]
        %v1567 = vld [vmem:[%s307 + $0x60] sm:$0xff]
        %v1568 = vld [vmem:[%s307 + $0x68] sm:$0xff]
        %v1569 = vld [vmem:[%s307 + $0x70] sm:$0xff]
        %v1570 = vld [vmem:[%s307 + $0x78] sm:$0xff]
        %v1571 = vld [vmem:[%s307 + $0x80] sm:$0xff]
        %v1572 = vld [vmem:[%s307 + $0x88] sm:$0xff]
        %v1573 = vld [vmem:[%s307 + $0x90] sm:$0xff]
        %v1574 = vld [vmem:[%s307 + $0x98] sm:$0xff]
        %v1575 = vld [vmem:[%s307 + $0xa0] sm:$0xff]
        %v1576 = vld [vmem:[%s307 + $0xa8] sm:$0xff]
        %v1577 = vld [vmem:[%s307 + $0xb0] sm:$0xff]
        %v1578 = vld [vmem:[%s307 + $0xb8] sm:$0xff]
        %v1579 = vld [vmem:[%s307 + $0xc0] sm:$0xff]
        %v1580 = vld [vmem:[%s307 + $0xc8] sm:$0xff]
        %v1581 = vld [vmem:[%s307 + $0xd0] sm:$0xff]
        %v1582 = vld [vmem:[%s307 + $0xd8] sm:$0xff]
        %v1583 = vld [vmem:[%s307 + $0xe0] sm:$0xff]
        %v1584 = vld [vmem:[%s307 + $0xe8] sm:$0xff]
        %v1585 = vld [vmem:[%s307 + $0xf0] sm:$0xff]
        %v1586 = vld [vmem:[%s307 + $0xf8] sm:$0xff]
        %v1587 = vld [vmem:[%s307 + $0x100] sm:$0xff]
        %v1588 = vld [vmem:[%s307 + $0x108] sm:$0xff]
        %v1589 = vld [vmem:[%s307 + $0x110] sm:$0xff]
        %v1590 = vld [vmem:[%s307 + $0x118] sm:$0xff]
        %v1591 = vld [vmem:[%s307 + $0x120] sm:$0xff]
        %v1592 = vld [vmem:[%s307 + $0x128] sm:$0xff]
        %v1593 = vld [vmem:[%s307 + $0x130] sm:$0xff]
        %v1594 = vld [vmem:[%s307 + $0x138] sm:$0xff]
        %v1595 = vld [vmem:[%s307 + $0x140] sm:$0xff]
        %v1596 = vld [vmem:[%s307 + $0x148] sm:$0xff]
        %v1597 = vld [vmem:[%s307 + $0x150] sm:$0xff]
        %v1598 = vld [vmem:[%s307 + $0x158] sm:$0xff]
        %v1599 = vld [vmem:[%s307 + $0x160] sm:$0xff]
        %v1600 = vld [vmem:[%s307 + $0x168] sm:$0xff]
        %v1601 = vld [vmem:[%s307 + $0x170] sm:$0xff]
        %v1602 = vld [vmem:[%s307 + $0x178] sm:$0xff]
        %v1603 = vld [vmem:[%s307 + $0x180] sm:$0xff]
        %v1604 = vld [vmem:[%s307 + $0x188] sm:$0xff]
        %v1605 = vld [vmem:[%s307 + $0x190] sm:$0xff]
        %v1606 = vld [vmem:[%s307 + $0x198] sm:$0xff]
        %v1607 = vld [vmem:[%s307 + $0x1a0] sm:$0xff]
        %v1608 = vld [vmem:[%s307 + $0x1a8] sm:$0xff]
        %v1609 = vld [vmem:[%s307 + $0x1b0] sm:$0xff]
        %v1610 = vld [vmem:[%s307 + $0x1b8] sm:$0xff]
        %v1611 = vld [vmem:[%s307 + $0x1c0] sm:$0xff]
        %v1612 = vld [vmem:[%s307 + $0x1c8] sm:$0xff]
        %v1613 = vld [vmem:[%s307 + $0x1d0] sm:$0xff]
        %v1614 = vld [vmem:[%s307 + $0x1d8] sm:$0xff]
        %v1615 = vld [vmem:[%s307 + $0x1e0] sm:$0xff]
        %v1616 = vld [vmem:[%s307 + $0x1e8] sm:$0xff]
        %v1617 = vld [vmem:[%s307 + $0x1f0] sm:$0xff]
        %v1618 = vld [vmem:[%s307 + $0x1f8] sm:$0xff]
        %v1683 = vunpack.c.l.b16 %v1555
        %v1684 = vunpack.c.h.b16 %v1555
        %v1685 = vunpack.c.l.b16 %v1556
        %v1686 = vunpack.c.h.b16 %v1556
        %v1687 = vunpack.c.l.b16 %v1557
        %v1688 = vunpack.c.h.b16 %v1557
        %v1689 = vunpack.c.l.b16 %v1558
        %v1690 = vunpack.c.h.b16 %v1558
        %v1691 = vunpack.c.l.b16 %v1559
        %v1692 = vunpack.c.h.b16 %v1559
        %v1693 = vunpack.c.l.b16 %v1560
        %v1694 = vunpack.c.h.b16 %v1560
        %v1695 = vunpack.c.l.b16 %v1561
        %v1696 = vunpack.c.h.b16 %v1561
        %v1697 = vunpack.c.l.b16 %v1562
        %v1698 = vunpack.c.h.b16 %v1562
        %v1699 = vunpack.c.l.b16 %v1563
        %v1700 = vunpack.c.h.b16 %v1563
        %v1701 = vunpack.c.l.b16 %v1564
        %v1702 = vunpack.c.h.b16 %v1564
        %v1703 = vunpack.c.l.b16 %v1565
        %v1704 = vunpack.c.h.b16 %v1565
        %v1705 = vunpack.c.l.b16 %v1566
        %v1706 = vunpack.c.h.b16 %v1566
        %v1707 = vunpack.c.l.b16 %v1567
        %v1708 = vunpack.c.h.b16 %v1567
        %v1709 = vunpack.c.l.b16 %v1568
        %v1710 = vunpack.c.h.b16 %v1568
        %v1711 = vunpack.c.l.b16 %v1569
        %v1712 = vunpack.c.h.b16 %v1569
        %v1713 = vunpack.c.l.b16 %v1570
        %v1714 = vunpack.c.h.b16 %v1570
        %v1715 = vunpack.c.l.b16 %v1571
        %v1716 = vunpack.c.h.b16 %v1571
        %v1717 = vunpack.c.l.b16 %v1572
        %v1718 = vunpack.c.h.b16 %v1572
        %v1719 = vunpack.c.l.b16 %v1573
        %v1720 = vunpack.c.h.b16 %v1573
        %v1721 = vunpack.c.l.b16 %v1574
        %v1722 = vunpack.c.h.b16 %v1574
        %v1723 = vunpack.c.l.b16 %v1575
        %v1724 = vunpack.c.h.b16 %v1575
        %v1725 = vunpack.c.l.b16 %v1576
        %v1726 = vunpack.c.h.b16 %v1576
        %v1727 = vunpack.c.l.b16 %v1577
        %v1728 = vunpack.c.h.b16 %v1577
        %v1729 = vunpack.c.l.b16 %v1578
        %v1730 = vunpack.c.h.b16 %v1578
        %v1731 = vunpack.c.l.b16 %v1579
        %v1732 = vunpack.c.h.b16 %v1579
        %v1733 = vunpack.c.l.b16 %v1580
        %v1734 = vunpack.c.h.b16 %v1580
        %v1735 = vunpack.c.l.b16 %v1581
        %v1736 = vunpack.c.h.b16 %v1581
        %v1737 = vunpack.c.l.b16 %v1582
        %v1738 = vunpack.c.h.b16 %v1582
        %v1739 = vunpack.c.l.b16 %v1583
        %v1740 = vunpack.c.h.b16 %v1583
        %v1741 = vunpack.c.l.b16 %v1584
        %v1742 = vunpack.c.h.b16 %v1584
        %v1743 = vunpack.c.l.b16 %v1585
        %v1744 = vunpack.c.h.b16 %v1585
        %v1745 = vunpack.c.l.b16 %v1586
        %v1746 = vunpack.c.h.b16 %v1586
        %v1747 = vunpack.c.l.b16 %v1587
        %v1748 = vunpack.c.h.b16 %v1587
        %v1749 = vunpack.c.l.b16 %v1588
        %v1750 = vunpack.c.h.b16 %v1588
        %v1751 = vunpack.c.l.b16 %v1589
        %v1752 = vunpack.c.h.b16 %v1589
        %v1753 = vunpack.c.l.b16 %v1590
        %v1754 = vunpack.c.h.b16 %v1590
        %v1755 = vunpack.c.l.b16 %v1591
        %v1756 = vunpack.c.h.b16 %v1591
        %v1757 = vunpack.c.l.b16 %v1592
        %v1758 = vunpack.c.h.b16 %v1592
        %v1759 = vunpack.c.l.b16 %v1593
        %v1760 = vunpack.c.h.b16 %v1593
        %v1761 = vunpack.c.l.b16 %v1594
        %v1762 = vunpack.c.h.b16 %v1594
        %v1763 = vunpack.c.l.b16 %v1595
        %v1764 = vunpack.c.h.b16 %v1595
        %v1765 = vunpack.c.l.b16 %v1596
        %v1766 = vunpack.c.h.b16 %v1596
        %v1767 = vunpack.c.l.b16 %v1597
        %v1768 = vunpack.c.h.b16 %v1597
        %v1769 = vunpack.c.l.b16 %v1598
        %v1770 = vunpack.c.h.b16 %v1598
        %v1771 = vunpack.c.l.b16 %v1599
        %v1772 = vunpack.c.h.b16 %v1599
        %v1773 = vunpack.c.l.b16 %v1600
        %v1774 = vunpack.c.h.b16 %v1600
        %v1775 = vunpack.c.l.b16 %v1601
        %v1776 = vunpack.c.h.b16 %v1601
        %v1777 = vunpack.c.l.b16 %v1602
        %v1778 = vunpack.c.h.b16 %v1602
        %v1779 = vunpack.c.l.b16 %v1603
        %v1780 = vunpack.c.h.b16 %v1603
        %v1781 = vunpack.c.l.b16 %v1604
        %v1782 = vunpack.c.h.b16 %v1604
        %v1783 = vunpack.c.l.b16 %v1605
        %v1784 = vunpack.c.h.b16 %v1605
        %v1785 = vunpack.c.l.b16 %v1606
        %v1786 = vunpack.c.h.b16 %v1606
        %v1787 = vunpack.c.l.b16 %v1607
        %v1788 = vunpack.c.h.b16 %v1607
        %v1789 = vunpack.c.l.b16 %v1608
        %v1790 = vunpack.c.h.b16 %v1608
        %v1791 = vunpack.c.l.b16 %v1609
        %v1792 = vunpack.c.h.b16 %v1609
        %v1793 = vunpack.c.l.b16 %v1610
        %v1794 = vunpack.c.h.b16 %v1610
        %v1795 = vunpack.c.l.b16 %v1611
        %v1796 = vunpack.c.h.b16 %v1611
        %v1797 = vunpack.c.l.b16 %v1612
        %v1798 = vunpack.c.h.b16 %v1612
        %v1799 = vunpack.c.l.b16 %v1613
        %v1800 = vunpack.c.h.b16 %v1613
        %v1801 = vunpack.c.l.b16 %v1614
        %v1802 = vunpack.c.h.b16 %v1614
        %v1803 = vunpack.c.l.b16 %v1615
        %v1804 = vunpack.c.h.b16 %v1615
        %v1805 = vunpack.c.l.b16 %v1616
        %v1806 = vunpack.c.h.b16 %v1616
        %v1807 = vunpack.c.l.b16 %v1617
        %v1808 = vunpack.c.h.b16 %v1617
        %v1809 = vunpack.c.l.b16 %v1618
        %v1810 = vunpack.c.h.b16 %v1618
        %v1811 = vpack.c.b16 %v1691, %v1683
        %v1812 = vpack.c.b16 %v1692, %v1684
        %v1813 = vpack.c.b16 %v1693, %v1685
        %v1814 = vpack.c.b16 %v1694, %v1686
        %v1815 = vpack.c.b16 %v1695, %v1687
        %v1816 = vpack.c.b16 %v1696, %v1688
        %v1817 = vpack.c.b16 %v1697, %v1689
        %v1818 = vpack.c.b16 %v1698, %v1690
        %v1819 = vpack.c.b16 %v1707, %v1699
        %v1820 = vpack.c.b16 %v1708, %v1700
        %v1821 = vpack.c.b16 %v1709, %v1701
        %v1822 = vpack.c.b16 %v1710, %v1702
        %v1823 = vpack.c.b16 %v1711, %v1703
        %v1824 = vpack.c.b16 %v1712, %v1704
        %v1825 = vpack.c.b16 %v1713, %v1705
        %v1826 = vpack.c.b16 %v1714, %v1706
        %v1827 = vpack.c.b16 %v1723, %v1715
        %v1828 = vpack.c.b16 %v1724, %v1716
        %v1829 = vpack.c.b16 %v1725, %v1717
        %v1830 = vpack.c.b16 %v1726, %v1718
        %v1831 = vpack.c.b16 %v1727, %v1719
        %v1832 = vpack.c.b16 %v1728, %v1720
        %v1833 = vpack.c.b16 %v1729, %v1721
        %v1834 = vpack.c.b16 %v1730, %v1722
        %v1835 = vpack.c.b16 %v1739, %v1731
        %v1836 = vpack.c.b16 %v1740, %v1732
        %v1837 = vpack.c.b16 %v1741, %v1733
        %v1838 = vpack.c.b16 %v1742, %v1734
        %v1839 = vpack.c.b16 %v1743, %v1735
        %v1840 = vpack.c.b16 %v1744, %v1736
        %v1841 = vpack.c.b16 %v1745, %v1737
        %v1842 = vpack.c.b16 %v1746, %v1738
        %v1843 = vpack.c.b16 %v1755, %v1747
        %v1844 = vpack.c.b16 %v1756, %v1748
        %v1845 = vpack.c.b16 %v1757, %v1749
        %v1846 = vpack.c.b16 %v1758, %v1750
        %v1847 = vpack.c.b16 %v1759, %v1751
        %v1848 = vpack.c.b16 %v1760, %v1752
        %v1849 = vpack.c.b16 %v1761, %v1753
        %v1850 = vpack.c.b16 %v1762, %v1754
        %v1851 = vpack.c.b16 %v1771, %v1763
        %v1852 = vpack.c.b16 %v1772, %v1764
        %v1853 = vpack.c.b16 %v1773, %v1765
        %v1854 = vpack.c.b16 %v1774, %v1766
        %v1855 = vpack.c.b16 %v1775, %v1767
        %v1856 = vpack.c.b16 %v1776, %v1768
        %v1857 = vpack.c.b16 %v1777, %v1769
        %v1858 = vpack.c.b16 %v1778, %v1770
        %v1859 = vpack.c.b16 %v1787, %v1779
        %v1860 = vpack.c.b16 %v1788, %v1780
        %v1861 = vpack.c.b16 %v1789, %v1781
        %v1862 = vpack.c.b16 %v1790, %v1782
        %v1863 = vpack.c.b16 %v1791, %v1783
        %v1864 = vpack.c.b16 %v1792, %v1784
        %v1865 = vpack.c.b16 %v1793, %v1785
        %v1866 = vpack.c.b16 %v1794, %v1786
        %v1867 = vpack.c.b16 %v1803, %v1795
        %v1868 = vpack.c.b16 %v1804, %v1796
        %v1869 = vpack.c.b16 %v1805, %v1797
        %v1870 = vpack.c.b16 %v1806, %v1798
        %v1871 = vpack.c.b16 %v1807, %v1799
        %v1872 = vpack.c.b16 %v1808, %v1800
        %v1873 = vpack.c.b16 %v1809, %v1801
        %v1874 = vpack.c.b16 %v1810, %v1802
        %1939 = vmatprep.subr.bf16.mxu0 %v1868
        %1940 = vmatpush1.bf16.msra.mxu0 %v1867
        %1941 = vmatprep.subr.bf16.mxu0 %v1860
        %1942 = vmatpush1.bf16.msra.mxu0 %v1859
        %1943 = vmatprep.subr.bf16.mxu0 %v1852
        %1944 = vmatpush1.bf16.msra.mxu0 %v1851
        %1945 = vmatprep.subr.bf16.mxu0 %v1844
        %1946 = vmatpush1.bf16.msra.mxu0 %v1843
        %1947 = vmatprep.subr.bf16.mxu0 %v1836
        %1948 = vmatpush1.bf16.msra.mxu0 %v1835
        %1949 = vmatprep.subr.bf16.mxu0 %v1828
        %1950 = vmatpush1.bf16.msra.mxu0 %v1827
        %1951 = vmatprep.subr.bf16.mxu0 %v1820
        %1952 = vmatpush1.bf16.msra.mxu0 %v1819
        %1953 = vmatprep.subr.bf16.mxu0 %v1812
        %1954 = vmatpush1.bf16.msra.mxu0 %v1811
        %1955 = vmatprep.subr.bf16.mxu0 0
        %1956 = vmatpush2.bf16.msra.mxu0 0
        %1957 = vmatprep.subr.bf16.mxu0 0
        %1958 = vmatpush2.bf16.msra.mxu0 0
        %1959 = vmatprep.subr.bf16.mxu0 0
        %1960 = vmatpush2.bf16.msra.mxu0 0
        %1961 = vmatprep.subr.bf16.mxu0 0
        %1962 = vmatpush2.bf16.msra.mxu0 0
        %1963 = vmatprep.subr.bf16.mxu0 0
        %1964 = vmatpush2.bf16.msra.mxu0 0
        %1965 = vmatprep.subr.bf16.mxu0 0
        %1966 = vmatpush2.bf16.msra.mxu0 0
        %1967 = vmatprep.subr.bf16.mxu0 0
        %1968 = vmatpush2.bf16.msra.mxu0 0
        %1969 = vmatprep.subr.bf16.mxu0 0
        %1970 = vmatpush2.bf16.msra.mxu0 0
        %1971 = vmatprep.mubr.bf16.mxu0 0
        %1972 = vmatmul.mubr.bf16.gmra.mxu0 %v1523
        %v1973 = vpop.f32.mrf.mxu0
        %v1974 = vadd.f32 0.0, %v1973
        %v1975 = vpop.f32.mrf.mxu0
        %v1976 = vadd.f32 0.0, %v1975
        %v1977 = vpop.f32.mrf.mxu0
        %v1978 = vadd.f32 0.0, %v1977
        %v1979 = vpop.f32.mrf.mxu0
        %v1980 = vadd.f32 0.0, %v1979
        %1981 = vmatprep.mubr.bf16.mxu0 0
        %1982 = vmatmul.mubr.bf16.gmra.mxu0 %v1524
        %v1983 = vpop.f32.mrf.mxu0
        %v1984 = vadd.f32 0.0, %v1983
        %v1985 = vpop.f32.mrf.mxu0
        %v1986 = vadd.f32 0.0, %v1985
        %v1987 = vpop.f32.mrf.mxu0
        %v1988 = vadd.f32 0.0, %v1987
        %v1989 = vpop.f32.mrf.mxu0
        %v1990 = vadd.f32 0.0, %v1989
        %1991 = vmatprep.mubr.bf16.mxu0 0
        %1992 = vmatmul.mubr.bf16.gmra.mxu0 %v1525
        %v1993 = vpop.f32.mrf.mxu0
        %v1994 = vadd.f32 0.0, %v1993
        %v1995 = vpop.f32.mrf.mxu0
        %v1996 = vadd.f32 0.0, %v1995
        %v1997 = vpop.f32.mrf.mxu0
        %v1998 = vadd.f32 0.0, %v1997
        %v1999 = vpop.f32.mrf.mxu0
        %v2000 = vadd.f32 0.0, %v1999
        %2001 = vmatprep.mubr.bf16.mxu0 0
        %2002 = vmatmul.mubr.bf16.gmra.mxu0 %v1526
        %v2003 = vpop.f32.mrf.mxu0
        %v2004 = vadd.f32 0.0, %v2003
        %v2005 = vpop.f32.mrf.mxu0
        %v2006 = vadd.f32 0.0, %v2005
        %v2007 = vpop.f32.mrf.mxu0
        %v2008 = vadd.f32 0.0, %v2007
        %v2009 = vpop.f32.mrf.mxu0
        %v2010 = vadd.f32 0.0, %v2009
        %2011 = vmatprep.mubr.bf16.mxu0 0
        %2012 = vmatmul.mubr.bf16.gmra.mxu0 %v1527
        %v2013 = vpop.f32.mrf.mxu0
        %v2014 = vadd.f32 0.0, %v2013
        %v2015 = vpop.f32.mrf.mxu0
        %v2016 = vadd.f32 0.0, %v2015
        %v2017 = vpop.f32.mrf.mxu0
        %v2018 = vadd.f32 0.0, %v2017
        %v2019 = vpop.f32.mrf.mxu0
        %v2020 = vadd.f32 0.0, %v2019
        %2021 = vmatprep.mubr.bf16.mxu0 0
        %2022 = vmatmul.mubr.bf16.gmra.mxu0 %v1528
        %v2023 = vpop.f32.mrf.mxu0
        %v2024 = vadd.f32 0.0, %v2023
        %v2025 = vpop.f32.mrf.mxu0
        %v2026 = vadd.f32 0.0, %v2025
        %v2027 = vpop.f32.mrf.mxu0
        %v2028 = vadd.f32 0.0, %v2027
        %v2029 = vpop.f32.mrf.mxu0
        %v2030 = vadd.f32 0.0, %v2029
        %2031 = vmatprep.mubr.bf16.mxu0 0
        %2032 = vmatmul.mubr.bf16.gmra.mxu0 %v1529
        %v2033 = vpop.f32.mrf.mxu0
        %v2034 = vadd.f32 0.0, %v2033
        %v2035 = vpop.f32.mrf.mxu0
        %v2036 = vadd.f32 0.0, %v2035
        %v2037 = vpop.f32.mrf.mxu0
        %v2038 = vadd.f32 0.0, %v2037
        %v2039 = vpop.f32.mrf.mxu0
        %v2040 = vadd.f32 0.0, %v2039
        %2041 = vmatprep.mubr.bf16.mxu0 0
        %2042 = vmatmul.mubr.bf16.gmra.mxu0 %v1530
        %v2043 = vpop.f32.mrf.mxu0
        %v2044 = vadd.f32 0.0, %v2043
        %v2045 = vpop.f32.mrf.mxu0
        %v2046 = vadd.f32 0.0, %v2045
        %v2047 = vpop.f32.mrf.mxu0
        %v2048 = vadd.f32 0.0, %v2047
        %v2049 = vpop.f32.mrf.mxu0
        %v2050 = vadd.f32 0.0, %v2049
        %2051 = vmatprep.mubr.bf16.mxu0 0
        %2052 = vmatmul.mubr.bf16.gmra.mxu0 %v1531
        %v2053 = vpop.f32.mrf.mxu0
        %v2054 = vadd.f32 0.0, %v2053
        %v2055 = vpop.f32.mrf.mxu0
        %v2056 = vadd.f32 0.0, %v2055
        %v2057 = vpop.f32.mrf.mxu0
        %v2058 = vadd.f32 0.0, %v2057
        %v2059 = vpop.f32.mrf.mxu0
        %v2060 = vadd.f32 0.0, %v2059
        %2061 = vmatprep.mubr.bf16.mxu0 0
        %2062 = vmatmul.mubr.bf16.gmra.mxu0 %v1532
        %v2063 = vpop.f32.mrf.mxu0
        %v2064 = vadd.f32 0.0, %v2063
        %v2065 = vpop.f32.mrf.mxu0
        %v2066 = vadd.f32 0.0, %v2065
        %v2067 = vpop.f32.mrf.mxu0
        %v2068 = vadd.f32 0.0, %v2067
        %v2069 = vpop.f32.mrf.mxu0
        %v2070 = vadd.f32 0.0, %v2069
        %2071 = vmatprep.mubr.bf16.mxu0 0
        %2072 = vmatmul.mubr.bf16.gmra.mxu0 %v1533
        %v2073 = vpop.f32.mrf.mxu0
        %v2074 = vadd.f32 0.0, %v2073
        %v2075 = vpop.f32.mrf.mxu0
        %v2076 = vadd.f32 0.0, %v2075
        %v2077 = vpop.f32.mrf.mxu0
        %v2078 = vadd.f32 0.0, %v2077
        %v2079 = vpop.f32.mrf.mxu0
        %v2080 = vadd.f32 0.0, %v2079
        %2081 = vmatprep.mubr.bf16.mxu0 0
        %2082 = vmatmul.mubr.bf16.gmra.mxu0 %v1534
        %v2083 = vpop.f32.mrf.mxu0
        %v2084 = vadd.f32 0.0, %v2083
        %v2085 = vpop.f32.mrf.mxu0
        %v2086 = vadd.f32 0.0, %v2085
        %v2087 = vpop.f32.mrf.mxu0
        %v2088 = vadd.f32 0.0, %v2087
        %v2089 = vpop.f32.mrf.mxu0
        %v2090 = vadd.f32 0.0, %v2089
        %2091 = vmatprep.mubr.bf16.mxu0 0
        %2092 = vmatmul.mubr.bf16.gmra.mxu0 %v1535
        %v2093 = vpop.f32.mrf.mxu0
        %v2094 = vadd.f32 0.0, %v2093
        %v2095 = vpop.f32.mrf.mxu0
        %v2096 = vadd.f32 0.0, %v2095
        %v2097 = vpop.f32.mrf.mxu0
        %v2098 = vadd.f32 0.0, %v2097
        %v2099 = vpop.f32.mrf.mxu0
        %v2100 = vadd.f32 0.0, %v2099
        %2101 = vmatprep.mubr.bf16.mxu0 0
        %2102 = vmatmul.mubr.bf16.gmra.mxu0 %v1536
        %v2103 = vpop.f32.mrf.mxu0
        %v2104 = vadd.f32 0.0, %v2103
        %v2105 = vpop.f32.mrf.mxu0
        %v2106 = vadd.f32 0.0, %v2105
        %v2107 = vpop.f32.mrf.mxu0
        %v2108 = vadd.f32 0.0, %v2107
        %v2109 = vpop.f32.mrf.mxu0
        %v2110 = vadd.f32 0.0, %v2109
        %2111 = vmatprep.mubr.bf16.mxu0 0
        %2112 = vmatmul.mubr.bf16.gmra.mxu0 %v1537
        %v2113 = vpop.f32.mrf.mxu0
        %v2114 = vadd.f32 0.0, %v2113
        %v2115 = vpop.f32.mrf.mxu0
        %v2116 = vadd.f32 0.0, %v2115
        %v2117 = vpop.f32.mrf.mxu0
        %v2118 = vadd.f32 0.0, %v2117
        %v2119 = vpop.f32.mrf.mxu0
        %v2120 = vadd.f32 0.0, %v2119
        %2121 = vmatprep.mubr.bf16.mxu0 0
        %2122 = vmatmul.mubr.bf16.gmra.mxu0 %v1538
        %v2123 = vpop.f32.mrf.mxu0
        %v2124 = vadd.f32 0.0, %v2123
        %v2125 = vpop.f32.mrf.mxu0
        %v2126 = vadd.f32 0.0, %v2125
        %v2127 = vpop.f32.mrf.mxu0
        %v2128 = vadd.f32 0.0, %v2127
        %v2129 = vpop.f32.mrf.mxu0
        %v2130 = vadd.f32 0.0, %v2129
        %2131 = vmatprep.mubr.bf16.mxu0 0
        %2132 = vmatmul.mubr.bf16.gmra.mxu0 %v1539
        %v2133 = vpop.f32.mrf.mxu0
        %v2134 = vadd.f32 0.0, %v2133
        %v2135 = vpop.f32.mrf.mxu0
        %v2136 = vadd.f32 0.0, %v2135
        %v2137 = vpop.f32.mrf.mxu0
        %v2138 = vadd.f32 0.0, %v2137
        %v2139 = vpop.f32.mrf.mxu0
        %v2140 = vadd.f32 0.0, %v2139
        %2141 = vmatprep.mubr.bf16.mxu0 0
        %2142 = vmatmul.mubr.bf16.gmra.mxu0 %v1540
        %v2143 = vpop.f32.mrf.mxu0
        %v2144 = vadd.f32 0.0, %v2143
        %v2145 = vpop.f32.mrf.mxu0
        %v2146 = vadd.f32 0.0, %v2145
        %v2147 = vpop.f32.mrf.mxu0
        %v2148 = vadd.f32 0.0, %v2147
        %v2149 = vpop.f32.mrf.mxu0
        %v2150 = vadd.f32 0.0, %v2149
        %2151 = vmatprep.mubr.bf16.mxu0 0
        %2152 = vmatmul.mubr.bf16.gmra.mxu0 %v1541
        %v2153 = vpop.f32.mrf.mxu0
        %v2154 = vadd.f32 0.0, %v2153
        %v2155 = vpop.f32.mrf.mxu0
        %v2156 = vadd.f32 0.0, %v2155
        %v2157 = vpop.f32.mrf.mxu0
        %v2158 = vadd.f32 0.0, %v2157
        %v2159 = vpop.f32.mrf.mxu0
        %v2160 = vadd.f32 0.0, %v2159
        %2161 = vmatprep.mubr.bf16.mxu0 0
        %2162 = vmatmul.mubr.bf16.gmra.mxu0 %v1542
        %v2163 = vpop.f32.mrf.mxu0
        %v2164 = vadd.f32 0.0, %v2163
        %v2165 = vpop.f32.mrf.mxu0
        %v2166 = vadd.f32 0.0, %v2165
        %v2167 = vpop.f32.mrf.mxu0
        %v2168 = vadd.f32 0.0, %v2167
        %v2169 = vpop.f32.mrf.mxu0
        %v2170 = vadd.f32 0.0, %v2169
        %2171 = vmatprep.mubr.bf16.mxu0 0
        %2172 = vmatmul.mubr.bf16.gmra.mxu0 %v1543
        %v2173 = vpop.f32.mrf.mxu0
        %v2174 = vadd.f32 0.0, %v2173
        %v2175 = vpop.f32.mrf.mxu0
        %v2176 = vadd.f32 0.0, %v2175
        %v2177 = vpop.f32.mrf.mxu0
        %v2178 = vadd.f32 0.0, %v2177
        %v2179 = vpop.f32.mrf.mxu0
        %v2180 = vadd.f32 0.0, %v2179
        %2181 = vmatprep.mubr.bf16.mxu0 0
        %2182 = vmatmul.mubr.bf16.gmra.mxu0 %v1544
        %v2183 = vpop.f32.mrf.mxu0
        %v2184 = vadd.f32 0.0, %v2183
        %v2185 = vpop.f32.mrf.mxu0
        %v2186 = vadd.f32 0.0, %v2185
        %v2187 = vpop.f32.mrf.mxu0
        %v2188 = vadd.f32 0.0, %v2187
        %v2189 = vpop.f32.mrf.mxu0
        %v2190 = vadd.f32 0.0, %v2189
        %2191 = vmatprep.mubr.bf16.mxu0 0
        %2192 = vmatmul.mubr.bf16.gmra.mxu0 %v1545
        %v2193 = vpop.f32.mrf.mxu0
        %v2194 = vadd.f32 0.0, %v2193
        %v2195 = vpop.f32.mrf.mxu0
        %v2196 = vadd.f32 0.0, %v2195
        %v2197 = vpop.f32.mrf.mxu0
        %v2198 = vadd.f32 0.0, %v2197
        %v2199 = vpop.f32.mrf.mxu0
        %v2200 = vadd.f32 0.0, %v2199
        %2201 = vmatprep.mubr.bf16.mxu0 0
        %2202 = vmatmul.mubr.bf16.gmra.mxu0 %v1546
        %v2203 = vpop.f32.mrf.mxu0
        %v2204 = vadd.f32 0.0, %v2203
        %v2205 = vpop.f32.mrf.mxu0
        %v2206 = vadd.f32 0.0, %v2205
        %v2207 = vpop.f32.mrf.mxu0
        %v2208 = vadd.f32 0.0, %v2207
        %v2209 = vpop.f32.mrf.mxu0
        %v2210 = vadd.f32 0.0, %v2209
        %2211 = vmatprep.mubr.bf16.mxu0 0
        %2212 = vmatmul.mubr.bf16.gmra.mxu0 %v1547
        %v2213 = vpop.f32.mrf.mxu0
        %v2214 = vadd.f32 0.0, %v2213
        %v2215 = vpop.f32.mrf.mxu0
        %v2216 = vadd.f32 0.0, %v2215
        %v2217 = vpop.f32.mrf.mxu0
        %v2218 = vadd.f32 0.0, %v2217
        %v2219 = vpop.f32.mrf.mxu0
        %v2220 = vadd.f32 0.0, %v2219
        %2221 = vmatprep.mubr.bf16.mxu0 0
        %2222 = vmatmul.mubr.bf16.gmra.mxu0 %v1548
        %v2223 = vpop.f32.mrf.mxu0
        %v2224 = vadd.f32 0.0, %v2223
        %v2225 = vpop.f32.mrf.mxu0
        %v2226 = vadd.f32 0.0, %v2225
        %v2227 = vpop.f32.mrf.mxu0
        %v2228 = vadd.f32 0.0, %v2227
        %v2229 = vpop.f32.mrf.mxu0
        %v2230 = vadd.f32 0.0, %v2229
        %2231 = vmatprep.mubr.bf16.mxu0 0
        %2232 = vmatmul.mubr.bf16.gmra.mxu0 %v1549
        %v2233 = vpop.f32.mrf.mxu0
        %v2234 = vadd.f32 0.0, %v2233
        %v2235 = vpop.f32.mrf.mxu0
        %v2236 = vadd.f32 0.0, %v2235
        %v2237 = vpop.f32.mrf.mxu0
        %v2238 = vadd.f32 0.0, %v2237
        %v2239 = vpop.f32.mrf.mxu0
        %v2240 = vadd.f32 0.0, %v2239
        %2241 = vmatprep.mubr.bf16.mxu0 0
        %2242 = vmatmul.mubr.bf16.gmra.mxu0 %v1550
        %v2243 = vpop.f32.mrf.mxu0
        %v2244 = vadd.f32 0.0, %v2243
        %v2245 = vpop.f32.mrf.mxu0
        %v2246 = vadd.f32 0.0, %v2245
        %v2247 = vpop.f32.mrf.mxu0
        %v2248 = vadd.f32 0.0, %v2247
        %v2249 = vpop.f32.mrf.mxu0
        %v2250 = vadd.f32 0.0, %v2249
        %2251 = vmatprep.mubr.bf16.mxu0 0
        %2252 = vmatmul.mubr.bf16.gmra.mxu0 %v1551
        %v2253 = vpop.f32.mrf.mxu0
        %v2254 = vadd.f32 0.0, %v2253
        %v2255 = vpop.f32.mrf.mxu0
        %v2256 = vadd.f32 0.0, %v2255
        %v2257 = vpop.f32.mrf.mxu0
        %v2258 = vadd.f32 0.0, %v2257
        %v2259 = vpop.f32.mrf.mxu0
        %v2260 = vadd.f32 0.0, %v2259
        %2261 = vmatprep.mubr.bf16.mxu0 0
        %2262 = vmatmul.mubr.bf16.gmra.mxu0 %v1552
        %v2263 = vpop.f32.mrf.mxu0
        %v2264 = vadd.f32 0.0, %v2263
        %v2265 = vpop.f32.mrf.mxu0
        %v2266 = vadd.f32 0.0, %v2265
        %v2267 = vpop.f32.mrf.mxu0
        %v2268 = vadd.f32 0.0, %v2267
        %v2269 = vpop.f32.mrf.mxu0
        %v2270 = vadd.f32 0.0, %v2269
        %2271 = vmatprep.mubr.bf16.mxu0 0
        %2272 = vmatmul.mubr.bf16.gmra.mxu0 %v1553
        %v2273 = vpop.f32.mrf.mxu0
        %v2274 = vadd.f32 0.0, %v2273
        %v2275 = vpop.f32.mrf.mxu0
        %v2276 = vadd.f32 0.0, %v2275
        %v2277 = vpop.f32.mrf.mxu0
        %v2278 = vadd.f32 0.0, %v2277
        %v2279 = vpop.f32.mrf.mxu0
        %v2280 = vadd.f32 0.0, %v2279
        %2281 = vmatprep.mubr.bf16.mxu0 0
        %2282 = vmatmul.mubr.bf16.gmra.mxu0 %v1554
        %v2283 = vpop.f32.mrf.mxu0
        %v2284 = vadd.f32 0.0, %v2283
        %v2285 = vpop.f32.mrf.mxu0
        %v2286 = vadd.f32 0.0, %v2285
        %v2287 = vpop.f32.mrf.mxu0
        %v2288 = vadd.f32 0.0, %v2287
        %v2289 = vpop.f32.mrf.mxu0
        %v2290 = vadd.f32 0.0, %v2289
        %2291 = vdwg.mxu0
        %2292 = vmatprep.subr.bf16.mxu0 %v1870
        %2293 = vmatpush1.bf16.msra.mxu0 %v1869
        %2294 = vmatprep.subr.bf16.mxu0 %v1862
        %2295 = vmatpush1.bf16.msra.mxu0 %v1861
        %2296 = vmatprep.subr.bf16.mxu0 %v1854
        %2297 = vmatpush1.bf16.msra.mxu0 %v1853
        %2298 = vmatprep.subr.bf16.mxu0 %v1846
        %2299 = vmatpush1.bf16.msra.mxu0 %v1845
        %2300 = vmatprep.subr.bf16.mxu0 %v1838
        %2301 = vmatpush1.bf16.msra.mxu0 %v1837
        %2302 = vmatprep.subr.bf16.mxu0 %v1830
        %2303 = vmatpush1.bf16.msra.mxu0 %v1829
        %2304 = vmatprep.subr.bf16.mxu0 %v1822
        %2305 = vmatpush1.bf16.msra.mxu0 %v1821
        %2306 = vmatprep.subr.bf16.mxu0 %v1814
        %2307 = vmatpush1.bf16.msra.mxu0 %v1813
        %2308 = vmatprep.subr.bf16.mxu0 0
        %2309 = vmatpush2.bf16.msra.mxu0 0
        %2310 = vmatprep.subr.bf16.mxu0 0
        %2311 = vmatpush2.bf16.msra.mxu0 0
        %2312 = vmatprep.subr.bf16.mxu0 0
        %2313 = vmatpush2.bf16.msra.mxu0 0
        %2314 = vmatprep.subr.bf16.mxu0 0
        %2315 = vmatpush2.bf16.msra.mxu0 0
        %2316 = vmatprep.subr.bf16.mxu0 0
        %2317 = vmatpush2.bf16.msra.mxu0 0
        %2318 = vmatprep.subr.bf16.mxu0 0
        %2319 = vmatpush2.bf16.msra.mxu0 0
        %2320 = vmatprep.subr.bf16.mxu0 0
        %2321 = vmatpush2.bf16.msra.mxu0 0
        %2322 = vmatprep.subr.bf16.mxu0 0
        %2323 = vmatpush2.bf16.msra.mxu0 0
        %2324 = vmatprep.mubr.bf16.mxu0 0
        %2325 = vmatmul.mubr.bf16.gmra.mxu0 %v1523
        %v2326 = vpop.f32.mrf.mxu0
        %v2327 = vadd.f32 0.0, %v2326
        %v2328 = vpop.f32.mrf.mxu0
        %v2329 = vadd.f32 0.0, %v2328
        %v2330 = vpop.f32.mrf.mxu0
        %v2331 = vadd.f32 0.0, %v2330
        %v2332 = vpop.f32.mrf.mxu0
        %v2333 = vadd.f32 0.0, %v2332
        %2334 = vmatprep.mubr.bf16.mxu0 0
        %2335 = vmatmul.mubr.bf16.gmra.mxu0 %v1524
        %v2336 = vpop.f32.mrf.mxu0
        %v2337 = vadd.f32 0.0, %v2336
        %v2338 = vpop.f32.mrf.mxu0
        %v2339 = vadd.f32 0.0, %v2338
        %v2340 = vpop.f32.mrf.mxu0
        %v2341 = vadd.f32 0.0, %v2340
        %v2342 = vpop.f32.mrf.mxu0
        %v2343 = vadd.f32 0.0, %v2342
        %2344 = vmatprep.mubr.bf16.mxu0 0
        %2345 = vmatmul.mubr.bf16.gmra.mxu0 %v1525
        %v2346 = vpop.f32.mrf.mxu0
        %v2347 = vadd.f32 0.0, %v2346
        %v2348 = vpop.f32.mrf.mxu0
        %v2349 = vadd.f32 0.0, %v2348
        %v2350 = vpop.f32.mrf.mxu0
        %v2351 = vadd.f32 0.0, %v2350
        %v2352 = vpop.f32.mrf.mxu0
        %v2353 = vadd.f32 0.0, %v2352
        %2354 = vmatprep.mubr.bf16.mxu0 0
        %2355 = vmatmul.mubr.bf16.gmra.mxu0 %v1526
        %v2356 = vpop.f32.mrf.mxu0
        %v2357 = vadd.f32 0.0, %v2356
        %v2358 = vpop.f32.mrf.mxu0
        %v2359 = vadd.f32 0.0, %v2358
        %v2360 = vpop.f32.mrf.mxu0
        %v2361 = vadd.f32 0.0, %v2360
        %v2362 = vpop.f32.mrf.mxu0
        %v2363 = vadd.f32 0.0, %v2362
        %2364 = vmatprep.mubr.bf16.mxu0 0
        %2365 = vmatmul.mubr.bf16.gmra.mxu0 %v1527
        %v2366 = vpop.f32.mrf.mxu0
        %v2367 = vadd.f32 0.0, %v2366
        %v2368 = vpop.f32.mrf.mxu0
        %v2369 = vadd.f32 0.0, %v2368
        %v2370 = vpop.f32.mrf.mxu0
        %v2371 = vadd.f32 0.0, %v2370
        %v2372 = vpop.f32.mrf.mxu0
        %v2373 = vadd.f32 0.0, %v2372
        %2374 = vmatprep.mubr.bf16.mxu0 0
        %2375 = vmatmul.mubr.bf16.gmra.mxu0 %v1528
        %v2376 = vpop.f32.mrf.mxu0
        %v2377 = vadd.f32 0.0, %v2376
        %v2378 = vpop.f32.mrf.mxu0
        %v2379 = vadd.f32 0.0, %v2378
        %v2380 = vpop.f32.mrf.mxu0
        %v2381 = vadd.f32 0.0, %v2380
        %v2382 = vpop.f32.mrf.mxu0
        %v2383 = vadd.f32 0.0, %v2382
        %2384 = vmatprep.mubr.bf16.mxu0 0
        %2385 = vmatmul.mubr.bf16.gmra.mxu0 %v1529
        %v2386 = vpop.f32.mrf.mxu0
        %v2387 = vadd.f32 0.0, %v2386
        %v2388 = vpop.f32.mrf.mxu0
        %v2389 = vadd.f32 0.0, %v2388
        %v2390 = vpop.f32.mrf.mxu0
        %v2391 = vadd.f32 0.0, %v2390
        %v2392 = vpop.f32.mrf.mxu0
        %v2393 = vadd.f32 0.0, %v2392
        %2394 = vmatprep.mubr.bf16.mxu0 0
        %2395 = vmatmul.mubr.bf16.gmra.mxu0 %v1530
        %v2396 = vpop.f32.mrf.mxu0
        %v2397 = vadd.f32 0.0, %v2396
        %v2398 = vpop.f32.mrf.mxu0
        %v2399 = vadd.f32 0.0, %v2398
        %v2400 = vpop.f32.mrf.mxu0
        %v2401 = vadd.f32 0.0, %v2400
        %v2402 = vpop.f32.mrf.mxu0
        %v2403 = vadd.f32 0.0, %v2402
        %2404 = vmatprep.mubr.bf16.mxu0 0
        %2405 = vmatmul.mubr.bf16.gmra.mxu0 %v1531
        %v2406 = vpop.f32.mrf.mxu0
        %v2407 = vadd.f32 0.0, %v2406
        %v2408 = vpop.f32.mrf.mxu0
        %v2409 = vadd.f32 0.0, %v2408
        %v2410 = vpop.f32.mrf.mxu0
        %v2411 = vadd.f32 0.0, %v2410
        %v2412 = vpop.f32.mrf.mxu0
        %v2413 = vadd.f32 0.0, %v2412
        %2414 = vmatprep.mubr.bf16.mxu0 0
        %2415 = vmatmul.mubr.bf16.gmra.mxu0 %v1532
        %v2416 = vpop.f32.mrf.mxu0
        %v2417 = vadd.f32 0.0, %v2416
        %v2418 = vpop.f32.mrf.mxu0
        %v2419 = vadd.f32 0.0, %v2418
        %v2420 = vpop.f32.mrf.mxu0
        %v2421 = vadd.f32 0.0, %v2420
        %v2422 = vpop.f32.mrf.mxu0
        %v2423 = vadd.f32 0.0, %v2422
        %2424 = vmatprep.mubr.bf16.mxu0 0
        %2425 = vmatmul.mubr.bf16.gmra.mxu0 %v1533
        %v2426 = vpop.f32.mrf.mxu0
        %v2427 = vadd.f32 0.0, %v2426
        %v2428 = vpop.f32.mrf.mxu0
        %v2429 = vadd.f32 0.0, %v2428
        %v2430 = vpop.f32.mrf.mxu0
        %v2431 = vadd.f32 0.0, %v2430
        %v2432 = vpop.f32.mrf.mxu0
        %v2433 = vadd.f32 0.0, %v2432
        %2434 = vmatprep.mubr.bf16.mxu0 0
        %2435 = vmatmul.mubr.bf16.gmra.mxu0 %v1534
        %v2436 = vpop.f32.mrf.mxu0
        %v2437 = vadd.f32 0.0, %v2436
        %v2438 = vpop.f32.mrf.mxu0
        %v2439 = vadd.f32 0.0, %v2438
        %v2440 = vpop.f32.mrf.mxu0
        %v2441 = vadd.f32 0.0, %v2440
        %v2442 = vpop.f32.mrf.mxu0
        %v2443 = vadd.f32 0.0, %v2442
        %2444 = vmatprep.mubr.bf16.mxu0 0
        %2445 = vmatmul.mubr.bf16.gmra.mxu0 %v1535
        %v2446 = vpop.f32.mrf.mxu0
        %v2447 = vadd.f32 0.0, %v2446
        %v2448 = vpop.f32.mrf.mxu0
        %v2449 = vadd.f32 0.0, %v2448
        %v2450 = vpop.f32.mrf.mxu0
        %v2451 = vadd.f32 0.0, %v2450
        %v2452 = vpop.f32.mrf.mxu0
        %v2453 = vadd.f32 0.0, %v2452
        %2454 = vmatprep.mubr.bf16.mxu0 0
        %2455 = vmatmul.mubr.bf16.gmra.mxu0 %v1536
        %v2456 = vpop.f32.mrf.mxu0
        %v2457 = vadd.f32 0.0, %v2456
        %v2458 = vpop.f32.mrf.mxu0
        %v2459 = vadd.f32 0.0, %v2458
        %v2460 = vpop.f32.mrf.mxu0
        %v2461 = vadd.f32 0.0, %v2460
        %v2462 = vpop.f32.mrf.mxu0
        %v2463 = vadd.f32 0.0, %v2462
        %2464 = vmatprep.mubr.bf16.mxu0 0
        %2465 = vmatmul.mubr.bf16.gmra.mxu0 %v1537
        %v2466 = vpop.f32.mrf.mxu0
        %v2467 = vadd.f32 0.0, %v2466
        %v2468 = vpop.f32.mrf.mxu0
        %v2469 = vadd.f32 0.0, %v2468
        %v2470 = vpop.f32.mrf.mxu0
        %v2471 = vadd.f32 0.0, %v2470
        %v2472 = vpop.f32.mrf.mxu0
        %v2473 = vadd.f32 0.0, %v2472
        %2474 = vmatprep.mubr.bf16.mxu0 0
        %2475 = vmatmul.mubr.bf16.gmra.mxu0 %v1538
        %v2476 = vpop.f32.mrf.mxu0
        %v2477 = vadd.f32 0.0, %v2476
        %v2478 = vpop.f32.mrf.mxu0
        %v2479 = vadd.f32 0.0, %v2478
        %v2480 = vpop.f32.mrf.mxu0
        %v2481 = vadd.f32 0.0, %v2480
        %v2482 = vpop.f32.mrf.mxu0
        %v2483 = vadd.f32 0.0, %v2482
        %2484 = vmatprep.mubr.bf16.mxu0 0
        %2485 = vmatmul.mubr.bf16.gmra.mxu0 %v1539
        %v2486 = vpop.f32.mrf.mxu0
        %v2487 = vadd.f32 0.0, %v2486
        %v2488 = vpop.f32.mrf.mxu0
        %v2489 = vadd.f32 0.0, %v2488
        %v2490 = vpop.f32.mrf.mxu0
        %v2491 = vadd.f32 0.0, %v2490
        %v2492 = vpop.f32.mrf.mxu0
        %v2493 = vadd.f32 0.0, %v2492
        %2494 = vmatprep.mubr.bf16.mxu0 0
        %2495 = vmatmul.mubr.bf16.gmra.mxu0 %v1540
        %v2496 = vpop.f32.mrf.mxu0
        %v2497 = vadd.f32 0.0, %v2496
        %v2498 = vpop.f32.mrf.mxu0
        %v2499 = vadd.f32 0.0, %v2498
        %v2500 = vpop.f32.mrf.mxu0
        %v2501 = vadd.f32 0.0, %v2500
        %v2502 = vpop.f32.mrf.mxu0
        %v2503 = vadd.f32 0.0, %v2502
        %2504 = vmatprep.mubr.bf16.mxu0 0
        %2505 = vmatmul.mubr.bf16.gmra.mxu0 %v1541
        %v2506 = vpop.f32.mrf.mxu0
        %v2507 = vadd.f32 0.0, %v2506
        %v2508 = vpop.f32.mrf.mxu0
        %v2509 = vadd.f32 0.0, %v2508
        %v2510 = vpop.f32.mrf.mxu0
        %v2511 = vadd.f32 0.0, %v2510
        %v2512 = vpop.f32.mrf.mxu0
        %v2513 = vadd.f32 0.0, %v2512
        %2514 = vmatprep.mubr.bf16.mxu0 0
        %2515 = vmatmul.mubr.bf16.gmra.mxu0 %v1542
        %v2516 = vpop.f32.mrf.mxu0
        %v2517 = vadd.f32 0.0, %v2516
        %v2518 = vpop.f32.mrf.mxu0
        %v2519 = vadd.f32 0.0, %v2518
        %v2520 = vpop.f32.mrf.mxu0
        %v2521 = vadd.f32 0.0, %v2520
        %v2522 = vpop.f32.mrf.mxu0
        %v2523 = vadd.f32 0.0, %v2522
        %2524 = vmatprep.mubr.bf16.mxu0 0
        %2525 = vmatmul.mubr.bf16.gmra.mxu0 %v1543
        %v2526 = vpop.f32.mrf.mxu0
        %v2527 = vadd.f32 0.0, %v2526
        %v2528 = vpop.f32.mrf.mxu0
        %v2529 = vadd.f32 0.0, %v2528
        %v2530 = vpop.f32.mrf.mxu0
        %v2531 = vadd.f32 0.0, %v2530
        %v2532 = vpop.f32.mrf.mxu0
        %v2533 = vadd.f32 0.0, %v2532
        %2534 = vmatprep.mubr.bf16.mxu0 0
        %2535 = vmatmul.mubr.bf16.gmra.mxu0 %v1544
        %v2536 = vpop.f32.mrf.mxu0
        %v2537 = vadd.f32 0.0, %v2536
        %v2538 = vpop.f32.mrf.mxu0
        %v2539 = vadd.f32 0.0, %v2538
        %v2540 = vpop.f32.mrf.mxu0
        %v2541 = vadd.f32 0.0, %v2540
        %v2542 = vpop.f32.mrf.mxu0
        %v2543 = vadd.f32 0.0, %v2542
        %2544 = vmatprep.mubr.bf16.mxu0 0
        %2545 = vmatmul.mubr.bf16.gmra.mxu0 %v1545
        %v2546 = vpop.f32.mrf.mxu0
        %v2547 = vadd.f32 0.0, %v2546
        %v2548 = vpop.f32.mrf.mxu0
        %v2549 = vadd.f32 0.0, %v2548
        %v2550 = vpop.f32.mrf.mxu0
        %v2551 = vadd.f32 0.0, %v2550
        %v2552 = vpop.f32.mrf.mxu0
        %v2553 = vadd.f32 0.0, %v2552
        %2554 = vmatprep.mubr.bf16.mxu0 0
        %2555 = vmatmul.mubr.bf16.gmra.mxu0 %v1546
        %v2556 = vpop.f32.mrf.mxu0
        %v2557 = vadd.f32 0.0, %v2556
        %v2558 = vpop.f32.mrf.mxu0
        %v2559 = vadd.f32 0.0, %v2558
        %v2560 = vpop.f32.mrf.mxu0
        %v2561 = vadd.f32 0.0, %v2560
        %v2562 = vpop.f32.mrf.mxu0
        %v2563 = vadd.f32 0.0, %v2562
        %2564 = vmatprep.mubr.bf16.mxu0 0
        %2565 = vmatmul.mubr.bf16.gmra.mxu0 %v1547
        %v2566 = vpop.f32.mrf.mxu0
        %v2567 = vadd.f32 0.0, %v2566
        %v2568 = vpop.f32.mrf.mxu0
        %v2569 = vadd.f32 0.0, %v2568
        %v2570 = vpop.f32.mrf.mxu0
        %v2571 = vadd.f32 0.0, %v2570
        %v2572 = vpop.f32.mrf.mxu0
        %v2573 = vadd.f32 0.0, %v2572
        %2574 = vmatprep.mubr.bf16.mxu0 0
        %2575 = vmatmul.mubr.bf16.gmra.mxu0 %v1548
        %v2576 = vpop.f32.mrf.mxu0
        %v2577 = vadd.f32 0.0, %v2576
        %v2578 = vpop.f32.mrf.mxu0
        %v2579 = vadd.f32 0.0, %v2578
        %v2580 = vpop.f32.mrf.mxu0
        %v2581 = vadd.f32 0.0, %v2580
        %v2582 = vpop.f32.mrf.mxu0
        %v2583 = vadd.f32 0.0, %v2582
        %2584 = vmatprep.mubr.bf16.mxu0 0
        %2585 = vmatmul.mubr.bf16.gmra.mxu0 %v1549
        %v2586 = vpop.f32.mrf.mxu0
        %v2587 = vadd.f32 0.0, %v2586
        %v2588 = vpop.f32.mrf.mxu0
        %v2589 = vadd.f32 0.0, %v2588
        %v2590 = vpop.f32.mrf.mxu0
        %v2591 = vadd.f32 0.0, %v2590
        %v2592 = vpop.f32.mrf.mxu0
        %v2593 = vadd.f32 0.0, %v2592
        %2594 = vmatprep.mubr.bf16.mxu0 0
        %2595 = vmatmul.mubr.bf16.gmra.mxu0 %v1550
        %v2596 = vpop.f32.mrf.mxu0
        %v2597 = vadd.f32 0.0, %v2596
        %v2598 = vpop.f32.mrf.mxu0
        %v2599 = vadd.f32 0.0, %v2598
        %v2600 = vpop.f32.mrf.mxu0
        %v2601 = vadd.f32 0.0, %v2600
        %v2602 = vpop.f32.mrf.mxu0
        %v2603 = vadd.f32 0.0, %v2602
        %2604 = vmatprep.mubr.bf16.mxu0 0
        %2605 = vmatmul.mubr.bf16.gmra.mxu0 %v1551
        %v2606 = vpop.f32.mrf.mxu0
        %v2607 = vadd.f32 0.0, %v2606
        %v2608 = vpop.f32.mrf.mxu0
        %v2609 = vadd.f32 0.0, %v2608
        %v2610 = vpop.f32.mrf.mxu0
        %v2611 = vadd.f32 0.0, %v2610
        %v2612 = vpop.f32.mrf.mxu0
        %v2613 = vadd.f32 0.0, %v2612
        %2614 = vmatprep.mubr.bf16.mxu0 0
        %2615 = vmatmul.mubr.bf16.gmra.mxu0 %v1552
        %v2616 = vpop.f32.mrf.mxu0
        %v2617 = vadd.f32 0.0, %v2616
        %v2618 = vpop.f32.mrf.mxu0
        %v2619 = vadd.f32 0.0, %v2618
        %v2620 = vpop.f32.mrf.mxu0
        %v2621 = vadd.f32 0.0, %v2620
        %v2622 = vpop.f32.mrf.mxu0
        %v2623 = vadd.f32 0.0, %v2622
        %2624 = vmatprep.mubr.bf16.mxu0 0
        %2625 = vmatmul.mubr.bf16.gmra.mxu0 %v1553
        %v2626 = vpop.f32.mrf.mxu0
        %v2627 = vadd.f32 0.0, %v2626
        %v2628 = vpop.f32.mrf.mxu0
        %v2629 = vadd.f32 0.0, %v2628
        %v2630 = vpop.f32.mrf.mxu0
        %v2631 = vadd.f32 0.0, %v2630
        %v2632 = vpop.f32.mrf.mxu0
        %v2633 = vadd.f32 0.0, %v2632
        %2634 = vmatprep.mubr.bf16.mxu0 0
        %2635 = vmatmul.mubr.bf16.gmra.mxu0 %v1554
        %v2636 = vpop.f32.mrf.mxu0
        %v2637 = vadd.f32 0.0, %v2636
        %v2638 = vpop.f32.mrf.mxu0
        %v2639 = vadd.f32 0.0, %v2638
        %v2640 = vpop.f32.mrf.mxu0
        %v2641 = vadd.f32 0.0, %v2640
        %v2642 = vpop.f32.mrf.mxu0
        %v2643 = vadd.f32 0.0, %v2642
        %2644 = vdwg.mxu0
        %2645 = vmatprep.subr.bf16.mxu0 %v1872
        %2646 = vmatpush1.bf16.msra.mxu0 %v1871
        %2647 = vmatprep.subr.bf16.mxu0 %v1864
        %2648 = vmatpush1.bf16.msra.mxu0 %v1863
        %2649 = vmatprep.subr.bf16.mxu0 %v1856
        %2650 = vmatpush1.bf16.msra.mxu0 %v1855
        %2651 = vmatprep.subr.bf16.mxu0 %v1848
        %2652 = vmatpush1.bf16.msra.mxu0 %v1847
        %2653 = vmatprep.subr.bf16.mxu0 %v1840
        %2654 = vmatpush1.bf16.msra.mxu0 %v1839
        %2655 = vmatprep.subr.bf16.mxu0 %v1832
        %2656 = vmatpush1.bf16.msra.mxu0 %v1831
        %2657 = vmatprep.subr.bf16.mxu0 %v1824
        %2658 = vmatpush1.bf16.msra.mxu0 %v1823
        %2659 = vmatprep.subr.bf16.mxu0 %v1816
        %2660 = vmatpush1.bf16.msra.mxu0 %v1815
        %2661 = vmatprep.subr.bf16.mxu0 0
        %2662 = vmatpush2.bf16.msra.mxu0 0
        %2663 = vmatprep.subr.bf16.mxu0 0
        %2664 = vmatpush2.bf16.msra.mxu0 0
        %2665 = vmatprep.subr.bf16.mxu0 0
        %2666 = vmatpush2.bf16.msra.mxu0 0
        %2667 = vmatprep.subr.bf16.mxu0 0
        %2668 = vmatpush2.bf16.msra.mxu0 0
        %2669 = vmatprep.subr.bf16.mxu0 0
        %2670 = vmatpush2.bf16.msra.mxu0 0
        %2671 = vmatprep.subr.bf16.mxu0 0
        %2672 = vmatpush2.bf16.msra.mxu0 0
        %2673 = vmatprep.subr.bf16.mxu0 0
        %2674 = vmatpush2.bf16.msra.mxu0 0
        %2675 = vmatprep.subr.bf16.mxu0 0
        %2676 = vmatpush2.bf16.msra.mxu0 0
        %2677 = vmatprep.mubr.bf16.mxu0 0
        %2678 = vmatmul.mubr.bf16.gmra.mxu0 %v1523
        %v2679 = vpop.f32.mrf.mxu0
        %v2680 = vadd.f32 0.0, %v2679
        %v2681 = vpop.f32.mrf.mxu0
        %v2682 = vadd.f32 0.0, %v2681
        %v2683 = vpop.f32.mrf.mxu0
        %v2684 = vadd.f32 0.0, %v2683
        %v2685 = vpop.f32.mrf.mxu0
        %v2686 = vadd.f32 0.0, %v2685
        %2687 = vmatprep.mubr.bf16.mxu0 0
        %2688 = vmatmul.mubr.bf16.gmra.mxu0 %v1524
        %v2689 = vpop.f32.mrf.mxu0
        %v2690 = vadd.f32 0.0, %v2689
        %v2691 = vpop.f32.mrf.mxu0
        %v2692 = vadd.f32 0.0, %v2691
        %v2693 = vpop.f32.mrf.mxu0
        %v2694 = vadd.f32 0.0, %v2693
        %v2695 = vpop.f32.mrf.mxu0
        %v2696 = vadd.f32 0.0, %v2695
        %2697 = vmatprep.mubr.bf16.mxu0 0
        %2698 = vmatmul.mubr.bf16.gmra.mxu0 %v1525
        %v2699 = vpop.f32.mrf.mxu0
        %v2700 = vadd.f32 0.0, %v2699
        %v2701 = vpop.f32.mrf.mxu0
        %v2702 = vadd.f32 0.0, %v2701
        %v2703 = vpop.f32.mrf.mxu0
        %v2704 = vadd.f32 0.0, %v2703
        %v2705 = vpop.f32.mrf.mxu0
        %v2706 = vadd.f32 0.0, %v2705
        %2707 = vmatprep.mubr.bf16.mxu0 0
        %2708 = vmatmul.mubr.bf16.gmra.mxu0 %v1526
        %v2709 = vpop.f32.mrf.mxu0
        %v2710 = vadd.f32 0.0, %v2709
        %v2711 = vpop.f32.mrf.mxu0
        %v2712 = vadd.f32 0.0, %v2711
        %v2713 = vpop.f32.mrf.mxu0
        %v2714 = vadd.f32 0.0, %v2713
        %v2715 = vpop.f32.mrf.mxu0
        %v2716 = vadd.f32 0.0, %v2715
        %2717 = vmatprep.mubr.bf16.mxu0 0
        %2718 = vmatmul.mubr.bf16.gmra.mxu0 %v1527
        %v2719 = vpop.f32.mrf.mxu0
        %v2720 = vadd.f32 0.0, %v2719
        %v2721 = vpop.f32.mrf.mxu0
        %v2722 = vadd.f32 0.0, %v2721
        %v2723 = vpop.f32.mrf.mxu0
        %v2724 = vadd.f32 0.0, %v2723
        %v2725 = vpop.f32.mrf.mxu0
        %v2726 = vadd.f32 0.0, %v2725
        %2727 = vmatprep.mubr.bf16.mxu0 0
        %2728 = vmatmul.mubr.bf16.gmra.mxu0 %v1528
        %v2729 = vpop.f32.mrf.mxu0
        %v2730 = vadd.f32 0.0, %v2729
        %v2731 = vpop.f32.mrf.mxu0
        %v2732 = vadd.f32 0.0, %v2731
        %v2733 = vpop.f32.mrf.mxu0
        %v2734 = vadd.f32 0.0, %v2733
        %v2735 = vpop.f32.mrf.mxu0
        %v2736 = vadd.f32 0.0, %v2735
        %2737 = vmatprep.mubr.bf16.mxu0 0
        %2738 = vmatmul.mubr.bf16.gmra.mxu0 %v1529
        %v2739 = vpop.f32.mrf.mxu0
        %v2740 = vadd.f32 0.0, %v2739
        %v2741 = vpop.f32.mrf.mxu0
        %v2742 = vadd.f32 0.0, %v2741
        %v2743 = vpop.f32.mrf.mxu0
        %v2744 = vadd.f32 0.0, %v2743
        %v2745 = vpop.f32.mrf.mxu0
        %v2746 = vadd.f32 0.0, %v2745
        %2747 = vmatprep.mubr.bf16.mxu0 0
        %2748 = vmatmul.mubr.bf16.gmra.mxu0 %v1530
        %v2749 = vpop.f32.mrf.mxu0
        %v2750 = vadd.f32 0.0, %v2749
        %v2751 = vpop.f32.mrf.mxu0
        %v2752 = vadd.f32 0.0, %v2751
        %v2753 = vpop.f32.mrf.mxu0
        %v2754 = vadd.f32 0.0, %v2753
        %v2755 = vpop.f32.mrf.mxu0
        %v2756 = vadd.f32 0.0, %v2755
        %2757 = vmatprep.mubr.bf16.mxu0 0
        %2758 = vmatmul.mubr.bf16.gmra.mxu0 %v1531
        %v2759 = vpop.f32.mrf.mxu0
        %v2760 = vadd.f32 0.0, %v2759
        %v2761 = vpop.f32.mrf.mxu0
        %v2762 = vadd.f32 0.0, %v2761
        %v2763 = vpop.f32.mrf.mxu0
        %v2764 = vadd.f32 0.0, %v2763
        %v2765 = vpop.f32.mrf.mxu0
        %v2766 = vadd.f32 0.0, %v2765
        %2767 = vmatprep.mubr.bf16.mxu0 0
        %2768 = vmatmul.mubr.bf16.gmra.mxu0 %v1532
        %v2769 = vpop.f32.mrf.mxu0
        %v2770 = vadd.f32 0.0, %v2769
        %v2771 = vpop.f32.mrf.mxu0
        %v2772 = vadd.f32 0.0, %v2771
        %v2773 = vpop.f32.mrf.mxu0
        %v2774 = vadd.f32 0.0, %v2773
        %v2775 = vpop.f32.mrf.mxu0
        %v2776 = vadd.f32 0.0, %v2775
        %2777 = vmatprep.mubr.bf16.mxu0 0
        %2778 = vmatmul.mubr.bf16.gmra.mxu0 %v1533
        %v2779 = vpop.f32.mrf.mxu0
        %v2780 = vadd.f32 0.0, %v2779
        %v2781 = vpop.f32.mrf.mxu0
        %v2782 = vadd.f32 0.0, %v2781
        %v2783 = vpop.f32.mrf.mxu0
        %v2784 = vadd.f32 0.0, %v2783
        %v2785 = vpop.f32.mrf.mxu0
        %v2786 = vadd.f32 0.0, %v2785
        %2787 = vmatprep.mubr.bf16.mxu0 0
        %2788 = vmatmul.mubr.bf16.gmra.mxu0 %v1534
        %v2789 = vpop.f32.mrf.mxu0
        %v2790 = vadd.f32 0.0, %v2789
        %v2791 = vpop.f32.mrf.mxu0
        %v2792 = vadd.f32 0.0, %v2791
        %v2793 = vpop.f32.mrf.mxu0
        %v2794 = vadd.f32 0.0, %v2793
        %v2795 = vpop.f32.mrf.mxu0
        %v2796 = vadd.f32 0.0, %v2795
        %2797 = vmatprep.mubr.bf16.mxu0 0
        %2798 = vmatmul.mubr.bf16.gmra.mxu0 %v1535
        %v2799 = vpop.f32.mrf.mxu0
        %v2800 = vadd.f32 0.0, %v2799
        %v2801 = vpop.f32.mrf.mxu0
        %v2802 = vadd.f32 0.0, %v2801
        %v2803 = vpop.f32.mrf.mxu0
        %v2804 = vadd.f32 0.0, %v2803
        %v2805 = vpop.f32.mrf.mxu0
        %v2806 = vadd.f32 0.0, %v2805
        %2807 = vmatprep.mubr.bf16.mxu0 0
        %2808 = vmatmul.mubr.bf16.gmra.mxu0 %v1536
        %v2809 = vpop.f32.mrf.mxu0
        %v2810 = vadd.f32 0.0, %v2809
        %v2811 = vpop.f32.mrf.mxu0
        %v2812 = vadd.f32 0.0, %v2811
        %v2813 = vpop.f32.mrf.mxu0
        %v2814 = vadd.f32 0.0, %v2813
        %v2815 = vpop.f32.mrf.mxu0
        %v2816 = vadd.f32 0.0, %v2815
        %2817 = vmatprep.mubr.bf16.mxu0 0
        %2818 = vmatmul.mubr.bf16.gmra.mxu0 %v1537
        %v2819 = vpop.f32.mrf.mxu0
        %v2820 = vadd.f32 0.0, %v2819
        %v2821 = vpop.f32.mrf.mxu0
        %v2822 = vadd.f32 0.0, %v2821
        %v2823 = vpop.f32.mrf.mxu0
        %v2824 = vadd.f32 0.0, %v2823
        %v2825 = vpop.f32.mrf.mxu0
        %v2826 = vadd.f32 0.0, %v2825
        %2827 = vmatprep.mubr.bf16.mxu0 0
        %2828 = vmatmul.mubr.bf16.gmra.mxu0 %v1538
        %v2829 = vpop.f32.mrf.mxu0
        %v2830 = vadd.f32 0.0, %v2829
        %v2831 = vpop.f32.mrf.mxu0
        %v2832 = vadd.f32 0.0, %v2831
        %v2833 = vpop.f32.mrf.mxu0
        %v2834 = vadd.f32 0.0, %v2833
        %v2835 = vpop.f32.mrf.mxu0
        %v2836 = vadd.f32 0.0, %v2835
        %2837 = vmatprep.mubr.bf16.mxu0 0
        %2838 = vmatmul.mubr.bf16.gmra.mxu0 %v1539
        %v2839 = vpop.f32.mrf.mxu0
        %v2840 = vadd.f32 0.0, %v2839
        %v2841 = vpop.f32.mrf.mxu0
        %v2842 = vadd.f32 0.0, %v2841
        %v2843 = vpop.f32.mrf.mxu0
        %v2844 = vadd.f32 0.0, %v2843
        %v2845 = vpop.f32.mrf.mxu0
        %v2846 = vadd.f32 0.0, %v2845
        %2847 = vmatprep.mubr.bf16.mxu0 0
        %2848 = vmatmul.mubr.bf16.gmra.mxu0 %v1540
        %v2849 = vpop.f32.mrf.mxu0
        %v2850 = vadd.f32 0.0, %v2849
        %v2851 = vpop.f32.mrf.mxu0
        %v2852 = vadd.f32 0.0, %v2851
        %v2853 = vpop.f32.mrf.mxu0
        %v2854 = vadd.f32 0.0, %v2853
        %v2855 = vpop.f32.mrf.mxu0
        %v2856 = vadd.f32 0.0, %v2855
        %2857 = vmatprep.mubr.bf16.mxu0 0
        %2858 = vmatmul.mubr.bf16.gmra.mxu0 %v1541
        %v2859 = vpop.f32.mrf.mxu0
        %v2860 = vadd.f32 0.0, %v2859
        %v2861 = vpop.f32.mrf.mxu0
        %v2862 = vadd.f32 0.0, %v2861
        %v2863 = vpop.f32.mrf.mxu0
        %v2864 = vadd.f32 0.0, %v2863
        %v2865 = vpop.f32.mrf.mxu0
        %v2866 = vadd.f32 0.0, %v2865
        %2867 = vmatprep.mubr.bf16.mxu0 0
        %2868 = vmatmul.mubr.bf16.gmra.mxu0 %v1542
        %v2869 = vpop.f32.mrf.mxu0
        %v2870 = vadd.f32 0.0, %v2869
        %v2871 = vpop.f32.mrf.mxu0
        %v2872 = vadd.f32 0.0, %v2871
        %v2873 = vpop.f32.mrf.mxu0
        %v2874 = vadd.f32 0.0, %v2873
        %v2875 = vpop.f32.mrf.mxu0
        %v2876 = vadd.f32 0.0, %v2875
        %2877 = vmatprep.mubr.bf16.mxu0 0
        %2878 = vmatmul.mubr.bf16.gmra.mxu0 %v1543
        %v2879 = vpop.f32.mrf.mxu0
        %v2880 = vadd.f32 0.0, %v2879
        %v2881 = vpop.f32.mrf.mxu0
        %v2882 = vadd.f32 0.0, %v2881
        %v2883 = vpop.f32.mrf.mxu0
        %v2884 = vadd.f32 0.0, %v2883
        %v2885 = vpop.f32.mrf.mxu0
        %v2886 = vadd.f32 0.0, %v2885
        %2887 = vmatprep.mubr.bf16.mxu0 0
        %2888 = vmatmul.mubr.bf16.gmra.mxu0 %v1544
        %v2889 = vpop.f32.mrf.mxu0
        %v2890 = vadd.f32 0.0, %v2889
        %v2891 = vpop.f32.mrf.mxu0
        %v2892 = vadd.f32 0.0, %v2891
        %v2893 = vpop.f32.mrf.mxu0
        %v2894 = vadd.f32 0.0, %v2893
        %v2895 = vpop.f32.mrf.mxu0
        %v2896 = vadd.f32 0.0, %v2895
        %2897 = vmatprep.mubr.bf16.mxu0 0
        %2898 = vmatmul.mubr.bf16.gmra.mxu0 %v1545
        %v2899 = vpop.f32.mrf.mxu0
        %v2900 = vadd.f32 0.0, %v2899
        %v2901 = vpop.f32.mrf.mxu0
        %v2902 = vadd.f32 0.0, %v2901
        %v2903 = vpop.f32.mrf.mxu0
        %v2904 = vadd.f32 0.0, %v2903
        %v2905 = vpop.f32.mrf.mxu0
        %v2906 = vadd.f32 0.0, %v2905
        %2907 = vmatprep.mubr.bf16.mxu0 0
        %2908 = vmatmul.mubr.bf16.gmra.mxu0 %v1546
        %v2909 = vpop.f32.mrf.mxu0
        %v2910 = vadd.f32 0.0, %v2909
        %v2911 = vpop.f32.mrf.mxu0
        %v2912 = vadd.f32 0.0, %v2911
        %v2913 = vpop.f32.mrf.mxu0
        %v2914 = vadd.f32 0.0, %v2913
        %v2915 = vpop.f32.mrf.mxu0
        %v2916 = vadd.f32 0.0, %v2915
        %2917 = vmatprep.mubr.bf16.mxu0 0
        %2918 = vmatmul.mubr.bf16.gmra.mxu0 %v1547
        %v2919 = vpop.f32.mrf.mxu0
        %v2920 = vadd.f32 0.0, %v2919
        %v2921 = vpop.f32.mrf.mxu0
        %v2922 = vadd.f32 0.0, %v2921
        %v2923 = vpop.f32.mrf.mxu0
        %v2924 = vadd.f32 0.0, %v2923
        %v2925 = vpop.f32.mrf.mxu0
        %v2926 = vadd.f32 0.0, %v2925
        %2927 = vmatprep.mubr.bf16.mxu0 0
        %2928 = vmatmul.mubr.bf16.gmra.mxu0 %v1548
        %v2929 = vpop.f32.mrf.mxu0
        %v2930 = vadd.f32 0.0, %v2929
        %v2931 = vpop.f32.mrf.mxu0
        %v2932 = vadd.f32 0.0, %v2931
        %v2933 = vpop.f32.mrf.mxu0
        %v2934 = vadd.f32 0.0, %v2933
        %v2935 = vpop.f32.mrf.mxu0
        %v2936 = vadd.f32 0.0, %v2935
        %2937 = vmatprep.mubr.bf16.mxu0 0
        %2938 = vmatmul.mubr.bf16.gmra.mxu0 %v1549
        %v2939 = vpop.f32.mrf.mxu0
        %v2940 = vadd.f32 0.0, %v2939
        %v2941 = vpop.f32.mrf.mxu0
        %v2942 = vadd.f32 0.0, %v2941
        %v2943 = vpop.f32.mrf.mxu0
        %v2944 = vadd.f32 0.0, %v2943
        %v2945 = vpop.f32.mrf.mxu0
        %v2946 = vadd.f32 0.0, %v2945
        %2947 = vmatprep.mubr.bf16.mxu0 0
        %2948 = vmatmul.mubr.bf16.gmra.mxu0 %v1550
        %v2949 = vpop.f32.mrf.mxu0
        %v2950 = vadd.f32 0.0, %v2949
        %v2951 = vpop.f32.mrf.mxu0
        %v2952 = vadd.f32 0.0, %v2951
        %v2953 = vpop.f32.mrf.mxu0
        %v2954 = vadd.f32 0.0, %v2953
        %v2955 = vpop.f32.mrf.mxu0
        %v2956 = vadd.f32 0.0, %v2955
        %2957 = vmatprep.mubr.bf16.mxu0 0
        %2958 = vmatmul.mubr.bf16.gmra.mxu0 %v1551
        %v2959 = vpop.f32.mrf.mxu0
        %v2960 = vadd.f32 0.0, %v2959
        %v2961 = vpop.f32.mrf.mxu0
        %v2962 = vadd.f32 0.0, %v2961
        %v2963 = vpop.f32.mrf.mxu0
        %v2964 = vadd.f32 0.0, %v2963
        %v2965 = vpop.f32.mrf.mxu0
        %v2966 = vadd.f32 0.0, %v2965
        %2967 = vmatprep.mubr.bf16.mxu0 0
        %2968 = vmatmul.mubr.bf16.gmra.mxu0 %v1552
        %v2969 = vpop.f32.mrf.mxu0
        %v2970 = vadd.f32 0.0, %v2969
        %v2971 = vpop.f32.mrf.mxu0
        %v2972 = vadd.f32 0.0, %v2971
        %v2973 = vpop.f32.mrf.mxu0
        %v2974 = vadd.f32 0.0, %v2973
        %v2975 = vpop.f32.mrf.mxu0
        %v2976 = vadd.f32 0.0, %v2975
        %2977 = vmatprep.mubr.bf16.mxu0 0
        %2978 = vmatmul.mubr.bf16.gmra.mxu0 %v1553
        %v2979 = vpop.f32.mrf.mxu0
        %v2980 = vadd.f32 0.0, %v2979
        %v2981 = vpop.f32.mrf.mxu0
        %v2982 = vadd.f32 0.0, %v2981
        %v2983 = vpop.f32.mrf.mxu0
        %v2984 = vadd.f32 0.0, %v2983
        %v2985 = vpop.f32.mrf.mxu0
        %v2986 = vadd.f32 0.0, %v2985
        %2987 = vmatprep.mubr.bf16.mxu0 0
        %2988 = vmatmul.mubr.bf16.gmra.mxu0 %v1554
        %v2989 = vpop.f32.mrf.mxu0
        %v2990 = vadd.f32 0.0, %v2989
        %v2991 = vpop.f32.mrf.mxu0
        %v2992 = vadd.f32 0.0, %v2991
        %v2993 = vpop.f32.mrf.mxu0
        %v2994 = vadd.f32 0.0, %v2993
        %v2995 = vpop.f32.mrf.mxu0
        %v2996 = vadd.f32 0.0, %v2995
        %2997 = vdwg.mxu0
        %2998 = vmatprep.subr.bf16.mxu0 %v1874
        %2999 = vmatpush1.bf16.msra.mxu0 %v1873
        %3000 = vmatprep.subr.bf16.mxu0 %v1866
        %3001 = vmatpush1.bf16.msra.mxu0 %v1865
        %3002 = vmatprep.subr.bf16.mxu0 %v1858
        %3003 = vmatpush1.bf16.msra.mxu0 %v1857
        %3004 = vmatprep.subr.bf16.mxu0 %v1850
        %3005 = vmatpush1.bf16.msra.mxu0 %v1849
        %3006 = vmatprep.subr.bf16.mxu0 %v1842
        %3007 = vmatpush1.bf16.msra.mxu0 %v1841
        %3008 = vmatprep.subr.bf16.mxu0 %v1834
        %3009 = vmatpush1.bf16.msra.mxu0 %v1833
        %3010 = vmatprep.subr.bf16.mxu0 %v1826
        %3011 = vmatpush1.bf16.msra.mxu0 %v1825
        %3012 = vmatprep.subr.bf16.mxu0 %v1818
        %3013 = vmatpush1.bf16.msra.mxu0 %v1817
        %3014 = vmatprep.subr.bf16.mxu0 0
        %3015 = vmatpush2.bf16.msra.mxu0 0
        %3016 = vmatprep.subr.bf16.mxu0 0
        %3017 = vmatpush2.bf16.msra.mxu0 0
        %3018 = vmatprep.subr.bf16.mxu0 0
        %3019 = vmatpush2.bf16.msra.mxu0 0
        %3020 = vmatprep.subr.bf16.mxu0 0
        %3021 = vmatpush2.bf16.msra.mxu0 0
        %3022 = vmatprep.subr.bf16.mxu0 0
        %3023 = vmatpush2.bf16.msra.mxu0 0
        %3024 = vmatprep.subr.bf16.mxu0 0
        %3025 = vmatpush2.bf16.msra.mxu0 0
        %3026 = vmatprep.subr.bf16.mxu0 0
        %3027 = vmatpush2.bf16.msra.mxu0 0
        %3028 = vmatprep.subr.bf16.mxu0 0
        %3029 = vmatpush2.bf16.msra.mxu0 0
        %3030 = vmatprep.mubr.bf16.mxu0 0
        %3031 = vmatmul.mubr.bf16.gmra.mxu0 %v1523
        %v3032 = vpop.f32.mrf.mxu0
        %v3033 = vadd.f32 0.0, %v3032
        %v3034 = vpop.f32.mrf.mxu0
        %v3035 = vadd.f32 0.0, %v3034
        %v3036 = vpop.f32.mrf.mxu0
        %v3037 = vadd.f32 0.0, %v3036
        %v3038 = vpop.f32.mrf.mxu0
        %v3039 = vadd.f32 0.0, %v3038
        %3040 = vmatprep.mubr.bf16.mxu0 0
        %3041 = vmatmul.mubr.bf16.gmra.mxu0 %v1524
        %v3042 = vpop.f32.mrf.mxu0
        %v3043 = vadd.f32 0.0, %v3042
        %v3044 = vpop.f32.mrf.mxu0
        %v3045 = vadd.f32 0.0, %v3044
        %v3046 = vpop.f32.mrf.mxu0
        %v3047 = vadd.f32 0.0, %v3046
        %v3048 = vpop.f32.mrf.mxu0
        %v3049 = vadd.f32 0.0, %v3048
        %3050 = vmatprep.mubr.bf16.mxu0 0
        %3051 = vmatmul.mubr.bf16.gmra.mxu0 %v1525
        %v3052 = vpop.f32.mrf.mxu0
        %v3053 = vadd.f32 0.0, %v3052
        %v3054 = vpop.f32.mrf.mxu0
        %v3055 = vadd.f32 0.0, %v3054
        %v3056 = vpop.f32.mrf.mxu0
        %v3057 = vadd.f32 0.0, %v3056
        %v3058 = vpop.f32.mrf.mxu0
        %v3059 = vadd.f32 0.0, %v3058
        %3060 = vmatprep.mubr.bf16.mxu0 0
        %3061 = vmatmul.mubr.bf16.gmra.mxu0 %v1526
        %v3062 = vpop.f32.mrf.mxu0
        %v3063 = vadd.f32 0.0, %v3062
        %v3064 = vpop.f32.mrf.mxu0
        %v3065 = vadd.f32 0.0, %v3064
        %v3066 = vpop.f32.mrf.mxu0
        %v3067 = vadd.f32 0.0, %v3066
        %v3068 = vpop.f32.mrf.mxu0
        %v3069 = vadd.f32 0.0, %v3068
        %3070 = vmatprep.mubr.bf16.mxu0 0
        %3071 = vmatmul.mubr.bf16.gmra.mxu0 %v1527
        %v3072 = vpop.f32.mrf.mxu0
        %v3073 = vadd.f32 0.0, %v3072
        %v3074 = vpop.f32.mrf.mxu0
        %v3075 = vadd.f32 0.0, %v3074
        %v3076 = vpop.f32.mrf.mxu0
        %v3077 = vadd.f32 0.0, %v3076
        %v3078 = vpop.f32.mrf.mxu0
        %v3079 = vadd.f32 0.0, %v3078
        %3080 = vmatprep.mubr.bf16.mxu0 0
        %3081 = vmatmul.mubr.bf16.gmra.mxu0 %v1528
        %v3082 = vpop.f32.mrf.mxu0
        %v3083 = vadd.f32 0.0, %v3082
        %v3084 = vpop.f32.mrf.mxu0
        %v3085 = vadd.f32 0.0, %v3084
        %v3086 = vpop.f32.mrf.mxu0
        %v3087 = vadd.f32 0.0, %v3086
        %v3088 = vpop.f32.mrf.mxu0
        %v3089 = vadd.f32 0.0, %v3088
        %3090 = vmatprep.mubr.bf16.mxu0 0
        %3091 = vmatmul.mubr.bf16.gmra.mxu0 %v1529
        %v3092 = vpop.f32.mrf.mxu0
        %v3093 = vadd.f32 0.0, %v3092
        %v3094 = vpop.f32.mrf.mxu0
        %v3095 = vadd.f32 0.0, %v3094
        %v3096 = vpop.f32.mrf.mxu0
        %v3097 = vadd.f32 0.0, %v3096
        %v3098 = vpop.f32.mrf.mxu0
        %v3099 = vadd.f32 0.0, %v3098
        %3100 = vmatprep.mubr.bf16.mxu0 0
        %3101 = vmatmul.mubr.bf16.gmra.mxu0 %v1530
        %v3102 = vpop.f32.mrf.mxu0
        %v3103 = vadd.f32 0.0, %v3102
        %v3104 = vpop.f32.mrf.mxu0
        %v3105 = vadd.f32 0.0, %v3104
        %v3106 = vpop.f32.mrf.mxu0
        %v3107 = vadd.f32 0.0, %v3106
        %v3108 = vpop.f32.mrf.mxu0
        %v3109 = vadd.f32 0.0, %v3108
        %3110 = vmatprep.mubr.bf16.mxu0 0
        %3111 = vmatmul.mubr.bf16.gmra.mxu0 %v1531
        %v3112 = vpop.f32.mrf.mxu0
        %v3113 = vadd.f32 0.0, %v3112
        %v3114 = vpop.f32.mrf.mxu0
        %v3115 = vadd.f32 0.0, %v3114
        %v3116 = vpop.f32.mrf.mxu0
        %v3117 = vadd.f32 0.0, %v3116
        %v3118 = vpop.f32.mrf.mxu0
        %v3119 = vadd.f32 0.0, %v3118
        %3120 = vmatprep.mubr.bf16.mxu0 0
        %3121 = vmatmul.mubr.bf16.gmra.mxu0 %v1532
        %v3122 = vpop.f32.mrf.mxu0
        %v3123 = vadd.f32 0.0, %v3122
        %v3124 = vpop.f32.mrf.mxu0
        %v3125 = vadd.f32 0.0, %v3124
        %v3126 = vpop.f32.mrf.mxu0
        %v3127 = vadd.f32 0.0, %v3126
        %v3128 = vpop.f32.mrf.mxu0
        %v3129 = vadd.f32 0.0, %v3128
        %3130 = vmatprep.mubr.bf16.mxu0 0
        %3131 = vmatmul.mubr.bf16.gmra.mxu0 %v1533
        %v3132 = vpop.f32.mrf.mxu0
        %v3133 = vadd.f32 0.0, %v3132
        %v3134 = vpop.f32.mrf.mxu0
        %v3135 = vadd.f32 0.0, %v3134
        %v3136 = vpop.f32.mrf.mxu0
        %v3137 = vadd.f32 0.0, %v3136
        %v3138 = vpop.f32.mrf.mxu0
        %v3139 = vadd.f32 0.0, %v3138
        %3140 = vmatprep.mubr.bf16.mxu0 0
        %3141 = vmatmul.mubr.bf16.gmra.mxu0 %v1534
        %v3142 = vpop.f32.mrf.mxu0
        %v3143 = vadd.f32 0.0, %v3142
        %v3144 = vpop.f32.mrf.mxu0
        %v3145 = vadd.f32 0.0, %v3144
        %v3146 = vpop.f32.mrf.mxu0
        %v3147 = vadd.f32 0.0, %v3146
        %v3148 = vpop.f32.mrf.mxu0
        %v3149 = vadd.f32 0.0, %v3148
        %3150 = vmatprep.mubr.bf16.mxu0 0
        %3151 = vmatmul.mubr.bf16.gmra.mxu0 %v1535
        %v3152 = vpop.f32.mrf.mxu0
        %v3153 = vadd.f32 0.0, %v3152
        %v3154 = vpop.f32.mrf.mxu0
        %v3155 = vadd.f32 0.0, %v3154
        %v3156 = vpop.f32.mrf.mxu0
        %v3157 = vadd.f32 0.0, %v3156
        %v3158 = vpop.f32.mrf.mxu0
        %v3159 = vadd.f32 0.0, %v3158
        %3160 = vmatprep.mubr.bf16.mxu0 0
        %3161 = vmatmul.mubr.bf16.gmra.mxu0 %v1536
        %v3162 = vpop.f32.mrf.mxu0
        %v3163 = vadd.f32 0.0, %v3162
        %v3164 = vpop.f32.mrf.mxu0
        %v3165 = vadd.f32 0.0, %v3164
        %v3166 = vpop.f32.mrf.mxu0
        %v3167 = vadd.f32 0.0, %v3166
        %v3168 = vpop.f32.mrf.mxu0
        %v3169 = vadd.f32 0.0, %v3168
        %3170 = vmatprep.mubr.bf16.mxu0 0
        %3171 = vmatmul.mubr.bf16.gmra.mxu0 %v1537
        %v3172 = vpop.f32.mrf.mxu0
        %v3173 = vadd.f32 0.0, %v3172
        %v3174 = vpop.f32.mrf.mxu0
        %v3175 = vadd.f32 0.0, %v3174
        %v3176 = vpop.f32.mrf.mxu0
        %v3177 = vadd.f32 0.0, %v3176
        %v3178 = vpop.f32.mrf.mxu0
        %v3179 = vadd.f32 0.0, %v3178
        %3180 = vmatprep.mubr.bf16.mxu0 0
        %3181 = vmatmul.mubr.bf16.gmra.mxu0 %v1538
        %v3182 = vpop.f32.mrf.mxu0
        %v3183 = vadd.f32 0.0, %v3182
        %v3184 = vpop.f32.mrf.mxu0
        %v3185 = vadd.f32 0.0, %v3184
        %v3186 = vpop.f32.mrf.mxu0
        %v3187 = vadd.f32 0.0, %v3186
        %v3188 = vpop.f32.mrf.mxu0
        %v3189 = vadd.f32 0.0, %v3188
        %3190 = vmatprep.mubr.bf16.mxu0 0
        %3191 = vmatmul.mubr.bf16.gmra.mxu0 %v1539
        %v3192 = vpop.f32.mrf.mxu0
        %v3193 = vadd.f32 0.0, %v3192
        %v3194 = vpop.f32.mrf.mxu0
        %v3195 = vadd.f32 0.0, %v3194
        %v3196 = vpop.f32.mrf.mxu0
        %v3197 = vadd.f32 0.0, %v3196
        %v3198 = vpop.f32.mrf.mxu0
        %v3199 = vadd.f32 0.0, %v3198
        %3200 = vmatprep.mubr.bf16.mxu0 0
        %3201 = vmatmul.mubr.bf16.gmra.mxu0 %v1540
        %v3202 = vpop.f32.mrf.mxu0
        %v3203 = vadd.f32 0.0, %v3202
        %v3204 = vpop.f32.mrf.mxu0
        %v3205 = vadd.f32 0.0, %v3204
        %v3206 = vpop.f32.mrf.mxu0
        %v3207 = vadd.f32 0.0, %v3206
        %v3208 = vpop.f32.mrf.mxu0
        %v3209 = vadd.f32 0.0, %v3208
        %3210 = vmatprep.mubr.bf16.mxu0 0
        %3211 = vmatmul.mubr.bf16.gmra.mxu0 %v1541
        %v3212 = vpop.f32.mrf.mxu0
        %v3213 = vadd.f32 0.0, %v3212
        %v3214 = vpop.f32.mrf.mxu0
        %v3215 = vadd.f32 0.0, %v3214
        %v3216 = vpop.f32.mrf.mxu0
        %v3217 = vadd.f32 0.0, %v3216
        %v3218 = vpop.f32.mrf.mxu0
        %v3219 = vadd.f32 0.0, %v3218
        %3220 = vmatprep.mubr.bf16.mxu0 0
        %3221 = vmatmul.mubr.bf16.gmra.mxu0 %v1542
        %v3222 = vpop.f32.mrf.mxu0
        %v3223 = vadd.f32 0.0, %v3222
        %v3224 = vpop.f32.mrf.mxu0
        %v3225 = vadd.f32 0.0, %v3224
        %v3226 = vpop.f32.mrf.mxu0
        %v3227 = vadd.f32 0.0, %v3226
        %v3228 = vpop.f32.mrf.mxu0
        %v3229 = vadd.f32 0.0, %v3228
        %3230 = vmatprep.mubr.bf16.mxu0 0
        %3231 = vmatmul.mubr.bf16.gmra.mxu0 %v1543
        %v3232 = vpop.f32.mrf.mxu0
        %v3233 = vadd.f32 0.0, %v3232
        %v3234 = vpop.f32.mrf.mxu0
        %v3235 = vadd.f32 0.0, %v3234
        %v3236 = vpop.f32.mrf.mxu0
        %v3237 = vadd.f32 0.0, %v3236
        %v3238 = vpop.f32.mrf.mxu0
        %v3239 = vadd.f32 0.0, %v3238
        %3240 = vmatprep.mubr.bf16.mxu0 0
        %3241 = vmatmul.mubr.bf16.gmra.mxu0 %v1544
        %v3242 = vpop.f32.mrf.mxu0
        %v3243 = vadd.f32 0.0, %v3242
        %v3244 = vpop.f32.mrf.mxu0
        %v3245 = vadd.f32 0.0, %v3244
        %v3246 = vpop.f32.mrf.mxu0
        %v3247 = vadd.f32 0.0, %v3246
        %v3248 = vpop.f32.mrf.mxu0
        %v3249 = vadd.f32 0.0, %v3248
        %3250 = vmatprep.mubr.bf16.mxu0 0
        %3251 = vmatmul.mubr.bf16.gmra.mxu0 %v1545
        %v3252 = vpop.f32.mrf.mxu0
        %v3253 = vadd.f32 0.0, %v3252
        %v3254 = vpop.f32.mrf.mxu0
        %v3255 = vadd.f32 0.0, %v3254
        %v3256 = vpop.f32.mrf.mxu0
        %v3257 = vadd.f32 0.0, %v3256
        %v3258 = vpop.f32.mrf.mxu0
        %v3259 = vadd.f32 0.0, %v3258
        %3260 = vmatprep.mubr.bf16.mxu0 0
        %3261 = vmatmul.mubr.bf16.gmra.mxu0 %v1546
        %v3262 = vpop.f32.mrf.mxu0
        %v3263 = vadd.f32 0.0, %v3262
        %v3264 = vpop.f32.mrf.mxu0
        %v3265 = vadd.f32 0.0, %v3264
        %v3266 = vpop.f32.mrf.mxu0
        %v3267 = vadd.f32 0.0, %v3266
        %v3268 = vpop.f32.mrf.mxu0
        %v3269 = vadd.f32 0.0, %v3268
        %3270 = vmatprep.mubr.bf16.mxu0 0
        %3271 = vmatmul.mubr.bf16.gmra.mxu0 %v1547
        %v3272 = vpop.f32.mrf.mxu0
        %v3273 = vadd.f32 0.0, %v3272
        %v3274 = vpop.f32.mrf.mxu0
        %v3275 = vadd.f32 0.0, %v3274
        %v3276 = vpop.f32.mrf.mxu0
        %v3277 = vadd.f32 0.0, %v3276
        %v3278 = vpop.f32.mrf.mxu0
        %v3279 = vadd.f32 0.0, %v3278
        %3280 = vmatprep.mubr.bf16.mxu0 0
        %3281 = vmatmul.mubr.bf16.gmra.mxu0 %v1548
        %v3282 = vpop.f32.mrf.mxu0
        %v3283 = vadd.f32 0.0, %v3282
        %v3284 = vpop.f32.mrf.mxu0
        %v3285 = vadd.f32 0.0, %v3284
        %v3286 = vpop.f32.mrf.mxu0
        %v3287 = vadd.f32 0.0, %v3286
        %v3288 = vpop.f32.mrf.mxu0
        %v3289 = vadd.f32 0.0, %v3288
        %3290 = vmatprep.mubr.bf16.mxu0 0
        %3291 = vmatmul.mubr.bf16.gmra.mxu0 %v1549
        %v3292 = vpop.f32.mrf.mxu0
        %v3293 = vadd.f32 0.0, %v3292
        %v3294 = vpop.f32.mrf.mxu0
        %v3295 = vadd.f32 0.0, %v3294
        %v3296 = vpop.f32.mrf.mxu0
        %v3297 = vadd.f32 0.0, %v3296
        %v3298 = vpop.f32.mrf.mxu0
        %v3299 = vadd.f32 0.0, %v3298
        %3300 = vmatprep.mubr.bf16.mxu0 0
        %3301 = vmatmul.mubr.bf16.gmra.mxu0 %v1550
        %v3302 = vpop.f32.mrf.mxu0
        %v3303 = vadd.f32 0.0, %v3302
        %v3304 = vpop.f32.mrf.mxu0
        %v3305 = vadd.f32 0.0, %v3304
        %v3306 = vpop.f32.mrf.mxu0
        %v3307 = vadd.f32 0.0, %v3306
        %v3308 = vpop.f32.mrf.mxu0
        %v3309 = vadd.f32 0.0, %v3308
        %3310 = vmatprep.mubr.bf16.mxu0 0
        %3311 = vmatmul.mubr.bf16.gmra.mxu0 %v1551
        %v3312 = vpop.f32.mrf.mxu0
        %v3313 = vadd.f32 0.0, %v3312
        %v3314 = vpop.f32.mrf.mxu0
        %v3315 = vadd.f32 0.0, %v3314
        %v3316 = vpop.f32.mrf.mxu0
        %v3317 = vadd.f32 0.0, %v3316
        %v3318 = vpop.f32.mrf.mxu0
        %v3319 = vadd.f32 0.0, %v3318
        %3320 = vmatprep.mubr.bf16.mxu0 0
        %3321 = vmatmul.mubr.bf16.gmra.mxu0 %v1552
        %v3322 = vpop.f32.mrf.mxu0
        %v3323 = vadd.f32 0.0, %v3322
        %v3324 = vpop.f32.mrf.mxu0
        %v3325 = vadd.f32 0.0, %v3324
        %v3326 = vpop.f32.mrf.mxu0
        %v3327 = vadd.f32 0.0, %v3326
        %v3328 = vpop.f32.mrf.mxu0
        %v3329 = vadd.f32 0.0, %v3328
        %3330 = vmatprep.mubr.bf16.mxu0 0
        %3331 = vmatmul.mubr.bf16.gmra.mxu0 %v1553
        %v3332 = vpop.f32.mrf.mxu0
        %v3333 = vadd.f32 0.0, %v3332
        %v3334 = vpop.f32.mrf.mxu0
        %v3335 = vadd.f32 0.0, %v3334
        %v3336 = vpop.f32.mrf.mxu0
        %v3337 = vadd.f32 0.0, %v3336
        %v3338 = vpop.f32.mrf.mxu0
        %v3339 = vadd.f32 0.0, %v3338
        %3340 = vmatprep.mubr.bf16.mxu0 0
        %3341 = vmatmul.mubr.bf16.gmra.mxu0 %v1554
        %v3342 = vpop.f32.mrf.mxu0
        %v3343 = vadd.f32 0.0, %v3342
        %v3344 = vpop.f32.mrf.mxu0
        %v3345 = vadd.f32 0.0, %v3344
        %v3346 = vpop.f32.mrf.mxu0
        %v3347 = vadd.f32 0.0, %v3346
        %v3348 = vpop.f32.mrf.mxu0
        %v3349 = vadd.f32 0.0, %v3348
        %3350 = vdwg.mxu0
        // Predicated region
        $region49: #{tpu_custom_call.1} parent=43 // pred_check
          %p3351 = pneg %p311
        $region50: #{tpu_custom_call.1} parent=43 // pred_check_branch
          %3353 = sbr.rel (%p3351) target = $region52
        $region51: #{tpu_custom_call.1} parent=43 // pred_region
          %v3354 = vlaneseq
          %v3355 = vshrl.u32 %v3354, 7
          %v3356 = vadd.s32 %v3355, 8
          %v3357 = vadd.s32 %v3355, 16
          %v3358 = vadd.s32 %v3355, 24
          %v3359 = vadd.s32 %v3355, 32
          %v3360 = vadd.s32 %v3355, 40
          %v3361 = vadd.s32 %v3355, 48
          %v3362 = vadd.s32 %v3355, 56
          %v3363 = vadd.s32 %v3355, 64
          %v3364 = vadd.s32 %v3355, 72
          %v3365 = vadd.s32 %v3355, 80
          %v3366 = vadd.s32 %v3355, 88
          %v3367 = vadd.s32 %v3355, 96
          %v3368 = vadd.s32 %v3355, 104
          %v3369 = vadd.s32 %v3355, 112
          %v3370 = vadd.s32 %v3355, 120
          %v3371 = vadd.s32 %v3355, 128
          %v3372 = vadd.s32 %v3355, 136
          %v3373 = vadd.s32 %v3355, 144
          %v3374 = vadd.s32 %v3355, 152
          %v3375 = vadd.s32 %v3355, 160
          %v3376 = vadd.s32 %v3355, 168
          %v3377 = vadd.s32 %v3355, 176
          %v3378 = vadd.s32 %v3355, 184
          %v3379 = vadd.s32 %v3355, 192
          %v3380 = vadd.s32 %v3355, 200
          %v3381 = vadd.s32 %v3355, 208
          %v3382 = vadd.s32 %v3355, 216
          %v3383 = vadd.s32 %v3355, 224
          %v3384 = vadd.s32 %v3355, 232
          %v3385 = vadd.s32 %v3355, 240
          %v3386 = vadd.s32 %v3355, 248
          %v3387 = vadd.s32 %v3355, 256
          %v3388 = vadd.s32 %v3355, 264
          %v3389 = vadd.s32 %v3355, 272
          %v3390 = vadd.s32 %v3355, 280
          %v3391 = vadd.s32 %v3355, 288
          %v3392 = vadd.s32 %v3355, 296
          %v3393 = vadd.s32 %v3355, 304
          %v3394 = vadd.s32 %v3355, 312
          %v3395 = vadd.s32 %v3355, 320
          %v3396 = vadd.s32 %v3355, 328
          %v3397 = vadd.s32 %v3355, 336
          %v3398 = vadd.s32 %v3355, 344
          %v3399 = vadd.s32 %v3355, 352
          %v3400 = vadd.s32 %v3355, 360
          %v3401 = vadd.s32 %v3355, 368
          %v3402 = vadd.s32 %v3355, 376
          %v3403 = vadd.s32 %v3355, 384
          %v3404 = vadd.s32 %v3355, 392
          %v3405 = vadd.s32 %v3355, 400
          %v3406 = vadd.s32 %v3355, 408
          %v3407 = vadd.s32 %v3355, 416
          %v3408 = vadd.s32 %v3355, 424
          %v3409 = vadd.s32 %v3355, 432
          %v3410 = vadd.s32 %v3355, 440
          %v3411 = vadd.s32 %v3355, 448
          %v3412 = vadd.s32 %v3355, 456
          %v3413 = vadd.s32 %v3355, 464
          %v3414 = vadd.s32 %v3355, 472
          %v3415 = vadd.s32 %v3355, 480
          %v3416 = vadd.s32 %v3355, 488
          %v3417 = vadd.s32 %v3355, 496
          %v3418 = vadd.s32 %v3355, 504
          %vm3419 = vcmp.lt.s32.totalorder %v3355, 300
          %vm3420 = vcmp.lt.s32.totalorder %v3356, 300
          %vm3421 = vcmp.lt.s32.totalorder %v3357, 300
          %vm3422 = vcmp.lt.s32.totalorder %v3358, 300
          %vm3423 = vcmp.lt.s32.totalorder %v3359, 300
          %vm3424 = vcmp.lt.s32.totalorder %v3360, 300
          %vm3425 = vcmp.lt.s32.totalorder %v3361, 300
          %vm3426 = vcmp.lt.s32.totalorder %v3362, 300
          %vm3427 = vcmp.lt.s32.totalorder %v3363, 300
          %vm3428 = vcmp.lt.s32.totalorder %v3364, 300
          %vm3429 = vcmp.lt.s32.totalorder %v3365, 300
          %vm3430 = vcmp.lt.s32.totalorder %v3366, 300
          %vm3431 = vcmp.lt.s32.totalorder %v3367, 300
          %vm3432 = vcmp.lt.s32.totalorder %v3368, 300
          %vm3433 = vcmp.lt.s32.totalorder %v3369, 300
          %vm3434 = vcmp.lt.s32.totalorder %v3370, 300
          %vm3435 = vcmp.lt.s32.totalorder %v3371, 300
          %vm3436 = vcmp.lt.s32.totalorder %v3372, 300
          %vm3437 = vcmp.lt.s32.totalorder %v3373, 300
          %vm3438 = vcmp.lt.s32.totalorder %v3374, 300
          %vm3439 = vcmp.lt.s32.totalorder %v3375, 300
          %vm3440 = vcmp.lt.s32.totalorder %v3376, 300
          %vm3441 = vcmp.lt.s32.totalorder %v3377, 300
          %vm3442 = vcmp.lt.s32.totalorder %v3378, 300
          %vm3443 = vcmp.lt.s32.totalorder %v3379, 300
          %vm3444 = vcmp.lt.s32.totalorder %v3380, 300
          %vm3445 = vcmp.lt.s32.totalorder %v3381, 300
          %vm3446 = vcmp.lt.s32.totalorder %v3382, 300
          %vm3447 = vcmp.lt.s32.totalorder %v3383, 300
          %vm3448 = vcmp.lt.s32.totalorder %v3384, 300
          %vm3449 = vcmp.lt.s32.totalorder %v3385, 300
          %vm3450 = vcmp.lt.s32.totalorder %v3386, 300
          %vm3451 = vcmp.lt.s32.totalorder %v3387, 300
          %vm3452 = vcmp.lt.s32.totalorder %v3388, 300
          %vm3453 = vcmp.lt.s32.totalorder %v3389, 300
          %vm3454 = vcmp.lt.s32.totalorder %v3390, 300
          %vm3455 = vcmp.lt.s32.totalorder %v3391, 300
          %vm3456 = vcmp.lt.s32.totalorder %v3392, 300
          %vm3457 = vcmp.lt.s32.totalorder %v3393, 300
          %vm3458 = vcmp.lt.s32.totalorder %v3394, 300
          %vm3459 = vcmp.lt.s32.totalorder %v3395, 300
          %vm3460 = vcmp.lt.s32.totalorder %v3396, 300
          %vm3461 = vcmp.lt.s32.totalorder %v3397, 300
          %vm3462 = vcmp.lt.s32.totalorder %v3398, 300
          %vm3463 = vcmp.lt.s32.totalorder %v3399, 300
          %vm3464 = vcmp.lt.s32.totalorder %v3400, 300
          %vm3465 = vcmp.lt.s32.totalorder %v3401, 300
          %vm3466 = vcmp.lt.s32.totalorder %v3402, 300
          %vm3467 = vcmp.lt.s32.totalorder %v3403, 300
          %vm3468 = vcmp.lt.s32.totalorder %v3404, 300
          %vm3469 = vcmp.lt.s32.totalorder %v3405, 300
          %vm3470 = vcmp.lt.s32.totalorder %v3406, 300
          %vm3471 = vcmp.lt.s32.totalorder %v3407, 300
          %vm3472 = vcmp.lt.s32.totalorder %v3408, 300
          %vm3473 = vcmp.lt.s32.totalorder %v3409, 300
          %vm3474 = vcmp.lt.s32.totalorder %v3410, 300
          %vm3475 = vcmp.lt.s32.totalorder %v3411, 300
          %vm3476 = vcmp.lt.s32.totalorder %v3412, 300
          %vm3477 = vcmp.lt.s32.totalorder %v3413, 300
          %vm3478 = vcmp.lt.s32.totalorder %v3414, 300
          %vm3479 = vcmp.lt.s32.totalorder %v3415, 300
          %vm3480 = vcmp.lt.s32.totalorder %v3416, 300
          %vm3481 = vcmp.lt.s32.totalorder %v3417, 300
          %vm3482 = vcmp.lt.s32.totalorder %v3418, 300
          %v3483 = vsel %vm3419, 1, 0
          %v3484 = vsel %vm3420, 1, 0
          %v3485 = vsel %vm3421, 1, 0
          %v3486 = vsel %vm3422, 1, 0
          %v3487 = vsel %vm3423, 1, 0
          %v3488 = vsel %vm3424, 1, 0
          %v3489 = vsel %vm3425, 1, 0
          %v3490 = vsel %vm3426, 1, 0
          %v3491 = vsel %vm3427, 1, 0
          %v3492 = vsel %vm3428, 1, 0
          %v3493 = vsel %vm3429, 1, 0
          %v3494 = vsel %vm3430, 1, 0
          %v3495 = vsel %vm3431, 1, 0
          %v3496 = vsel %vm3432, 1, 0
          %v3497 = vsel %vm3433, 1, 0
          %v3498 = vsel %vm3434, 1, 0
          %v3499 = vsel %vm3435, 1, 0
          %v3500 = vsel %vm3436, 1, 0
          %v3501 = vsel %vm3437, 1, 0
          %v3502 = vsel %vm3438, 1, 0
          %v3503 = vsel %vm3439, 1, 0
          %v3504 = vsel %vm3440, 1, 0
          %v3505 = vsel %vm3441, 1, 0
          %v3506 = vsel %vm3442, 1, 0
          %v3507 = vsel %vm3443, 1, 0
          %v3508 = vsel %vm3444, 1, 0
          %v3509 = vsel %vm3445, 1, 0
          %v3510 = vsel %vm3446, 1, 0
          %v3511 = vsel %vm3447, 1, 0
          %v3512 = vsel %vm3448, 1, 0
          %v3513 = vsel %vm3449, 1, 0
          %v3514 = vsel %vm3450, 1, 0
          %v3515 = vsel %vm3451, 1, 0
          %v3516 = vsel %vm3452, 1, 0
          %v3517 = vsel %vm3453, 1, 0
          %v3518 = vsel %vm3454, 1, 0
          %v3519 = vsel %vm3455, 1, 0
          %v3520 = vsel %vm3456, 1, 0
          %v3521 = vsel %vm3457, 1, 0
          %v3522 = vsel %vm3458, 1, 0
          %v3523 = vsel %vm3459, 1, 0
          %v3524 = vsel %vm3460, 1, 0
          %v3525 = vsel %vm3461, 1, 0
          %v3526 = vsel %vm3462, 1, 0
          %v3527 = vsel %vm3463, 1, 0
          %v3528 = vsel %vm3464, 1, 0
          %v3529 = vsel %vm3465, 1, 0
          %v3530 = vsel %vm3466, 1, 0
          %v3531 = vsel %vm3467, 1, 0
          %v3532 = vsel %vm3468, 1, 0
          %v3533 = vsel %vm3469, 1, 0
          %v3534 = vsel %vm3470, 1, 0
          %v3535 = vsel %vm3471, 1, 0
          %v3536 = vsel %vm3472, 1, 0
          %v3537 = vsel %vm3473, 1, 0
          %v3538 = vsel %vm3474, 1, 0
          %v3539 = vsel %vm3475, 1, 0
          %v3540 = vsel %vm3476, 1, 0
          %v3541 = vsel %vm3477, 1, 0
          %v3542 = vsel %vm3478, 1, 0
          %v3543 = vsel %vm3479, 1, 0
          %v3544 = vsel %vm3480, 1, 0
          %v3545 = vsel %vm3481, 1, 0
          %v3546 = vsel %vm3482, 1, 0
          %vm3547 = vcmp.eq.s32.totalorder %v3483, 1
          %vm3548 = vcmp.eq.s32.totalorder %v3484, 1
          %vm3549 = vcmp.eq.s32.totalorder %v3485, 1
          %vm3550 = vcmp.eq.s32.totalorder %v3486, 1
          %vm3551 = vcmp.eq.s32.totalorder %v3487, 1
          %vm3552 = vcmp.eq.s32.totalorder %v3488, 1
          %vm3553 = vcmp.eq.s32.totalorder %v3489, 1
          %vm3554 = vcmp.eq.s32.totalorder %v3490, 1
          %vm3555 = vcmp.eq.s32.totalorder %v3491, 1
          %vm3556 = vcmp.eq.s32.totalorder %v3492, 1
          %vm3557 = vcmp.eq.s32.totalorder %v3493, 1
          %vm3558 = vcmp.eq.s32.totalorder %v3494, 1
          %vm3559 = vcmp.eq.s32.totalorder %v3495, 1
          %vm3560 = vcmp.eq.s32.totalorder %v3496, 1
          %vm3561 = vcmp.eq.s32.totalorder %v3497, 1
          %vm3562 = vcmp.eq.s32.totalorder %v3498, 1
          %vm3563 = vcmp.eq.s32.totalorder %v3499, 1
          %vm3564 = vcmp.eq.s32.totalorder %v3500, 1
          %vm3565 = vcmp.eq.s32.totalorder %v3501, 1
          %vm3566 = vcmp.eq.s32.totalorder %v3502, 1
          %vm3567 = vcmp.eq.s32.totalorder %v3503, 1
          %vm3568 = vcmp.eq.s32.totalorder %v3504, 1
          %vm3569 = vcmp.eq.s32.totalorder %v3505, 1
          %vm3570 = vcmp.eq.s32.totalorder %v3506, 1
          %vm3571 = vcmp.eq.s32.totalorder %v3507, 1
          %vm3572 = vcmp.eq.s32.totalorder %v3508, 1
          %vm3573 = vcmp.eq.s32.totalorder %v3509, 1
          %vm3574 = vcmp.eq.s32.totalorder %v3510, 1
          %vm3575 = vcmp.eq.s32.totalorder %v3511, 1
          %vm3576 = vcmp.eq.s32.totalorder %v3512, 1
          %vm3577 = vcmp.eq.s32.totalorder %v3513, 1
          %vm3578 = vcmp.eq.s32.totalorder %v3514, 1
          %vm3579 = vcmp.eq.s32.totalorder %v3515, 1
          %vm3580 = vcmp.eq.s32.totalorder %v3516, 1
          %vm3581 = vcmp.eq.s32.totalorder %v3517, 1
          %vm3582 = vcmp.eq.s32.totalorder %v3518, 1
          %vm3583 = vcmp.eq.s32.totalorder %v3519, 1
          %vm3584 = vcmp.eq.s32.totalorder %v3520, 1
          %vm3585 = vcmp.eq.s32.totalorder %v3521, 1
          %vm3586 = vcmp.eq.s32.totalorder %v3522, 1
          %vm3587 = vcmp.eq.s32.totalorder %v3523, 1
          %vm3588 = vcmp.eq.s32.totalorder %v3524, 1
          %vm3589 = vcmp.eq.s32.totalorder %v3525, 1
          %vm3590 = vcmp.eq.s32.totalorder %v3526, 1
          %vm3591 = vcmp.eq.s32.totalorder %v3527, 1
          %vm3592 = vcmp.eq.s32.totalorder %v3528, 1
          %vm3593 = vcmp.eq.s32.totalorder %v3529, 1
          %vm3594 = vcmp.eq.s32.totalorder %v3530, 1
          %vm3595 = vcmp.eq.s32.totalorder %v3531, 1
          %vm3596 = vcmp.eq.s32.totalorder %v3532, 1
          %vm3597 = vcmp.eq.s32.totalorder %v3533, 1
          %vm3598 = vcmp.eq.s32.totalorder %v3534, 1
          %vm3599 = vcmp.eq.s32.totalorder %v3535, 1
          %vm3600 = vcmp.eq.s32.totalorder %v3536, 1
          %vm3601 = vcmp.eq.s32.totalorder %v3537, 1
          %vm3602 = vcmp.eq.s32.totalorder %v3538, 1
          %vm3603 = vcmp.eq.s32.totalorder %v3539, 1
          %vm3604 = vcmp.eq.s32.totalorder %v3540, 1
          %vm3605 = vcmp.eq.s32.totalorder %v3541, 1
          %vm3606 = vcmp.eq.s32.totalorder %v3542, 1
          %vm3607 = vcmp.eq.s32.totalorder %v3543, 1
          %vm3608 = vcmp.eq.s32.totalorder %v3544, 1
          %vm3609 = vcmp.eq.s32.totalorder %v3545, 1
          %vm3610 = vcmp.eq.s32.totalorder %v3546, 1
          %v3611 = vsel %vm3547, %v1974, -inf
          %v3612 = vsel %vm3547, %v1976, -inf
          %v3613 = vsel %vm3547, %v2327, -inf
          %v3614 = vsel %vm3547, %v2329, -inf
          %v3615 = vsel %vm3547, %v2680, -inf
          %v3616 = vsel %vm3547, %v2682, -inf
          %v3617 = vsel %vm3547, %v3033, -inf
          %v3618 = vsel %vm3547, %v3035, -inf
          %v3619 = vsel %vm3548, %v1978, -inf
          %v3620 = vsel %vm3548, %v1980, -inf
          %v3621 = vsel %vm3548, %v2331, -inf
          %v3622 = vsel %vm3548, %v2333, -inf
          %v3623 = vsel %vm3548, %v2684, -inf
          %v3624 = vsel %vm3548, %v2686, -inf
          %v3625 = vsel %vm3548, %v3037, -inf
          %v3626 = vsel %vm3548, %v3039, -inf
          %v3627 = vsel %vm3549, %v1984, -inf
          %v3628 = vsel %vm3549, %v1986, -inf
          %v3629 = vsel %vm3549, %v2337, -inf
          %v3630 = vsel %vm3549, %v2339, -inf
          %v3631 = vsel %vm3549, %v2690, -inf
          %v3632 = vsel %vm3549, %v2692, -inf
          %v3633 = vsel %vm3549, %v3043, -inf
          %v3634 = vsel %vm3549, %v3045, -inf
          %v3635 = vsel %vm3550, %v1988, -inf
          %v3636 = vsel %vm3550, %v1990, -inf
          %v3637 = vsel %vm3550, %v2341, -inf
          %v3638 = vsel %vm3550, %v2343, -inf
          %v3639 = vsel %vm3550, %v2694, -inf
          %v3640 = vsel %vm3550, %v2696, -inf
          %v3641 = vsel %vm3550, %v3047, -inf
          %v3642 = vsel %vm3550, %v3049, -inf
          %v3643 = vsel %vm3551, %v1994, -inf
          %v3644 = vsel %vm3551, %v1996, -inf
          %v3645 = vsel %vm3551, %v2347, -inf
          %v3646 = vsel %vm3551, %v2349, -inf
          %v3647 = vsel %vm3551, %v2700, -inf
          %v3648 = vsel %vm3551, %v2702, -inf
          %v3649 = vsel %vm3551, %v3053, -inf
          %v3650 = vsel %vm3551, %v3055, -inf
          %v3651 = vsel %vm3552, %v1998, -inf
          %v3652 = vsel %vm3552, %v2000, -inf
          %v3653 = vsel %vm3552, %v2351, -inf
          %v3654 = vsel %vm3552, %v2353, -inf
          %v3655 = vsel %vm3552, %v2704, -inf
          %v3656 = vsel %vm3552, %v2706, -inf
          %v3657 = vsel %vm3552, %v3057, -inf
          %v3658 = vsel %vm3552, %v3059, -inf
          %v3659 = vsel %vm3553, %v2004, -inf
          %v3660 = vsel %vm3553, %v2006, -inf
          %v3661 = vsel %vm3553, %v2357, -inf
          %v3662 = vsel %vm3553, %v2359, -inf
          %v3663 = vsel %vm3553, %v2710, -inf
          %v3664 = vsel %vm3553, %v2712, -inf
          %v3665 = vsel %vm3553, %v3063, -inf
          %v3666 = vsel %vm3553, %v3065, -inf
          %v3667 = vsel %vm3554, %v2008, -inf
          %v3668 = vsel %vm3554, %v2010, -inf
          %v3669 = vsel %vm3554, %v2361, -inf
          %v3670 = vsel %vm3554, %v2363, -inf
          %v3671 = vsel %vm3554, %v2714, -inf
          %v3672 = vsel %vm3554, %v2716, -inf
          %v3673 = vsel %vm3554, %v3067, -inf
          %v3674 = vsel %vm3554, %v3069, -inf
          %v3675 = vsel %vm3555, %v2014, -inf
          %v3676 = vsel %vm3555, %v2016, -inf
          %v3677 = vsel %vm3555, %v2367, -inf
          %v3678 = vsel %vm3555, %v2369, -inf
          %v3679 = vsel %vm3555, %v2720, -inf
          %v3680 = vsel %vm3555, %v2722, -inf
          %v3681 = vsel %vm3555, %v3073, -inf
          %v3682 = vsel %vm3555, %v3075, -inf
          %v3683 = vsel %vm3556, %v2018, -inf
          %v3684 = vsel %vm3556, %v2020, -inf
          %v3685 = vsel %vm3556, %v2371, -inf
          %v3686 = vsel %vm3556, %v2373, -inf
          %v3687 = vsel %vm3556, %v2724, -inf
          %v3688 = vsel %vm3556, %v2726, -inf
          %v3689 = vsel %vm3556, %v3077, -inf
          %v3690 = vsel %vm3556, %v3079, -inf
          %v3691 = vsel %vm3557, %v2024, -inf
          %v3692 = vsel %vm3557, %v2026, -inf
          %v3693 = vsel %vm3557, %v2377, -inf
          %v3694 = vsel %vm3557, %v2379, -inf
          %v3695 = vsel %vm3557, %v2730, -inf
          %v3696 = vsel %vm3557, %v2732, -inf
          %v3697 = vsel %vm3557, %v3083, -inf
          %v3698 = vsel %vm3557, %v3085, -inf
          %v3699 = vsel %vm3558, %v2028, -inf
          %v3700 = vsel %vm3558, %v2030, -inf
          %v3701 = vsel %vm3558, %v2381, -inf
          %v3702 = vsel %vm3558, %v2383, -inf
          %v3703 = vsel %vm3558, %v2734, -inf
          %v3704 = vsel %vm3558, %v2736, -inf
          %v3705 = vsel %vm3558, %v3087, -inf
          %v3706 = vsel %vm3558, %v3089, -inf
          %v3707 = vsel %vm3559, %v2034, -inf
          %v3708 = vsel %vm3559, %v2036, -inf
          %v3709 = vsel %vm3559, %v2387, -inf
          %v3710 = vsel %vm3559, %v2389, -inf
          %v3711 = vsel %vm3559, %v2740, -inf
          %v3712 = vsel %vm3559, %v2742, -inf
          %v3713 = vsel %vm3559, %v3093, -inf
          %v3714 = vsel %vm3559, %v3095, -inf
          %v3715 = vsel %vm3560, %v2038, -inf
          %v3716 = vsel %vm3560, %v2040, -inf
          %v3717 = vsel %vm3560, %v2391, -inf
          %v3718 = vsel %vm3560, %v2393, -inf
          %v3719 = vsel %vm3560, %v2744, -inf
          %v3720 = vsel %vm3560, %v2746, -inf
          %v3721 = vsel %vm3560, %v3097, -inf
          %v3722 = vsel %vm3560, %v3099, -inf
          %v3723 = vsel %vm3561, %v2044, -inf
          %v3724 = vsel %vm3561, %v2046, -inf
          %v3725 = vsel %vm3561, %v2397, -inf
          %v3726 = vsel %vm3561, %v2399, -inf
          %v3727 = vsel %vm3561, %v2750, -inf
          %v3728 = vsel %vm3561, %v2752, -inf
          %v3729 = vsel %vm3561, %v3103, -inf
          %v3730 = vsel %vm3561, %v3105, -inf
          %v3731 = vsel %vm3562, %v2048, -inf
          %v3732 = vsel %vm3562, %v2050, -inf
          %v3733 = vsel %vm3562, %v2401, -inf
          %v3734 = vsel %vm3562, %v2403, -inf
          %v3735 = vsel %vm3562, %v2754, -inf
          %v3736 = vsel %vm3562, %v2756, -inf
          %v3737 = vsel %vm3562, %v3107, -inf
          %v3738 = vsel %vm3562, %v3109, -inf
          %v3739 = vsel %vm3563, %v2054, -inf
          %v3740 = vsel %vm3563, %v2056, -inf
          %v3741 = vsel %vm3563, %v2407, -inf
          %v3742 = vsel %vm3563, %v2409, -inf
          %v3743 = vsel %vm3563, %v2760, -inf
          %v3744 = vsel %vm3563, %v2762, -inf
          %v3745 = vsel %vm3563, %v3113, -inf
          %v3746 = vsel %vm3563, %v3115, -inf
          %v3747 = vsel %vm3564, %v2058, -inf
          %v3748 = vsel %vm3564, %v2060, -inf
          %v3749 = vsel %vm3564, %v2411, -inf
          %v3750 = vsel %vm3564, %v2413, -inf
          %v3751 = vsel %vm3564, %v2764, -inf
          %v3752 = vsel %vm3564, %v2766, -inf
          %v3753 = vsel %vm3564, %v3117, -inf
          %v3754 = vsel %vm3564, %v3119, -inf
          %v3755 = vsel %vm3565, %v2064, -inf
          %v3756 = vsel %vm3565, %v2066, -inf
          %v3757 = vsel %vm3565, %v2417, -inf
          %v3758 = vsel %vm3565, %v2419, -inf
          %v3759 = vsel %vm3565, %v2770, -inf
          %v3760 = vsel %vm3565, %v2772, -inf
          %v3761 = vsel %vm3565, %v3123, -inf
          %v3762 = vsel %vm3565, %v3125, -inf
          %v3763 = vsel %vm3566, %v2068, -inf
          %v3764 = vsel %vm3566, %v2070, -inf
          %v3765 = vsel %vm3566, %v2421, -inf
          %v3766 = vsel %vm3566, %v2423, -inf
          %v3767 = vsel %vm3566, %v2774, -inf
          %v3768 = vsel %vm3566, %v2776, -inf
          %v3769 = vsel %vm3566, %v3127, -inf
          %v3770 = vsel %vm3566, %v3129, -inf
          %v3771 = vsel %vm3567, %v2074, -inf
          %v3772 = vsel %vm3567, %v2076, -inf
          %v3773 = vsel %vm3567, %v2427, -inf
          %v3774 = vsel %vm3567, %v2429, -inf
          %v3775 = vsel %vm3567, %v2780, -inf
          %v3776 = vsel %vm3567, %v2782, -inf
          %v3777 = vsel %vm3567, %v3133, -inf
          %v3778 = vsel %vm3567, %v3135, -inf
          %v3779 = vsel %vm3568, %v2078, -inf
          %v3780 = vsel %vm3568, %v2080, -inf
          %v3781 = vsel %vm3568, %v2431, -inf
          %v3782 = vsel %vm3568, %v2433, -inf
          %v3783 = vsel %vm3568, %v2784, -inf
          %v3784 = vsel %vm3568, %v2786, -inf
          %v3785 = vsel %vm3568, %v3137, -inf
          %v3786 = vsel %vm3568, %v3139, -inf
          %v3787 = vsel %vm3569, %v2084, -inf
          %v3788 = vsel %vm3569, %v2086, -inf
          %v3789 = vsel %vm3569, %v2437, -inf
          %v3790 = vsel %vm3569, %v2439, -inf
          %v3791 = vsel %vm3569, %v2790, -inf
          %v3792 = vsel %vm3569, %v2792, -inf
          %v3793 = vsel %vm3569, %v3143, -inf
          %v3794 = vsel %vm3569, %v3145, -inf
          %v3795 = vsel %vm3570, %v2088, -inf
          %v3796 = vsel %vm3570, %v2090, -inf
          %v3797 = vsel %vm3570, %v2441, -inf
          %v3798 = vsel %vm3570, %v2443, -inf
          %v3799 = vsel %vm3570, %v2794, -inf
          %v3800 = vsel %vm3570, %v2796, -inf
          %v3801 = vsel %vm3570, %v3147, -inf
          %v3802 = vsel %vm3570, %v3149, -inf
          %v3803 = vsel %vm3571, %v2094, -inf
          %v3804 = vsel %vm3571, %v2096, -inf
          %v3805 = vsel %vm3571, %v2447, -inf
          %v3806 = vsel %vm3571, %v2449, -inf
          %v3807 = vsel %vm3571, %v2800, -inf
          %v3808 = vsel %vm3571, %v2802, -inf
          %v3809 = vsel %vm3571, %v3153, -inf
          %v3810 = vsel %vm3571, %v3155, -inf
          %v3811 = vsel %vm3572, %v2098, -inf
          %v3812 = vsel %vm3572, %v2100, -inf
          %v3813 = vsel %vm3572, %v2451, -inf
          %v3814 = vsel %vm3572, %v2453, -inf
          %v3815 = vsel %vm3572, %v2804, -inf
          %v3816 = vsel %vm3572, %v2806, -inf
          %v3817 = vsel %vm3572, %v3157, -inf
          %v3818 = vsel %vm3572, %v3159, -inf
          %v3819 = vsel %vm3573, %v2104, -inf
          %v3820 = vsel %vm3573, %v2106, -inf
          %v3821 = vsel %vm3573, %v2457, -inf
          %v3822 = vsel %vm3573, %v2459, -inf
          %v3823 = vsel %vm3573, %v2810, -inf
          %v3824 = vsel %vm3573, %v2812, -inf
          %v3825 = vsel %vm3573, %v3163, -inf
          %v3826 = vsel %vm3573, %v3165, -inf
          %v3827 = vsel %vm3574, %v2108, -inf
          %v3828 = vsel %vm3574, %v2110, -inf
          %v3829 = vsel %vm3574, %v2461, -inf
          %v3830 = vsel %vm3574, %v2463, -inf
          %v3831 = vsel %vm3574, %v2814, -inf
          %v3832 = vsel %vm3574, %v2816, -inf
          %v3833 = vsel %vm3574, %v3167, -inf
          %v3834 = vsel %vm3574, %v3169, -inf
          %v3835 = vsel %vm3575, %v2114, -inf
          %v3836 = vsel %vm3575, %v2116, -inf
          %v3837 = vsel %vm3575, %v2467, -inf
          %v3838 = vsel %vm3575, %v2469, -inf
          %v3839 = vsel %vm3575, %v2820, -inf
          %v3840 = vsel %vm3575, %v2822, -inf
          %v3841 = vsel %vm3575, %v3173, -inf
          %v3842 = vsel %vm3575, %v3175, -inf
          %v3843 = vsel %vm3576, %v2118, -inf
          %v3844 = vsel %vm3576, %v2120, -inf
          %v3845 = vsel %vm3576, %v2471, -inf
          %v3846 = vsel %vm3576, %v2473, -inf
          %v3847 = vsel %vm3576, %v2824, -inf
          %v3848 = vsel %vm3576, %v2826, -inf
          %v3849 = vsel %vm3576, %v3177, -inf
          %v3850 = vsel %vm3576, %v3179, -inf
          %v3851 = vsel %vm3577, %v2124, -inf
          %v3852 = vsel %vm3577, %v2126, -inf
          %v3853 = vsel %vm3577, %v2477, -inf
          %v3854 = vsel %vm3577, %v2479, -inf
          %v3855 = vsel %vm3577, %v2830, -inf
          %v3856 = vsel %vm3577, %v2832, -inf
          %v3857 = vsel %vm3577, %v3183, -inf
          %v3858 = vsel %vm3577, %v3185, -inf
          %v3859 = vsel %vm3578, %v2128, -inf
          %v3860 = vsel %vm3578, %v2130, -inf
          %v3861 = vsel %vm3578, %v2481, -inf
          %v3862 = vsel %vm3578, %v2483, -inf
          %v3863 = vsel %vm3578, %v2834, -inf
          %v3864 = vsel %vm3578, %v2836, -inf
          %v3865 = vsel %vm3578, %v3187, -inf
          %v3866 = vsel %vm3578, %v3189, -inf
          %v3867 = vsel %vm3579, %v2134, -inf
          %v3868 = vsel %vm3579, %v2136, -inf
          %v3869 = vsel %vm3579, %v2487, -inf
          %v3870 = vsel %vm3579, %v2489, -inf
          %v3871 = vsel %vm3579, %v2840, -inf
          %v3872 = vsel %vm3579, %v2842, -inf
          %v3873 = vsel %vm3579, %v3193, -inf
          %v3874 = vsel %vm3579, %v3195, -inf
          %v3875 = vsel %vm3580, %v2138, -inf
          %v3876 = vsel %vm3580, %v2140, -inf
          %v3877 = vsel %vm3580, %v2491, -inf
          %v3878 = vsel %vm3580, %v2493, -inf
          %v3879 = vsel %vm3580, %v2844, -inf
          %v3880 = vsel %vm3580, %v2846, -inf
          %v3881 = vsel %vm3580, %v3197, -inf
          %v3882 = vsel %vm3580, %v3199, -inf
          %v3883 = vsel %vm3581, %v2144, -inf
          %v3884 = vsel %vm3581, %v2146, -inf
          %v3885 = vsel %vm3581, %v2497, -inf
          %v3886 = vsel %vm3581, %v2499, -inf
          %v3887 = vsel %vm3581, %v2850, -inf
          %v3888 = vsel %vm3581, %v2852, -inf
          %v3889 = vsel %vm3581, %v3203, -inf
          %v3890 = vsel %vm3581, %v3205, -inf
          %v3891 = vsel %vm3582, %v2148, -inf
          %v3892 = vsel %vm3582, %v2150, -inf
          %v3893 = vsel %vm3582, %v2501, -inf
          %v3894 = vsel %vm3582, %v2503, -inf
          %v3895 = vsel %vm3582, %v2854, -inf
          %v3896 = vsel %vm3582, %v2856, -inf
          %v3897 = vsel %vm3582, %v3207, -inf
          %v3898 = vsel %vm3582, %v3209, -inf
          %v3899 = vsel %vm3583, %v2154, -inf
          %v3900 = vsel %vm3583, %v2156, -inf
          %v3901 = vsel %vm3583, %v2507, -inf
          %v3902 = vsel %vm3583, %v2509, -inf
          %v3903 = vsel %vm3583, %v2860, -inf
          %v3904 = vsel %vm3583, %v2862, -inf
          %v3905 = vsel %vm3583, %v3213, -inf
          %v3906 = vsel %vm3583, %v3215, -inf
          %v3907 = vsel %vm3584, %v2158, -inf
          %v3908 = vsel %vm3584, %v2160, -inf
          %v3909 = vsel %vm3584, %v2511, -inf
          %v3910 = vsel %vm3584, %v2513, -inf
          %v3911 = vsel %vm3584, %v2864, -inf
          %v3912 = vsel %vm3584, %v2866, -inf
          %v3913 = vsel %vm3584, %v3217, -inf
          %v3914 = vsel %vm3584, %v3219, -inf
          %v3915 = vsel %vm3585, %v2164, -inf
          %v3916 = vsel %vm3585, %v2166, -inf
          %v3917 = vsel %vm3585, %v2517, -inf
          %v3918 = vsel %vm3585, %v2519, -inf
          %v3919 = vsel %vm3585, %v2870, -inf
          %v3920 = vsel %vm3585, %v2872, -inf
          %v3921 = vsel %vm3585, %v3223, -inf
          %v3922 = vsel %vm3585, %v3225, -inf
          %v3923 = vsel %vm3586, %v2168, -inf
          %v3924 = vsel %vm3586, %v2170, -inf
          %v3925 = vsel %vm3586, %v2521, -inf
          %v3926 = vsel %vm3586, %v2523, -inf
          %v3927 = vsel %vm3586, %v2874, -inf
          %v3928 = vsel %vm3586, %v2876, -inf
          %v3929 = vsel %vm3586, %v3227, -inf
          %v3930 = vsel %vm3586, %v3229, -inf
          %v3931 = vsel %vm3587, %v2174, -inf
          %v3932 = vsel %vm3587, %v2176, -inf
          %v3933 = vsel %vm3587, %v2527, -inf
          %v3934 = vsel %vm3587, %v2529, -inf
          %v3935 = vsel %vm3587, %v2880, -inf
          %v3936 = vsel %vm3587, %v2882, -inf
          %v3937 = vsel %vm3587, %v3233, -inf
          %v3938 = vsel %vm3587, %v3235, -inf
          %v3939 = vsel %vm3588, %v2178, -inf
          %v3940 = vsel %vm3588, %v2180, -inf
          %v3941 = vsel %vm3588, %v2531, -inf
          %v3942 = vsel %vm3588, %v2533, -inf
          %v3943 = vsel %vm3588, %v2884, -inf
          %v3944 = vsel %vm3588, %v2886, -inf
          %v3945 = vsel %vm3588, %v3237, -inf
          %v3946 = vsel %vm3588, %v3239, -inf
          %v3947 = vsel %vm3589, %v2184, -inf
          %v3948 = vsel %vm3589, %v2186, -inf
          %v3949 = vsel %vm3589, %v2537, -inf
          %v3950 = vsel %vm3589, %v2539, -inf
          %v3951 = vsel %vm3589, %v2890, -inf
          %v3952 = vsel %vm3589, %v2892, -inf
          %v3953 = vsel %vm3589, %v3243, -inf
          %v3954 = vsel %vm3589, %v3245, -inf
          %v3955 = vsel %vm3590, %v2188, -inf
          %v3956 = vsel %vm3590, %v2190, -inf
          %v3957 = vsel %vm3590, %v2541, -inf
          %v3958 = vsel %vm3590, %v2543, -inf
          %v3959 = vsel %vm3590, %v2894, -inf
          %v3960 = vsel %vm3590, %v2896, -inf
          %v3961 = vsel %vm3590, %v3247, -inf
          %v3962 = vsel %vm3590, %v3249, -inf
          %v3963 = vsel %vm3591, %v2194, -inf
          %v3964 = vsel %vm3591, %v2196, -inf
          %v3965 = vsel %vm3591, %v2547, -inf
          %v3966 = vsel %vm3591, %v2549, -inf
          %v3967 = vsel %vm3591, %v2900, -inf
          %v3968 = vsel %vm3591, %v2902, -inf
          %v3969 = vsel %vm3591, %v3253, -inf
          %v3970 = vsel %vm3591, %v3255, -inf
          %v3971 = vsel %vm3592, %v2198, -inf
          %v3972 = vsel %vm3592, %v2200, -inf
          %v3973 = vsel %vm3592, %v2551, -inf
          %v3974 = vsel %vm3592, %v2553, -inf
          %v3975 = vsel %vm3592, %v2904, -inf
          %v3976 = vsel %vm3592, %v2906, -inf
          %v3977 = vsel %vm3592, %v3257, -inf
          %v3978 = vsel %vm3592, %v3259, -inf
          %v3979 = vsel %vm3593, %v2204, -inf
          %v3980 = vsel %vm3593, %v2206, -inf
          %v3981 = vsel %vm3593, %v2557, -inf
          %v3982 = vsel %vm3593, %v2559, -inf
          %v3983 = vsel %vm3593, %v2910, -inf
          %v3984 = vsel %vm3593, %v2912, -inf
          %v3985 = vsel %vm3593, %v3263, -inf
          %v3986 = vsel %vm3593, %v3265, -inf
          %v3987 = vsel %vm3594, %v2208, -inf
          %v3988 = vsel %vm3594, %v2210, -inf
          %v3989 = vsel %vm3594, %v2561, -inf
          %v3990 = vsel %vm3594, %v2563, -inf
          %v3991 = vsel %vm3594, %v2914, -inf
          %v3992 = vsel %vm3594, %v2916, -inf
          %v3993 = vsel %vm3594, %v3267, -inf
          %v3994 = vsel %vm3594, %v3269, -inf
          %v3995 = vsel %vm3595, %v2214, -inf
          %v3996 = vsel %vm3595, %v2216, -inf
          %v3997 = vsel %vm3595, %v2567, -inf
          %v3998 = vsel %vm3595, %v2569, -inf
          %v3999 = vsel %vm3595, %v2920, -inf
          %v4000 = vsel %vm3595, %v2922, -inf
          %v4001 = vsel %vm3595, %v3273, -inf
          %v4002 = vsel %vm3595, %v3275, -inf
          %v4003 = vsel %vm3596, %v2218, -inf
          %v4004 = vsel %vm3596, %v2220, -inf
          %v4005 = vsel %vm3596, %v2571, -inf
          %v4006 = vsel %vm3596, %v2573, -inf
          %v4007 = vsel %vm3596, %v2924, -inf
          %v4008 = vsel %vm3596, %v2926, -inf
          %v4009 = vsel %vm3596, %v3277, -inf
          %v4010 = vsel %vm3596, %v3279, -inf
          %v4011 = vsel %vm3597, %v2224, -inf
          %v4012 = vsel %vm3597, %v2226, -inf
          %v4013 = vsel %vm3597, %v2577, -inf
          %v4014 = vsel %vm3597, %v2579, -inf
          %v4015 = vsel %vm3597, %v2930, -inf
          %v4016 = vsel %vm3597, %v2932, -inf
          %v4017 = vsel %vm3597, %v3283, -inf
          %v4018 = vsel %vm3597, %v3285, -inf
          %v4019 = vsel %vm3598, %v2228, -inf
          %v4020 = vsel %vm3598, %v2230, -inf
          %v4021 = vsel %vm3598, %v2581, -inf
          %v4022 = vsel %vm3598, %v2583, -inf
          %v4023 = vsel %vm3598, %v2934, -inf
          %v4024 = vsel %vm3598, %v2936, -inf
          %v4025 = vsel %vm3598, %v3287, -inf
          %v4026 = vsel %vm3598, %v3289, -inf
          %v4027 = vsel %vm3599, %v2234, -inf
          %v4028 = vsel %vm3599, %v2236, -inf
          %v4029 = vsel %vm3599, %v2587, -inf
          %v4030 = vsel %vm3599, %v2589, -inf
          %v4031 = vsel %vm3599, %v2940, -inf
          %v4032 = vsel %vm3599, %v2942, -inf
          %v4033 = vsel %vm3599, %v3293, -inf
          %v4034 = vsel %vm3599, %v3295, -inf
          %v4035 = vsel %vm3600, %v2238, -inf
          %v4036 = vsel %vm3600, %v2240, -inf
          %v4037 = vsel %vm3600, %v2591, -inf
          %v4038 = vsel %vm3600, %v2593, -inf
          %v4039 = vsel %vm3600, %v2944, -inf
          %v4040 = vsel %vm3600, %v2946, -inf
          %v4041 = vsel %vm3600, %v3297, -inf
          %v4042 = vsel %vm3600, %v3299, -inf
          %v4043 = vsel %vm3601, %v2244, -inf
          %v4044 = vsel %vm3601, %v2246, -inf
          %v4045 = vsel %vm3601, %v2597, -inf
          %v4046 = vsel %vm3601, %v2599, -inf
          %v4047 = vsel %vm3601, %v2950, -inf
          %v4048 = vsel %vm3601, %v2952, -inf
          %v4049 = vsel %vm3601, %v3303, -inf
          %v4050 = vsel %vm3601, %v3305, -inf
          %v4051 = vsel %vm3602, %v2248, -inf
          %v4052 = vsel %vm3602, %v2250, -inf
          %v4053 = vsel %vm3602, %v2601, -inf
          %v4054 = vsel %vm3602, %v2603, -inf
          %v4055 = vsel %vm3602, %v2954, -inf
          %v4056 = vsel %vm3602, %v2956, -inf
          %v4057 = vsel %vm3602, %v3307, -inf
          %v4058 = vsel %vm3602, %v3309, -inf
          %v4059 = vsel %vm3603, %v2254, -inf
          %v4060 = vsel %vm3603, %v2256, -inf
          %v4061 = vsel %vm3603, %v2607, -inf
          %v4062 = vsel %vm3603, %v2609, -inf
          %v4063 = vsel %vm3603, %v2960, -inf
          %v4064 = vsel %vm3603, %v2962, -inf
          %v4065 = vsel %vm3603, %v3313, -inf
          %v4066 = vsel %vm3603, %v3315, -inf
          %v4067 = vsel %vm3604, %v2258, -inf
          %v4068 = vsel %vm3604, %v2260, -inf
          %v4069 = vsel %vm3604, %v2611, -inf
          %v4070 = vsel %vm3604, %v2613, -inf
          %v4071 = vsel %vm3604, %v2964, -inf
          %v4072 = vsel %vm3604, %v2966, -inf
          %v4073 = vsel %vm3604, %v3317, -inf
          %v4074 = vsel %vm3604, %v3319, -inf
          %v4075 = vsel %vm3605, %v2264, -inf
          %v4076 = vsel %vm3605, %v2266, -inf
          %v4077 = vsel %vm3605, %v2617, -inf
          %v4078 = vsel %vm3605, %v2619, -inf
          %v4079 = vsel %vm3605, %v2970, -inf
          %v4080 = vsel %vm3605, %v2972, -inf
          %v4081 = vsel %vm3605, %v3323, -inf
          %v4082 = vsel %vm3605, %v3325, -inf
          %v4083 = vsel %vm3606, %v2268, -inf
          %v4084 = vsel %vm3606, %v2270, -inf
          %v4085 = vsel %vm3606, %v2621, -inf
          %v4086 = vsel %vm3606, %v2623, -inf
          %v4087 = vsel %vm3606, %v2974, -inf
          %v4088 = vsel %vm3606, %v2976, -inf
          %v4089 = vsel %vm3606, %v3327, -inf
          %v4090 = vsel %vm3606, %v3329, -inf
          %v4091 = vsel %vm3607, %v2274, -inf
          %v4092 = vsel %vm3607, %v2276, -inf
          %v4093 = vsel %vm3607, %v2627, -inf
          %v4094 = vsel %vm3607, %v2629, -inf
          %v4095 = vsel %vm3607, %v2980, -inf
          %v4096 = vsel %vm3607, %v2982, -inf
          %v4097 = vsel %vm3607, %v3333, -inf
          %v4098 = vsel %vm3607, %v3335, -inf
          %v4099 = vsel %vm3608, %v2278, -inf
          %v4100 = vsel %vm3608, %v2280, -inf
          %v4101 = vsel %vm3608, %v2631, -inf
          %v4102 = vsel %vm3608, %v2633, -inf
          %v4103 = vsel %vm3608, %v2984, -inf
          %v4104 = vsel %vm3608, %v2986, -inf
          %v4105 = vsel %vm3608, %v3337, -inf
          %v4106 = vsel %vm3608, %v3339, -inf
          %v4107 = vsel %vm3609, %v2284, -inf
          %v4108 = vsel %vm3609, %v2286, -inf
          %v4109 = vsel %vm3609, %v2637, -inf
          %v4110 = vsel %vm3609, %v2639, -inf
          %v4111 = vsel %vm3609, %v2990, -inf
          %v4112 = vsel %vm3609, %v2992, -inf
          %v4113 = vsel %vm3609, %v3343, -inf
          %v4114 = vsel %vm3609, %v3345, -inf
          %v4115 = vsel %vm3610, %v2288, -inf
          %v4116 = vsel %vm3610, %v2290, -inf
          %v4117 = vsel %vm3610, %v2641, -inf
          %v4118 = vsel %vm3610, %v2643, -inf
          %v4119 = vsel %vm3610, %v2994, -inf
          %v4120 = vsel %vm3610, %v2996, -inf
          %v4121 = vsel %vm3610, %v3347, -inf
          %v4122 = vsel %vm3610, %v3349, -inf
          %v4123 = vld [vmem:[%s292] sm:$0xff]
          %v4124 = vmax.f32 %v3611, %v3619
          %v4125 = vmax.f32 %v4124, %v3627
          %v4126 = vmax.f32 %v4125, %v3635
          %v4127 = vmax.f32 %v4126, %v3643
          %v4128 = vmax.f32 %v4127, %v3651
          %v4129 = vmax.f32 %v4128, %v3659
          %v4130 = vmax.f32 %v4129, %v3667
          %v4131 = vmax.f32 %v4130, %v3675
          %v4132 = vmax.f32 %v4131, %v3683
          %v4133 = vmax.f32 %v4132, %v3691
          %v4134 = vmax.f32 %v4133, %v3699
          %v4135 = vmax.f32 %v4134, %v3707
          %v4136 = vmax.f32 %v4135, %v3715
          %v4137 = vmax.f32 %v4136, %v3723
          %v4138 = vmax.f32 %v4137, %v3731
          %v4139 = vmax.f32 %v4138, %v3739
          %v4140 = vmax.f32 %v4139, %v3747
          %v4141 = vmax.f32 %v4140, %v3755
          %v4142 = vmax.f32 %v4141, %v3763
          %v4143 = vmax.f32 %v4142, %v3771
          %v4144 = vmax.f32 %v4143, %v3779
          %v4145 = vmax.f32 %v4144, %v3787
          %v4146 = vmax.f32 %v4145, %v3795
          %v4147 = vmax.f32 %v4146, %v3803
          %v4148 = vmax.f32 %v4147, %v3811
          %v4149 = vmax.f32 %v4148, %v3819
          %v4150 = vmax.f32 %v4149, %v3827
          %v4151 = vmax.f32 %v4150, %v3835
          %v4152 = vmax.f32 %v4151, %v3843
          %v4153 = vmax.f32 %v4152, %v3851
          %v4154 = vmax.f32 %v4153, %v3859
          %v4155 = vmax.f32 %v4154, %v3867
          %v4156 = vmax.f32 %v4155, %v3875
          %v4157 = vmax.f32 %v4156, %v3883
          %v4158 = vmax.f32 %v4157, %v3891
          %v4159 = vmax.f32 %v4158, %v3899
          %v4160 = vmax.f32 %v4159, %v3907
          %v4161 = vmax.f32 %v4160, %v3915
          %v4162 = vmax.f32 %v4161, %v3923
          %v4163 = vmax.f32 %v4162, %v3931
          %v4164 = vmax.f32 %v4163, %v3939
          %v4165 = vmax.f32 %v4164, %v3947
          %v4166 = vmax.f32 %v4165, %v3955
          %v4167 = vmax.f32 %v4166, %v3963
          %v4168 = vmax.f32 %v4167, %v3971
          %v4169 = vmax.f32 %v4168, %v3979
          %v4170 = vmax.f32 %v4169, %v3987
          %v4171 = vmax.f32 %v4170, %v3995
          %v4172 = vmax.f32 %v4171, %v4003
          %v4173 = vmax.f32 %v4172, %v4011
          %v4174 = vmax.f32 %v4173, %v4019
          %v4175 = vmax.f32 %v4174, %v4027
          %v4176 = vmax.f32 %v4175, %v4035
          %v4177 = vmax.f32 %v4176, %v4043
          %v4178 = vmax.f32 %v4177, %v4051
          %v4179 = vmax.f32 %v4178, %v4059
          %v4180 = vmax.f32 %v4179, %v4067
          %v4181 = vmax.f32 %v4180, %v4075
          %v4182 = vmax.f32 %v4181, %v4083
          %v4183 = vmax.f32 %v4182, %v4091
          %v4184 = vmax.f32 %v4183, %v4099
          %v4185 = vmax.f32 %v4184, %v4107
          %v4186 = vmax.f32 %v4185, %v4115
          %v4187 = vrot.slane %v4186, 4
          %v4188 = vmax.f32 %v4186, %v4187
          %v4189 = vrot.slane %v4188, 2
          %v4190 = vmax.f32 %v4188, %v4189
          %v4191 = vrot.slane %v4190, 1
          %v4192 = vmax.f32 %v4190, %v4191
          %v4193 = vmax.f32 %v3612, %v3620
          %v4194 = vmax.f32 %v4193, %v3628
          %v4195 = vmax.f32 %v4194, %v3636
          %v4196 = vmax.f32 %v4195, %v3644
          %v4197 = vmax.f32 %v4196, %v3652
          %v4198 = vmax.f32 %v4197, %v3660
          %v4199 = vmax.f32 %v4198, %v3668
          %v4200 = vmax.f32 %v4199, %v3676
          %v4201 = vmax.f32 %v4200, %v3684
          %v4202 = vmax.f32 %v4201, %v3692
          %v4203 = vmax.f32 %v4202, %v3700
          %v4204 = vmax.f32 %v4203, %v3708
          %v4205 = vmax.f32 %v4204, %v3716
          %v4206 = vmax.f32 %v4205, %v3724
          %v4207 = vmax.f32 %v4206, %v3732
          %v4208 = vmax.f32 %v4207, %v3740
          %v4209 = vmax.f32 %v4208, %v3748
          %v4210 = vmax.f32 %v4209, %v3756
          %v4211 = vmax.f32 %v4210, %v3764
          %v4212 = vmax.f32 %v4211, %v3772
          %v4213 = vmax.f32 %v4212, %v3780
          %v4214 = vmax.f32 %v4213, %v3788
          %v4215 = vmax.f32 %v4214, %v3796
          %v4216 = vmax.f32 %v4215, %v3804
          %v4217 = vmax.f32 %v4216, %v3812
          %v4218 = vmax.f32 %v4217, %v3820
          %v4219 = vmax.f32 %v4218, %v3828
          %v4220 = vmax.f32 %v4219, %v3836
          %v4221 = vmax.f32 %v4220, %v3844
          %v4222 = vmax.f32 %v4221, %v3852
          %v4223 = vmax.f32 %v4222, %v3860
          %v4224 = vmax.f32 %v4223, %v3868
          %v4225 = vmax.f32 %v4224, %v3876
          %v4226 = vmax.f32 %v4225, %v3884
          %v4227 = vmax.f32 %v4226, %v3892
          %v4228 = vmax.f32 %v4227, %v3900
          %v4229 = vmax.f32 %v4228, %v3908
          %v4230 = vmax.f32 %v4229, %v3916
          %v4231 = vmax.f32 %v4230, %v3924
          %v4232 = vmax.f32 %v4231, %v3932
          %v4233 = vmax.f32 %v4232, %v3940
          %v4234 = vmax.f32 %v4233, %v3948
          %v4235 = vmax.f32 %v4234, %v3956
          %v4236 = vmax.f32 %v4235, %v3964
          %v4237 = vmax.f32 %v4236, %v3972
          %v4238 = vmax.f32 %v4237, %v3980
          %v4239 = vmax.f32 %v4238, %v3988
          %v4240 = vmax.f32 %v4239, %v3996
          %v4241 = vmax.f32 %v4240, %v4004
          %v4242 = vmax.f32 %v4241, %v4012
          %v4243 = vmax.f32 %v4242, %v4020
          %v4244 = vmax.f32 %v4243, %v4028
          %v4245 = vmax.f32 %v4244, %v4036
          %v4246 = vmax.f32 %v4245, %v4044
          %v4247 = vmax.f32 %v4246, %v4052
          %v4248 = vmax.f32 %v4247, %v4060
          %v4249 = vmax.f32 %v4248, %v4068
          %v4250 = vmax.f32 %v4249, %v4076
          %v4251 = vmax.f32 %v4250, %v4084
          %v4252 = vmax.f32 %v4251, %v4092
          %v4253 = vmax.f32 %v4252, %v4100
          %v4254 = vmax.f32 %v4253, %v4108
          %v4255 = vmax.f32 %v4254, %v4116
          %v4256 = vrot.slane %v4255, 4
          %v4257 = vmax.f32 %v4255, %v4256
          %v4258 = vrot.slane %v4257, 2
          %v4259 = vmax.f32 %v4257, %v4258
          %v4260 = vrot.slane %v4259, 1
          %v4261 = vmax.f32 %v4259, %v4260
          %v4262 = vmax.f32 %v3613, %v3621
          %v4263 = vmax.f32 %v4262, %v3629
          %v4264 = vmax.f32 %v4263, %v3637
          %v4265 = vmax.f32 %v4264, %v3645
          %v4266 = vmax.f32 %v4265, %v3653
          %v4267 = vmax.f32 %v4266, %v3661
          %v4268 = vmax.f32 %v4267, %v3669
          %v4269 = vmax.f32 %v4268, %v3677
          %v4270 = vmax.f32 %v4269, %v3685
          %v4271 = vmax.f32 %v4270, %v3693
          %v4272 = vmax.f32 %v4271, %v3701
          %v4273 = vmax.f32 %v4272, %v3709
          %v4274 = vmax.f32 %v4273, %v3717
          %v4275 = vmax.f32 %v4274, %v3725
          %v4276 = vmax.f32 %v4275, %v3733
          %v4277 = vmax.f32 %v4276, %v3741
          %v4278 = vmax.f32 %v4277, %v3749
          %v4279 = vmax.f32 %v4278, %v3757
          %v4280 = vmax.f32 %v4279, %v3765
          %v4281 = vmax.f32 %v4280, %v3773
          %v4282 = vmax.f32 %v4281, %v3781
          %v4283 = vmax.f32 %v4282, %v3789
          %v4284 = vmax.f32 %v4283, %v3797
          %v4285 = vmax.f32 %v4284, %v3805
          %v4286 = vmax.f32 %v4285, %v3813
          %v4287 = vmax.f32 %v4286, %v3821
          %v4288 = vmax.f32 %v4287, %v3829
          %v4289 = vmax.f32 %v4288, %v3837
          %v4290 = vmax.f32 %v4289, %v3845
          %v4291 = vmax.f32 %v4290, %v3853
          %v4292 = vmax.f32 %v4291, %v3861
          %v4293 = vmax.f32 %v4292, %v3869
          %v4294 = vmax.f32 %v4293, %v3877
          %v4295 = vmax.f32 %v4294, %v3885
          %v4296 = vmax.f32 %v4295, %v3893
          %v4297 = vmax.f32 %v4296, %v3901
          %v4298 = vmax.f32 %v4297, %v3909
          %v4299 = vmax.f32 %v4298, %v3917
          %v4300 = vmax.f32 %v4299, %v3925
          %v4301 = vmax.f32 %v4300, %v3933
          %v4302 = vmax.f32 %v4301, %v3941
          %v4303 = vmax.f32 %v4302, %v3949
          %v4304 = vmax.f32 %v4303, %v3957
          %v4305 = vmax.f32 %v4304, %v3965
          %v4306 = vmax.f32 %v4305, %v3973
          %v4307 = vmax.f32 %v4306, %v3981
          %v4308 = vmax.f32 %v4307, %v3989
          %v4309 = vmax.f32 %v4308, %v3997
          %v4310 = vmax.f32 %v4309, %v4005
          %v4311 = vmax.f32 %v4310, %v4013
          %v4312 = vmax.f32 %v4311, %v4021
          %v4313 = vmax.f32 %v4312, %v4029
          %v4314 = vmax.f32 %v4313, %v4037
          %v4315 = vmax.f32 %v4314, %v4045
          %v4316 = vmax.f32 %v4315, %v4053
          %v4317 = vmax.f32 %v4316, %v4061
          %v4318 = vmax.f32 %v4317, %v4069
          %v4319 = vmax.f32 %v4318, %v4077
          %v4320 = vmax.f32 %v4319, %v4085
          %v4321 = vmax.f32 %v4320, %v4093
          %v4322 = vmax.f32 %v4321, %v4101
          %v4323 = vmax.f32 %v4322, %v4109
          %v4324 = vmax.f32 %v4323, %v4117
          %v4325 = vrot.slane %v4324, 4
          %v4326 = vmax.f32 %v4324, %v4325
          %v4327 = vrot.slane %v4326, 2
          %v4328 = vmax.f32 %v4326, %v4327
          %v4329 = vrot.slane %v4328, 1
          %v4330 = vmax.f32 %v4328, %v4329
          %v4331 = vmax.f32 %v3614, %v3622
          %v4332 = vmax.f32 %v4331, %v3630
          %v4333 = vmax.f32 %v4332, %v3638
          %v4334 = vmax.f32 %v4333, %v3646
          %v4335 = vmax.f32 %v4334, %v3654
          %v4336 = vmax.f32 %v4335, %v3662
          %v4337 = vmax.f32 %v4336, %v3670
          %v4338 = vmax.f32 %v4337, %v3678
          %v4339 = vmax.f32 %v4338, %v3686
          %v4340 = vmax.f32 %v4339, %v3694
          %v4341 = vmax.f32 %v4340, %v3702
          %v4342 = vmax.f32 %v4341, %v3710
          %v4343 = vmax.f32 %v4342, %v3718
          %v4344 = vmax.f32 %v4343, %v3726
          %v4345 = vmax.f32 %v4344, %v3734
          %v4346 = vmax.f32 %v4345, %v3742
          %v4347 = vmax.f32 %v4346, %v3750
          %v4348 = vmax.f32 %v4347, %v3758
          %v4349 = vmax.f32 %v4348, %v3766
          %v4350 = vmax.f32 %v4349, %v3774
          %v4351 = vmax.f32 %v4350, %v3782
          %v4352 = vmax.f32 %v4351, %v3790
          %v4353 = vmax.f32 %v4352, %v3798
          %v4354 = vmax.f32 %v4353, %v3806
          %v4355 = vmax.f32 %v4354, %v3814
          %v4356 = vmax.f32 %v4355, %v3822
          %v4357 = vmax.f32 %v4356, %v3830
          %v4358 = vmax.f32 %v4357, %v3838
          %v4359 = vmax.f32 %v4358, %v3846
          %v4360 = vmax.f32 %v4359, %v3854
          %v4361 = vmax.f32 %v4360, %v3862
          %v4362 = vmax.f32 %v4361, %v3870
          %v4363 = vmax.f32 %v4362, %v3878
          %v4364 = vmax.f32 %v4363, %v3886
          %v4365 = vmax.f32 %v4364, %v3894
          %v4366 = vmax.f32 %v4365, %v3902
          %v4367 = vmax.f32 %v4366, %v3910
          %v4368 = vmax.f32 %v4367, %v3918
          %v4369 = vmax.f32 %v4368, %v3926
          %v4370 = vmax.f32 %v4369, %v3934
          %v4371 = vmax.f32 %v4370, %v3942
          %v4372 = vmax.f32 %v4371, %v3950
          %v4373 = vmax.f32 %v4372, %v3958
          %v4374 = vmax.f32 %v4373, %v3966
          %v4375 = vmax.f32 %v4374, %v3974
          %v4376 = vmax.f32 %v4375, %v3982
          %v4377 = vmax.f32 %v4376, %v3990
          %v4378 = vmax.f32 %v4377, %v3998
          %v4379 = vmax.f32 %v4378, %v4006
          %v4380 = vmax.f32 %v4379, %v4014
          %v4381 = vmax.f32 %v4380, %v4022
          %v4382 = vmax.f32 %v4381, %v4030
          %v4383 = vmax.f32 %v4382, %v4038
          %v4384 = vmax.f32 %v4383, %v4046
          %v4385 = vmax.f32 %v4384, %v4054
          %v4386 = vmax.f32 %v4385, %v4062
          %v4387 = vmax.f32 %v4386, %v4070
          %v4388 = vmax.f32 %v4387, %v4078
          %v4389 = vmax.f32 %v4388, %v4086
          %v4390 = vmax.f32 %v4389, %v4094
          %v4391 = vmax.f32 %v4390, %v4102
          %v4392 = vmax.f32 %v4391, %v4110
          %v4393 = vmax.f32 %v4392, %v4118
          %v4394 = vrot.slane %v4393, 4
          %v4395 = vmax.f32 %v4393, %v4394
          %v4396 = vrot.slane %v4395, 2
          %v4397 = vmax.f32 %v4395, %v4396
          %v4398 = vrot.slane %v4397, 1
          %v4399 = vmax.f32 %v4397, %v4398
          %v4400 = vmax.f32 %v3615, %v3623
          %v4401 = vmax.f32 %v4400, %v3631
          %v4402 = vmax.f32 %v4401, %v3639
          %v4403 = vmax.f32 %v4402, %v3647
          %v4404 = vmax.f32 %v4403, %v3655
          %v4405 = vmax.f32 %v4404, %v3663
          %v4406 = vmax.f32 %v4405, %v3671
          %v4407 = vmax.f32 %v4406, %v3679
          %v4408 = vmax.f32 %v4407, %v3687
          %v4409 = vmax.f32 %v4408, %v3695
          %v4410 = vmax.f32 %v4409, %v3703
          %v4411 = vmax.f32 %v4410, %v3711
          %v4412 = vmax.f32 %v4411, %v3719
          %v4413 = vmax.f32 %v4412, %v3727
          %v4414 = vmax.f32 %v4413, %v3735
          %v4415 = vmax.f32 %v4414, %v3743
          %v4416 = vmax.f32 %v4415, %v3751
          %v4417 = vmax.f32 %v4416, %v3759
          %v4418 = vmax.f32 %v4417, %v3767
          %v4419 = vmax.f32 %v4418, %v3775
          %v4420 = vmax.f32 %v4419, %v3783
          %v4421 = vmax.f32 %v4420, %v3791
          %v4422 = vmax.f32 %v4421, %v3799
          %v4423 = vmax.f32 %v4422, %v3807
          %v4424 = vmax.f32 %v4423, %v3815
          %v4425 = vmax.f32 %v4424, %v3823
          %v4426 = vmax.f32 %v4425, %v3831
          %v4427 = vmax.f32 %v4426, %v3839
          %v4428 = vmax.f32 %v4427, %v3847
          %v4429 = vmax.f32 %v4428, %v3855
          %v4430 = vmax.f32 %v4429, %v3863
          %v4431 = vmax.f32 %v4430, %v3871
          %v4432 = vmax.f32 %v4431, %v3879
          %v4433 = vmax.f32 %v4432, %v3887
          %v4434 = vmax.f32 %v4433, %v3895
          %v4435 = vmax.f32 %v4434, %v3903
          %v4436 = vmax.f32 %v4435, %v3911
          %v4437 = vmax.f32 %v4436, %v3919
          %v4438 = vmax.f32 %v4437, %v3927
          %v4439 = vmax.f32 %v4438, %v3935
          %v4440 = vmax.f32 %v4439, %v3943
          %v4441 = vmax.f32 %v4440, %v3951
          %v4442 = vmax.f32 %v4441, %v3959
          %v4443 = vmax.f32 %v4442, %v3967
          %v4444 = vmax.f32 %v4443, %v3975
          %v4445 = vmax.f32 %v4444, %v3983
          %v4446 = vmax.f32 %v4445, %v3991
          %v4447 = vmax.f32 %v4446, %v3999
          %v4448 = vmax.f32 %v4447, %v4007
          %v4449 = vmax.f32 %v4448, %v4015
          %v4450 = vmax.f32 %v4449, %v4023
          %v4451 = vmax.f32 %v4450, %v4031
          %v4452 = vmax.f32 %v4451, %v4039
          %v4453 = vmax.f32 %v4452, %v4047
          %v4454 = vmax.f32 %v4453, %v4055
          %v4455 = vmax.f32 %v4454, %v4063
          %v4456 = vmax.f32 %v4455, %v4071
          %v4457 = vmax.f32 %v4456, %v4079
          %v4458 = vmax.f32 %v4457, %v4087
          %v4459 = vmax.f32 %v4458, %v4095
          %v4460 = vmax.f32 %v4459, %v4103
          %v4461 = vmax.f32 %v4460, %v4111
          %v4462 = vmax.f32 %v4461, %v4119
          %v4463 = vrot.slane %v4462, 4
          %v4464 = vmax.f32 %v4462, %v4463
          %v4465 = vrot.slane %v4464, 2
          %v4466 = vmax.f32 %v4464, %v4465
          %v4467 = vrot.slane %v4466, 1
          %v4468 = vmax.f32 %v4466, %v4467
          %v4469 = vmax.f32 %v3616, %v3624
          %v4470 = vmax.f32 %v4469, %v3632
          %v4471 = vmax.f32 %v4470, %v3640
          %v4472 = vmax.f32 %v4471, %v3648
          %v4473 = vmax.f32 %v4472, %v3656
          %v4474 = vmax.f32 %v4473, %v3664
          %v4475 = vmax.f32 %v4474, %v3672
          %v4476 = vmax.f32 %v4475, %v3680
          %v4477 = vmax.f32 %v4476, %v3688
          %v4478 = vmax.f32 %v4477, %v3696
          %v4479 = vmax.f32 %v4478, %v3704
          %v4480 = vmax.f32 %v4479, %v3712
          %v4481 = vmax.f32 %v4480, %v3720
          %v4482 = vmax.f32 %v4481, %v3728
          %v4483 = vmax.f32 %v4482, %v3736
          %v4484 = vmax.f32 %v4483, %v3744
          %v4485 = vmax.f32 %v4484, %v3752
          %v4486 = vmax.f32 %v4485, %v3760
          %v4487 = vmax.f32 %v4486, %v3768
          %v4488 = vmax.f32 %v4487, %v3776
          %v4489 = vmax.f32 %v4488, %v3784
          %v4490 = vmax.f32 %v4489, %v3792
          %v4491 = vmax.f32 %v4490, %v3800
          %v4492 = vmax.f32 %v4491, %v3808
          %v4493 = vmax.f32 %v4492, %v3816
          %v4494 = vmax.f32 %v4493, %v3824
          %v4495 = vmax.f32 %v4494, %v3832
          %v4496 = vmax.f32 %v4495, %v3840
          %v4497 = vmax.f32 %v4496, %v3848
          %v4498 = vmax.f32 %v4497, %v3856
          %v4499 = vmax.f32 %v4498, %v3864
          %v4500 = vmax.f32 %v4499, %v3872
          %v4501 = vmax.f32 %v4500, %v3880
          %v4502 = vmax.f32 %v4501, %v3888
          %v4503 = vmax.f32 %v4502, %v3896
          %v4504 = vmax.f32 %v4503, %v3904
          %v4505 = vmax.f32 %v4504, %v3912
          %v4506 = vmax.f32 %v4505, %v3920
          %v4507 = vmax.f32 %v4506, %v3928
          %v4508 = vmax.f32 %v4507, %v3936
          %v4509 = vmax.f32 %v4508, %v3944
          %v4510 = vmax.f32 %v4509, %v3952
          %v4511 = vmax.f32 %v4510, %v3960
          %v4512 = vmax.f32 %v4511, %v3968
          %v4513 = vmax.f32 %v4512, %v3976
          %v4514 = vmax.f32 %v4513, %v3984
          %v4515 = vmax.f32 %v4514, %v3992
          %v4516 = vmax.f32 %v4515, %v4000
          %v4517 = vmax.f32 %v4516, %v4008
          %v4518 = vmax.f32 %v4517, %v4016
          %v4519 = vmax.f32 %v4518, %v4024
          %v4520 = vmax.f32 %v4519, %v4032
          %v4521 = vmax.f32 %v4520, %v4040
          %v4522 = vmax.f32 %v4521, %v4048
          %v4523 = vmax.f32 %v4522, %v4056
          %v4524 = vmax.f32 %v4523, %v4064
          %v4525 = vmax.f32 %v4524, %v4072
          %v4526 = vmax.f32 %v4525, %v4080
          %v4527 = vmax.f32 %v4526, %v4088
          %v4528 = vmax.f32 %v4527, %v4096
          %v4529 = vmax.f32 %v4528, %v4104
          %v4530 = vmax.f32 %v4529, %v4112
          %v4531 = vmax.f32 %v4530, %v4120
          %v4532 = vrot.slane %v4531, 4
          %v4533 = vmax.f32 %v4531, %v4532
          %v4534 = vrot.slane %v4533, 2
          %v4535 = vmax.f32 %v4533, %v4534
          %v4536 = vrot.slane %v4535, 1
          %v4537 = vmax.f32 %v4535, %v4536
          %v4538 = vmax.f32 %v3617, %v3625
          %v4539 = vmax.f32 %v4538, %v3633
          %v4540 = vmax.f32 %v4539, %v3641
          %v4541 = vmax.f32 %v4540, %v3649
          %v4542 = vmax.f32 %v4541, %v3657
          %v4543 = vmax.f32 %v4542, %v3665
          %v4544 = vmax.f32 %v4543, %v3673
          %v4545 = vmax.f32 %v4544, %v3681
          %v4546 = vmax.f32 %v4545, %v3689
          %v4547 = vmax.f32 %v4546, %v3697
          %v4548 = vmax.f32 %v4547, %v3705
          %v4549 = vmax.f32 %v4548, %v3713
          %v4550 = vmax.f32 %v4549, %v3721
          %v4551 = vmax.f32 %v4550, %v3729
          %v4552 = vmax.f32 %v4551, %v3737
          %v4553 = vmax.f32 %v4552, %v3745
          %v4554 = vmax.f32 %v4553, %v3753
          %v4555 = vmax.f32 %v4554, %v3761
          %v4556 = vmax.f32 %v4555, %v3769
          %v4557 = vmax.f32 %v4556, %v3777
          %v4558 = vmax.f32 %v4557, %v3785
          %v4559 = vmax.f32 %v4558, %v3793
          %v4560 = vmax.f32 %v4559, %v3801
          %v4561 = vmax.f32 %v4560, %v3809
          %v4562 = vmax.f32 %v4561, %v3817
          %v4563 = vmax.f32 %v4562, %v3825
          %v4564 = vmax.f32 %v4563, %v3833
          %v4565 = vmax.f32 %v4564, %v3841
          %v4566 = vmax.f32 %v4565, %v3849
          %v4567 = vmax.f32 %v4566, %v3857
          %v4568 = vmax.f32 %v4567, %v3865
          %v4569 = vmax.f32 %v4568, %v3873
          %v4570 = vmax.f32 %v4569, %v3881
          %v4571 = vmax.f32 %v4570, %v3889
          %v4572 = vmax.f32 %v4571, %v3897
          %v4573 = vmax.f32 %v4572, %v3905
          %v4574 = vmax.f32 %v4573, %v3913
          %v4575 = vmax.f32 %v4574, %v3921
          %v4576 = vmax.f32 %v4575, %v3929
          %v4577 = vmax.f32 %v4576, %v3937
          %v4578 = vmax.f32 %v4577, %v3945
          %v4579 = vmax.f32 %v4578, %v3953
          %v4580 = vmax.f32 %v4579, %v3961
          %v4581 = vmax.f32 %v4580, %v3969
          %v4582 = vmax.f32 %v4581, %v3977
          %v4583 = vmax.f32 %v4582, %v3985
          %v4584 = vmax.f32 %v4583, %v3993
          %v4585 = vmax.f32 %v4584, %v4001
          %v4586 = vmax.f32 %v4585, %v4009
          %v4587 = vmax.f32 %v4586, %v4017
          %v4588 = vmax.f32 %v4587, %v4025
          %v4589 = vmax.f32 %v4588, %v4033
          %v4590 = vmax.f32 %v4589, %v4041
          %v4591 = vmax.f32 %v4590, %v4049
          %v4592 = vmax.f32 %v4591, %v4057
          %v4593 = vmax.f32 %v4592, %v4065
          %v4594 = vmax.f32 %v4593, %v4073
          %v4595 = vmax.f32 %v4594, %v4081
          %v4596 = vmax.f32 %v4595, %v4089
          %v4597 = vmax.f32 %v4596, %v4097
          %v4598 = vmax.f32 %v4597, %v4105
          %v4599 = vmax.f32 %v4598, %v4113
          %v4600 = vmax.f32 %v4599, %v4121
          %v4601 = vrot.slane %v4600, 4
          %v4602 = vmax.f32 %v4600, %v4601
          %v4603 = vrot.slane %v4602, 2
          %v4604 = vmax.f32 %v4602, %v4603
          %v4605 = vrot.slane %v4604, 1
          %v4606 = vmax.f32 %v4604, %v4605
          %v4607 = vmax.f32 %v3618, %v3626
          %v4608 = vmax.f32 %v4607, %v3634
          %v4609 = vmax.f32 %v4608, %v3642
          %v4610 = vmax.f32 %v4609, %v3650
          %v4611 = vmax.f32 %v4610, %v3658
          %v4612 = vmax.f32 %v4611, %v3666
          %v4613 = vmax.f32 %v4612, %v3674
          %v4614 = vmax.f32 %v4613, %v3682
          %v4615 = vmax.f32 %v4614, %v3690
          %v4616 = vmax.f32 %v4615, %v3698
          %v4617 = vmax.f32 %v4616, %v3706
          %v4618 = vmax.f32 %v4617, %v3714
          %v4619 = vmax.f32 %v4618, %v3722
          %v4620 = vmax.f32 %v4619, %v3730
          %v4621 = vmax.f32 %v4620, %v3738
          %v4622 = vmax.f32 %v4621, %v3746
          %v4623 = vmax.f32 %v4622, %v3754
          %v4624 = vmax.f32 %v4623, %v3762
          %v4625 = vmax.f32 %v4624, %v3770
          %v4626 = vmax.f32 %v4625, %v3778
          %v4627 = vmax.f32 %v4626, %v3786
          %v4628 = vmax.f32 %v4627, %v3794
          %v4629 = vmax.f32 %v4628, %v3802
          %v4630 = vmax.f32 %v4629, %v3810
          %v4631 = vmax.f32 %v4630, %v3818
          %v4632 = vmax.f32 %v4631, %v3826
          %v4633 = vmax.f32 %v4632, %v3834
          %v4634 = vmax.f32 %v4633, %v3842
          %v4635 = vmax.f32 %v4634, %v3850
          %v4636 = vmax.f32 %v4635, %v3858
          %v4637 = vmax.f32 %v4636, %v3866
          %v4638 = vmax.f32 %v4637, %v3874
          %v4639 = vmax.f32 %v4638, %v3882
          %v4640 = vmax.f32 %v4639, %v3890
          %v4641 = vmax.f32 %v4640, %v3898
          %v4642 = vmax.f32 %v4641, %v3906
          %v4643 = vmax.f32 %v4642, %v3914
          %v4644 = vmax.f32 %v4643, %v3922
          %v4645 = vmax.f32 %v4644, %v3930
          %v4646 = vmax.f32 %v4645, %v3938
          %v4647 = vmax.f32 %v4646, %v3946
          %v4648 = vmax.f32 %v4647, %v3954
          %v4649 = vmax.f32 %v4648, %v3962
          %v4650 = vmax.f32 %v4649, %v3970
          %v4651 = vmax.f32 %v4650, %v3978
          %v4652 = vmax.f32 %v4651, %v3986
          %v4653 = vmax.f32 %v4652, %v3994
          %v4654 = vmax.f32 %v4653, %v4002
          %v4655 = vmax.f32 %v4654, %v4010
          %v4656 = vmax.f32 %v4655, %v4018
          %v4657 = vmax.f32 %v4656, %v4026
          %v4658 = vmax.f32 %v4657, %v4034
          %v4659 = vmax.f32 %v4658, %v4042
          %v4660 = vmax.f32 %v4659, %v4050
          %v4661 = vmax.f32 %v4660, %v4058
          %v4662 = vmax.f32 %v4661, %v4066
          %v4663 = vmax.f32 %v4662, %v4074
          %v4664 = vmax.f32 %v4663, %v4082
          %v4665 = vmax.f32 %v4664, %v4090
          %v4666 = vmax.f32 %v4665, %v4098
          %v4667 = vmax.f32 %v4666, %v4106
          %v4668 = vmax.f32 %v4667, %v4114
          %v4669 = vmax.f32 %v4668, %v4122
          %v4670 = vrot.slane %v4669, 4
          %v4671 = vmax.f32 %v4669, %v4670
          %v4672 = vrot.slane %v4671, 2
          %v4673 = vmax.f32 %v4671, %v4672
          %v4674 = vrot.slane %v4673, 1
          %v4675 = vmax.f32 %v4673, %v4674
          %v4684 = vcombine.low %v4192, %v4261
          %v4685 = vcombine.low %v4330, %v4399
          %v4686 = vcombine.low %v4468, %v4537
          %v4687 = vcombine.low %v4606, %v4675
          %v4689 = vunpack.c.l.s4 1966171168
          %v4690 = vunpack.c.0.s8 %v4689
          %v4691 = vlaneseq
          %v4692 = vshrl.u32 %v4691, 7
          %v4693 = vsub.s32 %v4690, %v4692
          %v4694 = vrot.slane %v4684, %v4693
          %v4696 = vunpack.c.l.s4 1966171168
          %v4697 = vunpack.c.0.s8 %v4696
          %v4698 = vlaneseq
          %v4699 = vshrl.u32 %v4698, 7
          %v4700 = vsub.s32 %v4697, %v4699
          %v4701 = vrot.slane %v4685, %v4700
          %v4703 = vunpack.c.l.s4 1966171168
          %v4704 = vunpack.c.0.s8 %v4703
          %v4705 = vlaneseq
          %v4706 = vshrl.u32 %v4705, 7
          %v4707 = vsub.s32 %v4704, %v4706
          %v4708 = vrot.slane %v4686, %v4707
          %v4710 = vunpack.c.l.s4 1966171168
          %v4711 = vunpack.c.0.s8 %v4710
          %v4712 = vlaneseq
          %v4713 = vshrl.u32 %v4712, 7
          %v4714 = vsub.s32 %v4711, %v4713
          %v4715 = vrot.slane %v4687, %v4714
          %v4716 = vcombine.low %v4694, %v4701
          %v4717 = vcombine.low %v4708, %v4715
          %v4719 = vunpack.c.l.s4 1966171168
          %v4720 = vunpack.c.0.s8 %v4719
          %v4721 = vlaneseq
          %v4722 = vshrl.u32 %v4721, 7
          %v4723 = vsub.s32 %v4720, %v4722
          %v4724 = vrot.slane %v4716, %v4723
          %v4726 = vunpack.c.l.s4 1966171168
          %v4727 = vunpack.c.0.s8 %v4726
          %v4728 = vlaneseq
          %v4729 = vshrl.u32 %v4728, 7
          %v4730 = vsub.s32 %v4727, %v4729
          %v4731 = vrot.slane %v4717, %v4730
          %v4732 = vcombine.low %v4724, %v4731
          %v4734 = vmax.f32 %v4123, %v4732
          %4735 = vst [vmem:[%s292] sm:$0xff] %v4734
        $region52: #{tpu_custom_call.1} parent=43 // pred_fallthru
          _
        %p4736 = scmp.lt.s32.totalorder %s27, 0
        // Predicated region
        $region53: #{tpu_custom_call.1} parent=43 // pred_check
          %p4737 = pneg %p4736
        $region54: #{tpu_custom_call.1} parent=43 // pred_check_branch
          %4739 = sbr.rel (%p4737) target = $region56
        $region55: #{tpu_custom_call.1} parent=43 // pred_region
          %v4740 = vld [vmem:[%s292] sm:$0xff]
          %v4741 = vmax.f32 %v1974, %v1978
          %v4742 = vmax.f32 %v4741, %v1984
          %v4743 = vmax.f32 %v4742, %v1988
          %v4744 = vmax.f32 %v4743, %v1994
          %v4745 = vmax.f32 %v4744, %v1998
          %v4746 = vmax.f32 %v4745, %v2004
          %v4747 = vmax.f32 %v4746, %v2008
          %v4748 = vmax.f32 %v4747, %v2014
          %v4749 = vmax.f32 %v4748, %v2018
          %v4750 = vmax.f32 %v4749, %v2024
          %v4751 = vmax.f32 %v4750, %v2028
          %v4752 = vmax.f32 %v4751, %v2034
          %v4753 = vmax.f32 %v4752, %v2038
          %v4754 = vmax.f32 %v4753, %v2044
          %v4755 = vmax.f32 %v4754, %v2048
          %v4756 = vmax.f32 %v4755, %v2054
          %v4757 = vmax.f32 %v4756, %v2058
          %v4758 = vmax.f32 %v4757, %v2064
          %v4759 = vmax.f32 %v4758, %v2068
          %v4760 = vmax.f32 %v4759, %v2074
          %v4761 = vmax.f32 %v4760, %v2078
          %v4762 = vmax.f32 %v4761, %v2084
          %v4763 = vmax.f32 %v4762, %v2088
          %v4764 = vmax.f32 %v4763, %v2094
          %v4765 = vmax.f32 %v4764, %v2098
          %v4766 = vmax.f32 %v4765, %v2104
          %v4767 = vmax.f32 %v4766, %v2108
          %v4768 = vmax.f32 %v4767, %v2114
          %v4769 = vmax.f32 %v4768, %v2118
          %v4770 = vmax.f32 %v4769, %v2124
          %v4771 = vmax.f32 %v4770, %v2128
          %v4772 = vmax.f32 %v4771, %v2134
          %v4773 = vmax.f32 %v4772, %v2138
          %v4774 = vmax.f32 %v4773, %v2144
          %v4775 = vmax.f32 %v4774, %v2148
          %v4776 = vmax.f32 %v4775, %v2154
          %v4777 = vmax.f32 %v4776, %v2158
          %v4778 = vmax.f32 %v4777, %v2164
          %v4779 = vmax.f32 %v4778, %v2168
          %v4780 = vmax.f32 %v4779, %v2174
          %v4781 = vmax.f32 %v4780, %v2178
          %v4782 = vmax.f32 %v4781, %v2184
          %v4783 = vmax.f32 %v4782, %v2188
          %v4784 = vmax.f32 %v4783, %v2194
          %v4785 = vmax.f32 %v4784, %v2198
          %v4786 = vmax.f32 %v4785, %v2204
          %v4787 = vmax.f32 %v4786, %v2208
          %v4788 = vmax.f32 %v4787, %v2214
          %v4789 = vmax.f32 %v4788, %v2218
          %v4790 = vmax.f32 %v4789, %v2224
          %v4791 = vmax.f32 %v4790, %v2228
          %v4792 = vmax.f32 %v4791, %v2234
          %v4793 = vmax.f32 %v4792, %v2238
          %v4794 = vmax.f32 %v4793, %v2244
          %v4795 = vmax.f32 %v4794, %v2248
          %v4796 = vmax.f32 %v4795, %v2254
          %v4797 = vmax.f32 %v4796, %v2258
          %v4798 = vmax.f32 %v4797, %v2264
          %v4799 = vmax.f32 %v4798, %v2268
          %v4800 = vmax.f32 %v4799, %v2274
          %v4801 = vmax.f32 %v4800, %v2278
          %v4802 = vmax.f32 %v4801, %v2284
          %v4803 = vmax.f32 %v4802, %v2288
          %v4804 = vrot.slane %v4803, 4
          %v4805 = vmax.f32 %v4803, %v4804
          %v4806 = vrot.slane %v4805, 2
          %v4807 = vmax.f32 %v4805, %v4806
          %v4808 = vrot.slane %v4807, 1
          %v4809 = vmax.f32 %v4807, %v4808
          %v4810 = vmax.f32 %v1976, %v1980
          %v4811 = vmax.f32 %v4810, %v1986
          %v4812 = vmax.f32 %v4811, %v1990
          %v4813 = vmax.f32 %v4812, %v1996
          %v4814 = vmax.f32 %v4813, %v2000
          %v4815 = vmax.f32 %v4814, %v2006
          %v4816 = vmax.f32 %v4815, %v2010
          %v4817 = vmax.f32 %v4816, %v2016
          %v4818 = vmax.f32 %v4817, %v2020
          %v4819 = vmax.f32 %v4818, %v2026
          %v4820 = vmax.f32 %v4819, %v2030
          %v4821 = vmax.f32 %v4820, %v2036
          %v4822 = vmax.f32 %v4821, %v2040
          %v4823 = vmax.f32 %v4822, %v2046
          %v4824 = vmax.f32 %v4823, %v2050
          %v4825 = vmax.f32 %v4824, %v2056
          %v4826 = vmax.f32 %v4825, %v2060
          %v4827 = vmax.f32 %v4826, %v2066
          %v4828 = vmax.f32 %v4827, %v2070
          %v4829 = vmax.f32 %v4828, %v2076
          %v4830 = vmax.f32 %v4829, %v2080
          %v4831 = vmax.f32 %v4830, %v2086
          %v4832 = vmax.f32 %v4831, %v2090
          %v4833 = vmax.f32 %v4832, %v2096
          %v4834 = vmax.f32 %v4833, %v2100
          %v4835 = vmax.f32 %v4834, %v2106
          %v4836 = vmax.f32 %v4835, %v2110
          %v4837 = vmax.f32 %v4836, %v2116
          %v4838 = vmax.f32 %v4837, %v2120
          %v4839 = vmax.f32 %v4838, %v2126
          %v4840 = vmax.f32 %v4839, %v2130
          %v4841 = vmax.f32 %v4840, %v2136
          %v4842 = vmax.f32 %v4841, %v2140
          %v4843 = vmax.f32 %v4842, %v2146
          %v4844 = vmax.f32 %v4843, %v2150
          %v4845 = vmax.f32 %v4844, %v2156
          %v4846 = vmax.f32 %v4845, %v2160
          %v4847 = vmax.f32 %v4846, %v2166
          %v4848 = vmax.f32 %v4847, %v2170
          %v4849 = vmax.f32 %v4848, %v2176
          %v4850 = vmax.f32 %v4849, %v2180
          %v4851 = vmax.f32 %v4850, %v2186
          %v4852 = vmax.f32 %v4851, %v2190
          %v4853 = vmax.f32 %v4852, %v2196
          %v4854 = vmax.f32 %v4853, %v2200
          %v4855 = vmax.f32 %v4854, %v2206
          %v4856 = vmax.f32 %v4855, %v2210
          %v4857 = vmax.f32 %v4856, %v2216
          %v4858 = vmax.f32 %v4857, %v2220
          %v4859 = vmax.f32 %v4858, %v2226
          %v4860 = vmax.f32 %v4859, %v2230
          %v4861 = vmax.f32 %v4860, %v2236
          %v4862 = vmax.f32 %v4861, %v2240
          %v4863 = vmax.f32 %v4862, %v2246
          %v4864 = vmax.f32 %v4863, %v2250
          %v4865 = vmax.f32 %v4864, %v2256
          %v4866 = vmax.f32 %v4865, %v2260
          %v4867 = vmax.f32 %v4866, %v2266
          %v4868 = vmax.f32 %v4867, %v2270
          %v4869 = vmax.f32 %v4868, %v2276
          %v4870 = vmax.f32 %v4869, %v2280
          %v4871 = vmax.f32 %v4870, %v2286
          %v4872 = vmax.f32 %v4871, %v2290
          %v4873 = vrot.slane %v4872, 4
          %v4874 = vmax.f32 %v4872, %v4873
          %v4875 = vrot.slane %v4874, 2
          %v4876 = vmax.f32 %v4874, %v4875
          %v4877 = vrot.slane %v4876, 1
          %v4878 = vmax.f32 %v4876, %v4877
          %v4879 = vmax.f32 %v2327, %v2331
          %v4880 = vmax.f32 %v4879, %v2337
          %v4881 = vmax.f32 %v4880, %v2341
          %v4882 = vmax.f32 %v4881, %v2347
          %v4883 = vmax.f32 %v4882, %v2351
          %v4884 = vmax.f32 %v4883, %v2357
          %v4885 = vmax.f32 %v4884, %v2361
          %v4886 = vmax.f32 %v4885, %v2367
          %v4887 = vmax.f32 %v4886, %v2371
          %v4888 = vmax.f32 %v4887, %v2377
          %v4889 = vmax.f32 %v4888, %v2381
          %v4890 = vmax.f32 %v4889, %v2387
          %v4891 = vmax.f32 %v4890, %v2391
          %v4892 = vmax.f32 %v4891, %v2397
          %v4893 = vmax.f32 %v4892, %v2401
          %v4894 = vmax.f32 %v4893, %v2407
          %v4895 = vmax.f32 %v4894, %v2411
          %v4896 = vmax.f32 %v4895, %v2417
          %v4897 = vmax.f32 %v4896, %v2421
          %v4898 = vmax.f32 %v4897, %v2427
          %v4899 = vmax.f32 %v4898, %v2431
          %v4900 = vmax.f32 %v4899, %v2437
          %v4901 = vmax.f32 %v4900, %v2441
          %v4902 = vmax.f32 %v4901, %v2447
          %v4903 = vmax.f32 %v4902, %v2451
          %v4904 = vmax.f32 %v4903, %v2457
          %v4905 = vmax.f32 %v4904, %v2461
          %v4906 = vmax.f32 %v4905, %v2467
          %v4907 = vmax.f32 %v4906, %v2471
          %v4908 = vmax.f32 %v4907, %v2477
          %v4909 = vmax.f32 %v4908, %v2481
          %v4910 = vmax.f32 %v4909, %v2487
          %v4911 = vmax.f32 %v4910, %v2491
          %v4912 = vmax.f32 %v4911, %v2497
          %v4913 = vmax.f32 %v4912, %v2501
          %v4914 = vmax.f32 %v4913, %v2507
          %v4915 = vmax.f32 %v4914, %v2511
          %v4916 = vmax.f32 %v4915, %v2517
          %v4917 = vmax.f32 %v4916, %v2521
          %v4918 = vmax.f32 %v4917, %v2527
          %v4919 = vmax.f32 %v4918, %v2531
          %v4920 = vmax.f32 %v4919, %v2537
          %v4921 = vmax.f32 %v4920, %v2541
          %v4922 = vmax.f32 %v4921, %v2547
          %v4923 = vmax.f32 %v4922, %v2551
          %v4924 = vmax.f32 %v4923, %v2557
          %v4925 = vmax.f32 %v4924, %v2561
          %v4926 = vmax.f32 %v4925, %v2567
          %v4927 = vmax.f32 %v4926, %v2571
          %v4928 = vmax.f32 %v4927, %v2577
          %v4929 = vmax.f32 %v4928, %v2581
          %v4930 = vmax.f32 %v4929, %v2587
          %v4931 = vmax.f32 %v4930, %v2591
          %v4932 = vmax.f32 %v4931, %v2597
          %v4933 = vmax.f32 %v4932, %v2601
          %v4934 = vmax.f32 %v4933, %v2607
          %v4935 = vmax.f32 %v4934, %v2611
          %v4936 = vmax.f32 %v4935, %v2617
          %v4937 = vmax.f32 %v4936, %v2621
          %v4938 = vmax.f32 %v4937, %v2627
          %v4939 = vmax.f32 %v4938, %v2631
          %v4940 = vmax.f32 %v4939, %v2637
          %v4941 = vmax.f32 %v4940, %v2641
          %v4942 = vrot.slane %v4941, 4
          %v4943 = vmax.f32 %v4941, %v4942
          %v4944 = vrot.slane %v4943, 2
          %v4945 = vmax.f32 %v4943, %v4944
          %v4946 = vrot.slane %v4945, 1
          %v4947 = vmax.f32 %v4945, %v4946
          %v4948 = vmax.f32 %v2329, %v2333
          %v4949 = vmax.f32 %v4948, %v2339
          %v4950 = vmax.f32 %v4949, %v2343
          %v4951 = vmax.f32 %v4950, %v2349
          %v4952 = vmax.f32 %v4951, %v2353
          %v4953 = vmax.f32 %v4952, %v2359
          %v4954 = vmax.f32 %v4953, %v2363
          %v4955 = vmax.f32 %v4954, %v2369
          %v4956 = vmax.f32 %v4955, %v2373
          %v4957 = vmax.f32 %v4956, %v2379
          %v4958 = vmax.f32 %v4957, %v2383
          %v4959 = vmax.f32 %v4958, %v2389
          %v4960 = vmax.f32 %v4959, %v2393
          %v4961 = vmax.f32 %v4960, %v2399
          %v4962 = vmax.f32 %v4961, %v2403
          %v4963 = vmax.f32 %v4962, %v2409
          %v4964 = vmax.f32 %v4963, %v2413
          %v4965 = vmax.f32 %v4964, %v2419
          %v4966 = vmax.f32 %v4965, %v2423
          %v4967 = vmax.f32 %v4966, %v2429
          %v4968 = vmax.f32 %v4967, %v2433
          %v4969 = vmax.f32 %v4968, %v2439
          %v4970 = vmax.f32 %v4969, %v2443
          %v4971 = vmax.f32 %v4970, %v2449
          %v4972 = vmax.f32 %v4971, %v2453
          %v4973 = vmax.f32 %v4972, %v2459
          %v4974 = vmax.f32 %v4973, %v2463
          %v4975 = vmax.f32 %v4974, %v2469
          %v4976 = vmax.f32 %v4975, %v2473
          %v4977 = vmax.f32 %v4976, %v2479
          %v4978 = vmax.f32 %v4977, %v2483
          %v4979 = vmax.f32 %v4978, %v2489
          %v4980 = vmax.f32 %v4979, %v2493
          %v4981 = vmax.f32 %v4980, %v2499
          %v4982 = vmax.f32 %v4981, %v2503
          %v4983 = vmax.f32 %v4982, %v2509
          %v4984 = vmax.f32 %v4983, %v2513
          %v4985 = vmax.f32 %v4984, %v2519
          %v4986 = vmax.f32 %v4985, %v2523
          %v4987 = vmax.f32 %v4986, %v2529
          %v4988 = vmax.f32 %v4987, %v2533
          %v4989 = vmax.f32 %v4988, %v2539
          %v4990 = vmax.f32 %v4989, %v2543
          %v4991 = vmax.f32 %v4990, %v2549
          %v4992 = vmax.f32 %v4991, %v2553
          %v4993 = vmax.f32 %v4992, %v2559
          %v4994 = vmax.f32 %v4993, %v2563
          %v4995 = vmax.f32 %v4994, %v2569
          %v4996 = vmax.f32 %v4995, %v2573
          %v4997 = vmax.f32 %v4996, %v2579
          %v4998 = vmax.f32 %v4997, %v2583
          %v4999 = vmax.f32 %v4998, %v2589
          %v5000 = vmax.f32 %v4999, %v2593
          %v5001 = vmax.f32 %v5000, %v2599
          %v5002 = vmax.f32 %v5001, %v2603
          %v5003 = vmax.f32 %v5002, %v2609
          %v5004 = vmax.f32 %v5003, %v2613
          %v5005 = vmax.f32 %v5004, %v2619
          %v5006 = vmax.f32 %v5005, %v2623
          %v5007 = vmax.f32 %v5006, %v2629
          %v5008 = vmax.f32 %v5007, %v2633
          %v5009 = vmax.f32 %v5008, %v2639
          %v5010 = vmax.f32 %v5009, %v2643
          %v5011 = vrot.slane %v5010, 4
          %v5012 = vmax.f32 %v5010, %v5011
          %v5013 = vrot.slane %v5012, 2
          %v5014 = vmax.f32 %v5012, %v5013
          %v5015 = vrot.slane %v5014, 1
          %v5016 = vmax.f32 %v5014, %v5015
          %v5017 = vmax.f32 %v2680, %v2684
          %v5018 = vmax.f32 %v5017, %v2690
          %v5019 = vmax.f32 %v5018, %v2694
          %v5020 = vmax.f32 %v5019, %v2700
          %v5021 = vmax.f32 %v5020, %v2704
          %v5022 = vmax.f32 %v5021, %v2710
          %v5023 = vmax.f32 %v5022, %v2714
          %v5024 = vmax.f32 %v5023, %v2720
          %v5025 = vmax.f32 %v5024, %v2724
          %v5026 = vmax.f32 %v5025, %v2730
          %v5027 = vmax.f32 %v5026, %v2734
          %v5028 = vmax.f32 %v5027, %v2740
          %v5029 = vmax.f32 %v5028, %v2744
          %v5030 = vmax.f32 %v5029, %v2750
          %v5031 = vmax.f32 %v5030, %v2754
          %v5032 = vmax.f32 %v5031, %v2760
          %v5033 = vmax.f32 %v5032, %v2764
          %v5034 = vmax.f32 %v5033, %v2770
          %v5035 = vmax.f32 %v5034, %v2774
          %v5036 = vmax.f32 %v5035, %v2780
          %v5037 = vmax.f32 %v5036, %v2784
          %v5038 = vmax.f32 %v5037, %v2790
          %v5039 = vmax.f32 %v5038, %v2794
          %v5040 = vmax.f32 %v5039, %v2800
          %v5041 = vmax.f32 %v5040, %v2804
          %v5042 = vmax.f32 %v5041, %v2810
          %v5043 = vmax.f32 %v5042, %v2814
          %v5044 = vmax.f32 %v5043, %v2820
          %v5045 = vmax.f32 %v5044, %v2824
          %v5046 = vmax.f32 %v5045, %v2830
          %v5047 = vmax.f32 %v5046, %v2834
          %v5048 = vmax.f32 %v5047, %v2840
          %v5049 = vmax.f32 %v5048, %v2844
          %v5050 = vmax.f32 %v5049, %v2850
          %v5051 = vmax.f32 %v5050, %v2854
          %v5052 = vmax.f32 %v5051, %v2860
          %v5053 = vmax.f32 %v5052, %v2864
          %v5054 = vmax.f32 %v5053, %v2870
          %v5055 = vmax.f32 %v5054, %v2874
          %v5056 = vmax.f32 %v5055, %v2880
          %v5057 = vmax.f32 %v5056, %v2884
          %v5058 = vmax.f32 %v5057, %v2890
          %v5059 = vmax.f32 %v5058, %v2894
          %v5060 = vmax.f32 %v5059, %v2900
          %v5061 = vmax.f32 %v5060, %v2904
          %v5062 = vmax.f32 %v5061, %v2910
          %v5063 = vmax.f32 %v5062, %v2914
          %v5064 = vmax.f32 %v5063, %v2920
          %v5065 = vmax.f32 %v5064, %v2924
          %v5066 = vmax.f32 %v5065, %v2930
          %v5067 = vmax.f32 %v5066, %v2934
          %v5068 = vmax.f32 %v5067, %v2940
          %v5069 = vmax.f32 %v5068, %v2944
          %v5070 = vmax.f32 %v5069, %v2950
          %v5071 = vmax.f32 %v5070, %v2954
          %v5072 = vmax.f32 %v5071, %v2960
          %v5073 = vmax.f32 %v5072, %v2964
          %v5074 = vmax.f32 %v5073, %v2970
          %v5075 = vmax.f32 %v5074, %v2974
          %v5076 = vmax.f32 %v5075, %v2980
          %v5077 = vmax.f32 %v5076, %v2984
          %v5078 = vmax.f32 %v5077, %v2990
          %v5079 = vmax.f32 %v5078, %v2994
          %v5080 = vrot.slane %v5079, 4
          %v5081 = vmax.f32 %v5079, %v5080
          %v5082 = vrot.slane %v5081, 2
          %v5083 = vmax.f32 %v5081, %v5082
          %v5084 = vrot.slane %v5083, 1
          %v5085 = vmax.f32 %v5083, %v5084
          %v5086 = vmax.f32 %v2682, %v2686
          %v5087 = vmax.f32 %v5086, %v2692
          %v5088 = vmax.f32 %v5087, %v2696
          %v5089 = vmax.f32 %v5088, %v2702
          %v5090 = vmax.f32 %v5089, %v2706
          %v5091 = vmax.f32 %v5090, %v2712
          %v5092 = vmax.f32 %v5091, %v2716
          %v5093 = vmax.f32 %v5092, %v2722
          %v5094 = vmax.f32 %v5093, %v2726
          %v5095 = vmax.f32 %v5094, %v2732
          %v5096 = vmax.f32 %v5095, %v2736
          %v5097 = vmax.f32 %v5096, %v2742
          %v5098 = vmax.f32 %v5097, %v2746
          %v5099 = vmax.f32 %v5098, %v2752
          %v5100 = vmax.f32 %v5099, %v2756
          %v5101 = vmax.f32 %v5100, %v2762
          %v5102 = vmax.f32 %v5101, %v2766
          %v5103 = vmax.f32 %v5102, %v2772
          %v5104 = vmax.f32 %v5103, %v2776
          %v5105 = vmax.f32 %v5104, %v2782
          %v5106 = vmax.f32 %v5105, %v2786
          %v5107 = vmax.f32 %v5106, %v2792
          %v5108 = vmax.f32 %v5107, %v2796
          %v5109 = vmax.f32 %v5108, %v2802
          %v5110 = vmax.f32 %v5109, %v2806
          %v5111 = vmax.f32 %v5110, %v2812
          %v5112 = vmax.f32 %v5111, %v2816
          %v5113 = vmax.f32 %v5112, %v2822
          %v5114 = vmax.f32 %v5113, %v2826
          %v5115 = vmax.f32 %v5114, %v2832
          %v5116 = vmax.f32 %v5115, %v2836
          %v5117 = vmax.f32 %v5116, %v2842
          %v5118 = vmax.f32 %v5117, %v2846
          %v5119 = vmax.f32 %v5118, %v2852
          %v5120 = vmax.f32 %v5119, %v2856
          %v5121 = vmax.f32 %v5120, %v2862
          %v5122 = vmax.f32 %v5121, %v2866
          %v5123 = vmax.f32 %v5122, %v2872
          %v5124 = vmax.f32 %v5123, %v2876
          %v5125 = vmax.f32 %v5124, %v2882
          %v5126 = vmax.f32 %v5125, %v2886
          %v5127 = vmax.f32 %v5126, %v2892
          %v5128 = vmax.f32 %v5127, %v2896
          %v5129 = vmax.f32 %v5128, %v2902
          %v5130 = vmax.f32 %v5129, %v2906
          %v5131 = vmax.f32 %v5130, %v2912
          %v5132 = vmax.f32 %v5131, %v2916
          %v5133 = vmax.f32 %v5132, %v2922
          %v5134 = vmax.f32 %v5133, %v2926
          %v5135 = vmax.f32 %v5134, %v2932
          %v5136 = vmax.f32 %v5135, %v2936
          %v5137 = vmax.f32 %v5136, %v2942
          %v5138 = vmax.f32 %v5137, %v2946
          %v5139 = vmax.f32 %v5138, %v2952
          %v5140 = vmax.f32 %v5139, %v2956
          %v5141 = vmax.f32 %v5140, %v2962
          %v5142 = vmax.f32 %v5141, %v2966
          %v5143 = vmax.f32 %v5142, %v2972
          %v5144 = vmax.f32 %v5143, %v2976
          %v5145 = vmax.f32 %v5144, %v2982
          %v5146 = vmax.f32 %v5145, %v2986
          %v5147 = vmax.f32 %v5146, %v2992
          %v5148 = vmax.f32 %v5147, %v2996
          %v5149 = vrot.slane %v5148, 4
          %v5150 = vmax.f32 %v5148, %v5149
          %v5151 = vrot.slane %v5150, 2
          %v5152 = vmax.f32 %v5150, %v5151
          %v5153 = vrot.slane %v5152, 1
          %v5154 = vmax.f32 %v5152, %v5153
          %v5155 = vmax.f32 %v3033, %v3037
          %v5156 = vmax.f32 %v5155, %v3043
          %v5157 = vmax.f32 %v5156, %v3047
          %v5158 = vmax.f32 %v5157, %v3053
          %v5159 = vmax.f32 %v5158, %v3057
          %v5160 = vmax.f32 %v5159, %v3063
          %v5161 = vmax.f32 %v5160, %v3067
          %v5162 = vmax.f32 %v5161, %v3073
          %v5163 = vmax.f32 %v5162, %v3077
          %v5164 = vmax.f32 %v5163, %v3083
          %v5165 = vmax.f32 %v5164, %v3087
          %v5166 = vmax.f32 %v5165, %v3093
          %v5167 = vmax.f32 %v5166, %v3097
          %v5168 = vmax.f32 %v5167, %v3103
          %v5169 = vmax.f32 %v5168, %v3107
          %v5170 = vmax.f32 %v5169, %v3113
          %v5171 = vmax.f32 %v5170, %v3117
          %v5172 = vmax.f32 %v5171, %v3123
          %v5173 = vmax.f32 %v5172, %v3127
          %v5174 = vmax.f32 %v5173, %v3133
          %v5175 = vmax.f32 %v5174, %v3137
          %v5176 = vmax.f32 %v5175, %v3143
          %v5177 = vmax.f32 %v5176, %v3147
          %v5178 = vmax.f32 %v5177, %v3153
          %v5179 = vmax.f32 %v5178, %v3157
          %v5180 = vmax.f32 %v5179, %v3163
          %v5181 = vmax.f32 %v5180, %v3167
          %v5182 = vmax.f32 %v5181, %v3173
          %v5183 = vmax.f32 %v5182, %v3177
          %v5184 = vmax.f32 %v5183, %v3183
          %v5185 = vmax.f32 %v5184, %v3187
          %v5186 = vmax.f32 %v5185, %v3193
          %v5187 = vmax.f32 %v5186, %v3197
          %v5188 = vmax.f32 %v5187, %v3203
          %v5189 = vmax.f32 %v5188, %v3207
          %v5190 = vmax.f32 %v5189, %v3213
          %v5191 = vmax.f32 %v5190, %v3217
          %v5192 = vmax.f32 %v5191, %v3223
          %v5193 = vmax.f32 %v5192, %v3227
          %v5194 = vmax.f32 %v5193, %v3233
          %v5195 = vmax.f32 %v5194, %v3237
          %v5196 = vmax.f32 %v5195, %v3243
          %v5197 = vmax.f32 %v5196, %v3247
          %v5198 = vmax.f32 %v5197, %v3253
          %v5199 = vmax.f32 %v5198, %v3257
          %v5200 = vmax.f32 %v5199, %v3263
          %v5201 = vmax.f32 %v5200, %v3267
          %v5202 = vmax.f32 %v5201, %v3273
          %v5203 = vmax.f32 %v5202, %v3277
          %v5204 = vmax.f32 %v5203, %v3283
          %v5205 = vmax.f32 %v5204, %v3287
          %v5206 = vmax.f32 %v5205, %v3293
          %v5207 = vmax.f32 %v5206, %v3297
          %v5208 = vmax.f32 %v5207, %v3303
          %v5209 = vmax.f32 %v5208, %v3307
          %v5210 = vmax.f32 %v5209, %v3313
          %v5211 = vmax.f32 %v5210, %v3317
          %v5212 = vmax.f32 %v5211, %v3323
          %v5213 = vmax.f32 %v5212, %v3327
          %v5214 = vmax.f32 %v5213, %v3333
          %v5215 = vmax.f32 %v5214, %v3337
          %v5216 = vmax.f32 %v5215, %v3343
          %v5217 = vmax.f32 %v5216, %v3347
          %v5218 = vrot.slane %v5217, 4
          %v5219 = vmax.f32 %v5217, %v5218
          %v5220 = vrot.slane %v5219, 2
          %v5221 = vmax.f32 %v5219, %v5220
          %v5222 = vrot.slane %v5221, 1
          %v5223 = vmax.f32 %v5221, %v5222
          %v5224 = vmax.f32 %v3035, %v3039
          %v5225 = vmax.f32 %v5224, %v3045
          %v5226 = vmax.f32 %v5225, %v3049
          %v5227 = vmax.f32 %v5226, %v3055
          %v5228 = vmax.f32 %v5227, %v3059
          %v5229 = vmax.f32 %v5228, %v3065
          %v5230 = vmax.f32 %v5229, %v3069
          %v5231 = vmax.f32 %v5230, %v3075
          %v5232 = vmax.f32 %v5231, %v3079
          %v5233 = vmax.f32 %v5232, %v3085
          %v5234 = vmax.f32 %v5233, %v3089
          %v5235 = vmax.f32 %v5234, %v3095
          %v5236 = vmax.f32 %v5235, %v3099
          %v5237 = vmax.f32 %v5236, %v3105
          %v5238 = vmax.f32 %v5237, %v3109
          %v5239 = vmax.f32 %v5238, %v3115
          %v5240 = vmax.f32 %v5239, %v3119
          %v5241 = vmax.f32 %v5240, %v3125
          %v5242 = vmax.f32 %v5241, %v3129
          %v5243 = vmax.f32 %v5242, %v3135
          %v5244 = vmax.f32 %v5243, %v3139
          %v5245 = vmax.f32 %v5244, %v3145
          %v5246 = vmax.f32 %v5245, %v3149
          %v5247 = vmax.f32 %v5246, %v3155
          %v5248 = vmax.f32 %v5247, %v3159
          %v5249 = vmax.f32 %v5248, %v3165
          %v5250 = vmax.f32 %v5249, %v3169
          %v5251 = vmax.f32 %v5250, %v3175
          %v5252 = vmax.f32 %v5251, %v3179
          %v5253 = vmax.f32 %v5252, %v3185
          %v5254 = vmax.f32 %v5253, %v3189
          %v5255 = vmax.f32 %v5254, %v3195
          %v5256 = vmax.f32 %v5255, %v3199
          %v5257 = vmax.f32 %v5256, %v3205
          %v5258 = vmax.f32 %v5257, %v3209
          %v5259 = vmax.f32 %v5258, %v3215
          %v5260 = vmax.f32 %v5259, %v3219
          %v5261 = vmax.f32 %v5260, %v3225
          %v5262 = vmax.f32 %v5261, %v3229
          %v5263 = vmax.f32 %v5262, %v3235
          %v5264 = vmax.f32 %v5263, %v3239
          %v5265 = vmax.f32 %v5264, %v3245
          %v5266 = vmax.f32 %v5265, %v3249
          %v5267 = vmax.f32 %v5266, %v3255
          %v5268 = vmax.f32 %v5267, %v3259
          %v5269 = vmax.f32 %v5268, %v3265
          %v5270 = vmax.f32 %v5269, %v3269
          %v5271 = vmax.f32 %v5270, %v3275
          %v5272 = vmax.f32 %v5271, %v3279
          %v5273 = vmax.f32 %v5272, %v3285
          %v5274 = vmax.f32 %v5273, %v3289
          %v5275 = vmax.f32 %v5274, %v3295
          %v5276 = vmax.f32 %v5275, %v3299
          %v5277 = vmax.f32 %v5276, %v3305
          %v5278 = vmax.f32 %v5277, %v3309
          %v5279 = vmax.f32 %v5278, %v3315
          %v5280 = vmax.f32 %v5279, %v3319
          %v5281 = vmax.f32 %v5280, %v3325
          %v5282 = vmax.f32 %v5281, %v3329
          %v5283 = vmax.f32 %v5282, %v3335
          %v5284 = vmax.f32 %v5283, %v3339
          %v5285 = vmax.f32 %v5284, %v3345
          %v5286 = vmax.f32 %v5285, %v3349
          %v5287 = vrot.slane %v5286, 4
          %v5288 = vmax.f32 %v5286, %v5287
          %v5289 = vrot.slane %v5288, 2
          %v5290 = vmax.f32 %v5288, %v5289
          %v5291 = vrot.slane %v5290, 1
          %v5292 = vmax.f32 %v5290, %v5291
          %v5301 = vcombine.low %v4809, %v4878
          %v5302 = vcombine.low %v4947, %v5016
          %v5303 = vcombine.low %v5085, %v5154
          %v5304 = vcombine.low %v5223, %v5292
          %v5306 = vunpack.c.l.s4 1966171168
          %v5307 = vunpack.c.0.s8 %v5306
          %v5308 = vlaneseq
          %v5309 = vshrl.u32 %v5308, 7
          %v5310 = vsub.s32 %v5307, %v5309
          %v5311 = vrot.slane %v5301, %v5310
          %v5313 = vunpack.c.l.s4 1966171168
          %v5314 = vunpack.c.0.s8 %v5313
          %v5315 = vlaneseq
          %v5316 = vshrl.u32 %v5315, 7
          %v5317 = vsub.s32 %v5314, %v5316
          %v5318 = vrot.slane %v5302, %v5317
          %v5320 = vunpack.c.l.s4 1966171168
          %v5321 = vunpack.c.0.s8 %v5320
          %v5322 = vlaneseq
          %v5323 = vshrl.u32 %v5322, 7
          %v5324 = vsub.s32 %v5321, %v5323
          %v5325 = vrot.slane %v5303, %v5324
          %v5327 = vunpack.c.l.s4 1966171168
          %v5328 = vunpack.c.0.s8 %v5327
          %v5329 = vlaneseq
          %v5330 = vshrl.u32 %v5329, 7
          %v5331 = vsub.s32 %v5328, %v5330
          %v5332 = vrot.slane %v5304, %v5331
          %v5333 = vcombine.low %v5311, %v5318
          %v5334 = vcombine.low %v5325, %v5332
          %v5336 = vunpack.c.l.s4 1966171168
          %v5337 = vunpack.c.0.s8 %v5336
          %v5338 = vlaneseq
          %v5339 = vshrl.u32 %v5338, 7
          %v5340 = vsub.s32 %v5337, %v5339
          %v5341 = vrot.slane %v5333, %v5340
          %v5343 = vunpack.c.l.s4 1966171168
          %v5344 = vunpack.c.0.s8 %v5343
          %v5345 = vlaneseq
          %v5346 = vshrl.u32 %v5345, 7
          %v5347 = vsub.s32 %v5344, %v5346
          %v5348 = vrot.slane %v5334, %v5347
          %v5349 = vcombine.low %v5341, %v5348
          %v5351 = vmax.f32 %v4740, %v5349
          %5352 = vst [vmem:[%s292] sm:$0xff] %v5351
        $region56: #{tpu_custom_call.1} parent=43 // pred_fallthru
          _
        %s5353 = sand.u32 %s187, 1
        %s5354 = scalar_lea.sflag [#allocation3], %s5353
        %s5355 = sand.u32 %s187, 1
        %s5356 = smul.addr %s5355, 8
        %s5357 = scalar_lea.vmem [#allocation2], %s5356
        // Predicated region
        $region57: #{tpu_custom_call.1} parent=43 // pred_check
          %p5358 = pneg %p197
        $region58: #{tpu_custom_call.1} parent=43 // pred_check_branch
          %5360 = sbr.rel (%p5358) target = $region60
        $region59: #{tpu_custom_call.1} parent=43 // pred_region
          %s5361 = smul.u32 8, %s26
          %s5363 = ssub.s32 128, 128
          %5364 = vsyncadd %s5354, %s5363
          %s5365 = smul.addr %s25, 8
          %s5366 = sadd.s32 %s5361, %s5365
          %s5367 = smul.addr %s5366, 16
          %s5368 = scalar_lea.hbm %s6, %s5367
          %s5370 = sshll.u32 %s5357, 4
          %s5371 = int_to_ptr.vmem [resolvable:$true] %s5370
          %5373 = dma.vmem_to_hbm [thread:$0]  %s5371, 128, %s5368, %s5354
        $region60: #{tpu_custom_call.1} parent=43 // pred_fallthru
          _
      $region44: #{tpu_custom_call.1} parent=5 // pred_fallthru
        _
      %p5374 = scmp.le.s32.totalorder 2, %s15
      // Predicated region
      $region61: #{tpu_custom_call.1} parent=5 // pred_check
        %p5375 = pneg %p5374
      $region62: #{tpu_custom_call.1} parent=5 // pred_check_branch
        %5377 = sbr.rel (%p5375) target = $region64
      $region63: #{tpu_custom_call.1} parent=5 // pred_region
        %s5378 = ssub.s32 %s15, 2
        // Predicated region
        $region65: #{tpu_custom_call.1} parent=63 // pred_check
          %p5379 = pneg %p203
        $region66: #{tpu_custom_call.1} parent=63 // pred_check_branch
          %5381 = sbr.rel (%p5379) target = $region68
        $region67: #{tpu_custom_call.1} parent=63 // pred_region
          %s5382 = sand.u32 %s188, 1
          %s5383 = scalar_lea.sflag [#allocation3], %s5382
          %s5384 = sand.u32 %s188, 1
          %s5385 = smul.addr %s5384, 8
          %s5386 = scalar_lea.vmem [#allocation2], %s5385
          %5387 = dma.done %s5383, 128
        $region68: #{tpu_custom_call.1} parent=63 // pred_fallthru
          _
      $region64: #{tpu_custom_call.1} parent=5 // pred_fallthru
        _
    $region6: #{tpu_custom_call.1} parent=1 // loop_footer
      %s19 = sadd.s32 1, %s15
    $region7: #{tpu_custom_call.1} parent=1 // loop_footer_branch
      %14 = sbr.rel target = $region3
    $region8: #{tpu_custom_call.1} parent=1 // loop_exit
      _
    %5388 = vsyncpa [#allocation3], 1
    %s5389 = scalar_lea.sflag [#allocation3], 1
    %5390 = vsyncpa %s5389, 1

</llo_original>
